<compile_context>
chip_gen: v7x
topology: tpu7x:2x2x1
jax: 0.10.0
libtpu: 0.0.40
codegen_flags: <defaults>
</compile_context>

<pallas_src>
import functools

import jax
import jax.numpy as jnp
from jax.experimental import pallas as pl
from jax.experimental.pallas import tpu as pltpu

KH, KW = 5, 5
PAD = 2


def _dwconv_kernel(x_ref, w_ref, o_ref, xs_ref, *, H, W):
    # x_ref : (1, H, W, CB)           unpadded NHWC tile, channels on lanes
    # w_ref : (KH, KW, CB)            per-channel taps, channels on lanes
    # o_ref : (1, H, W, CB)
    # xs_ref: (KW, H + 2*PAD, W, CB)  zero-padded, W-shifted staging windows
    CB = x_ref.shape[-1]

    # ---- Stage the KW (=5) W-shifted, zero-padded windows once per step ----
    # W is the sublane axis, so these are the ONLY sublane-offset accesses in
    # the kernel (5 instead of 25); boundaries are handled by the zero fill.
    xs_ref[...] = jnp.zeros_like(xs_ref)
    for kw in range(KW):
        s = kw - PAD                 # column shift in [-PAD, PAD]
        dlo = max(0, -s)             # first valid destination column
        slo = max(0, s)              # first valid source column
        ln = W - abs(s)              # number of valid columns
        # xs[kw][PAD + r, c] = x[r, c + s]  (zero outside the valid range)
        xs_ref[kw, PAD:PAD + H, dlo:dlo + ln, :] = x_ref[0, :, slo:slo + ln, :]

    # ---- Weights: load the whole tile once per grid step ----
    w = w_ref[...].astype(jnp.float32)          # (KH, KW, CB)

    # ---- Accumulate one output row at a time (small live set, no spills).
    # All reads below slice only leading axes of xs_ref => free address
    # offsets, no relayout.  f32 accumulator (v5e-friendly, matches module).
    for h in range(H):
        acc = jnp.zeros((W, CB), jnp.float32)
        for kw in range(KW):
            for kh in range(KH):
                row = xs_ref[kw, h + kh, :, :].astype(jnp.float32)   # (W, CB)
                acc = acc + row * w[kh, kw, :]
        o_ref[0, h, :, :] = acc.astype(o_ref.dtype)


def _pick_c_block(C, cap=2048):
    """Prefer exactly 2 lane-aligned channel blocks (one per TC on v7x)."""
    if C % 128 != 0:
        return C
    blk = C
    if (C // 2) % 128 == 0:
        blk = C // 2
    while blk > cap and blk % 2 == 0 and (blk // 2) % 128 == 0:
        blk //= 2
    return blk


def depthwise_conv2d_5x5(x_nchw, w_c55, *, c_block=None):
    """Depthwise 5x5 conv, stride 1, pad 2, no bias.

    x_nchw : (N, C, H, W)
    w_c55  : (C, 5, 5)   per-channel filter (PyTorch weight squeezed on dim 1)
    returns (N, C, H, W)
    """
    N, C, H, W = x_nchw.shape
    if c_block is None:
        c_block = _pick_c_block(C)
    assert C % c_block == 0, "channel count must be a multiple of c_block"

    # NCHW <-> NHWC glue: required because the module's interface is NCHW and
    # the kernel wants channels on the 128-lane axis.
    # TODO(synk): if the surrounding model keeps activations NHWC (and/or
    # bf16), these transposes disappear / fuse into neighbors.
    x_nhwc = jnp.transpose(x_nchw, (0, 2, 3, 1))          # (N, H, W, C)
    w_hwc = jnp.transpose(w_c55, (1, 2, 0))               # (KH, KW, C)

    kernel = functools.partial(_dwconv_kernel, H=H, W=W)

    out_nhwc = pl.pallas_call(
        kernel,
        out_shape=jax.ShapeDtypeStruct((N, H, W, C), x_nchw.dtype),
        grid=(N, C // c_block),
        in_specs=[
            pl.BlockSpec((1, H, W, c_block), lambda n, c: (n, 0, 0, c)),
            pl.BlockSpec((KH, KW, c_block), lambda n, c: (0, 0, c)),
        ],
        out_specs=pl.BlockSpec((1, H, W, c_block), lambda n, c: (n, 0, 0, c)),
        scratch_shapes=[
            pltpu.VMEM((KW, H + 2 * PAD, W, c_block), x_nchw.dtype),
        ],
        compiler_params=pltpu.CompilerParams(
            dimension_semantics=("parallel", "parallel"),
        ),
    )(x_nhwc, w_hwc)

    # NHWC -> NCHW (module interface)
    return jnp.transpose(out_nhwc, (0, 3, 1, 2))


if __name__ == "__main__":
    # Small-shape stand-in for (1, 2304, 7, 7): same spatial size / kernel,
    # fewer channels.  C=256 -> c_block=128 -> grid (1, 2), exercising the
    # same 2-block ("one per TensorCore") structure as the real shape.
    N, C, H, W = 1, 256, 7, 7

    key = jax.random.PRNGKey(0)
    kx, kw = jax.random.split(key)
    x = jax.random.normal(kx, (N, C, H, W), dtype=jnp.float32)
    # PyTorch depthwise weight shape is (C, 1, 5, 5); we keep it squeezed.
    w = jax.random.normal(kw, (C, KH, KW), dtype=jnp.float32) * 0.1

    out = depthwise_conv2d_5x5(x, w)
    out = jax.block_until_ready(out)

    # Reference check with XLA's grouped conv (same semantics as the torch op).
    ref = jax.lax.conv_general_dilated(
        x,
        w[:, None, :, :],                       # (C, 1, 5, 5) = OIHW, I=1
        window_strides=(1, 1),
        padding=((PAD, PAD), (PAD, PAD)),
        dimension_numbers=("NCHW", "OIHW", "NCHW"),
        feature_group_count=C,
    )
    assert out.shape == (N, C, H, W)
    assert jnp.allclose(out, ref, rtol=1e-3, atol=1e-3), "mismatch vs reference"

    print("KERNEL_OK")
</pallas_src>

<mosaic_0001>
module attributes {stable_mosaic.version = 11 : i64} {
  func.func @_dwconv_kernel(%arg0: i32, %arg1: i32, %arg2: memref<1x7x7x128xf32, #tpu.memory_space<vmem>>, %arg3: memref<5x5x128xf32, #tpu.memory_space<vmem>>, %arg4: memref<1x7x7x128xf32, #tpu.memory_space<vmem>>, %arg5: memref<5x11x7x128xf32, #tpu.memory_space<vmem>>) attributes {dimension_semantics = [#tpu.dimension_semantics<parallel>, #tpu.dimension_semantics<parallel>], iteration_bounds = array<i64: 1, 2>, scalar_prefetch = 0 : i64, scratch_operands = 1 : i64, tpu.core_type = #tpu.core_type<tc>, window_params = [{transform_indices = @transform_0, window_bounds = array<i64: 1, 7, 7, 128>}, {transform_indices = @transform_1, window_bounds = array<i64: 5, 5, 128>}, {transform_indices = @transform_2, window_bounds = array<i64: 1, 7, 7, 128>}]} {
    %cst = arith.constant 0.000000e+00 : f32
    %0 = vector.broadcast %cst : f32 to vector<5x11x7x128xf32>
    %c0 = arith.constant 0 : index
    %c0_0 = arith.constant 0 : index
    %c0_1 = arith.constant 0 : index
    %c0_2 = arith.constant 0 : index
    %1 = vector.load %arg5[%c0, %c0_0, %c0_1, %c0_2] : memref<5x11x7x128xf32, #tpu.memory_space<vmem>>, vector<5x11x7x128xf32>
    tpu.vector_store %arg5[%c0, %c0_0, %c0_1, %c0_2], %0 {strides = array<i32>} : memref<5x11x7x128xf32, #tpu.memory_space<vmem>>, vector<5x11x7x128xf32>,
    %c0_3 = arith.constant 0 : index
    %c0_4 = arith.constant 0 : index
    %c0_5 = arith.constant 0 : index
    %c0_6 = arith.constant 0 : index
    %2 = vector.load %arg2[%c0_3, %c0_4, %c0_5, %c0_6] : memref<1x7x7x128xf32, #tpu.memory_space<vmem>>, vector<1x7x5x128xf32>
    %3 = vector.shape_cast %2 : vector<1x7x5x128xf32> to vector<7x5x128xf32>
    %c0_7 = arith.constant 0 : index
    %c2 = arith.constant 2 : index
    %c2_8 = arith.constant 2 : index
    %c0_9 = arith.constant 0 : index
    %4 = vector.load %arg5[%c0_7, %c2, %c2_8, %c0_9] : memref<5x11x7x128xf32, #tpu.memory_space<vmem>>, vector<1x7x5x128xf32>
    %5 = vector.shape_cast %4 : vector<1x7x5x128xf32> to vector<7x5x128xf32>
    %6 = vector.shape_cast %3 : vector<7x5x128xf32> to vector<1x7x5x128xf32>
    tpu.vector_store %arg5[%c0_7, %c2, %c2_8, %c0_9], %6 {strides = array<i32>} : memref<5x11x7x128xf32, #tpu.memory_space<vmem>>, vector<1x7x5x128xf32>,
    %c0_10 = arith.constant 0 : index
    %c0_11 = arith.constant 0 : index
    %c0_12 = arith.constant 0 : index
    %c0_13 = arith.constant 0 : index
    %7 = vector.load %arg2[%c0_10, %c0_11, %c0_12, %c0_13] : memref<1x7x7x128xf32, #tpu.memory_space<vmem>>, vector<1x7x6x128xf32>
    %8 = vector.shape_cast %7 : vector<1x7x6x128xf32> to vector<7x6x128xf32>
    %c1 = arith.constant 1 : index
    %c2_14 = arith.constant 2 : index
    %c1_15 = arith.constant 1 : index
    %c0_16 = arith.constant 0 : index
    %9 = vector.load %arg5[%c1, %c2_14, %c1_15, %c0_16] : memref<5x11x7x128xf32, #tpu.memory_space<vmem>>, vector<1x7x6x128xf32>
    %10 = vector.shape_cast %9 : vector<1x7x6x128xf32> to vector<7x6x128xf32>
    %11 = vector.shape_cast %8 : vector<7x6x128xf32> to vector<1x7x6x128xf32>
    tpu.vector_store %arg5[%c1, %c2_14, %c1_15, %c0_16], %11 {strides = array<i32>} : memref<5x11x7x128xf32, #tpu.memory_space<vmem>>, vector<1x7x6x128xf32>,
    %c0_17 = arith.constant 0 : index
    %c0_18 = arith.constant 0 : index
    %c0_19 = arith.constant 0 : index
    %c0_20 = arith.constant 0 : index
    %12 = vector.load %arg2[%c0_17, %c0_18, %c0_19, %c0_20] : memref<1x7x7x128xf32, #tpu.memory_space<vmem>>, vector<1x7x7x128xf32>
    %13 = vector.shape_cast %12 : vector<1x7x7x128xf32> to vector<7x7x128xf32>
    %c2_21 = arith.constant 2 : index
    %c2_22 = arith.constant 2 : index
    %c0_23 = arith.constant 0 : index
    %c0_24 = arith.constant 0 : index
    %14 = vector.load %arg5[%c2_21, %c2_22, %c0_23, %c0_24] : memref<5x11x7x128xf32, #tpu.memory_space<vmem>>, vector<1x7x7x128xf32>
    %15 = vector.shape_cast %14 : vector<1x7x7x128xf32> to vector<7x7x128xf32>
    %16 = vector.shape_cast %13 : vector<7x7x128xf32> to vector<1x7x7x128xf32>
    tpu.vector_store %arg5[%c2_21, %c2_22, %c0_23, %c0_24], %16 {strides = array<i32>} : memref<5x11x7x128xf32, #tpu.memory_space<vmem>>, vector<1x7x7x128xf32>,
    %c0_25 = arith.constant 0 : index
    %c0_26 = arith.constant 0 : index
    %c1_27 = arith.constant 1 : index
    %c0_28 = arith.constant 0 : index
    %17 = vector.load %arg2[%c0_25, %c0_26, %c1_27, %c0_28] : memref<1x7x7x128xf32, #tpu.memory_space<vmem>>, vector<1x7x6x128xf32>
    %18 = vector.shape_cast %17 : vector<1x7x6x128xf32> to vector<7x6x128xf32>
    %c3 = arith.constant 3 : index
    %c2_29 = arith.constant 2 : index
    %c0_30 = arith.constant 0 : index
    %c0_31 = arith.constant 0 : index
    %19 = vector.load %arg5[%c3, %c2_29, %c0_30, %c0_31] : memref<5x11x7x128xf32, #tpu.memory_space<vmem>>, vector<1x7x6x128xf32>
    %20 = vector.shape_cast %19 : vector<1x7x6x128xf32> to vector<7x6x128xf32>
    %21 = vector.shape_cast %18 : vector<7x6x128xf32> to vector<1x7x6x128xf32>
    tpu.vector_store %arg5[%c3, %c2_29, %c0_30, %c0_31], %21 {strides = array<i32>} : memref<5x11x7x128xf32, #tpu.memory_space<vmem>>, vector<1x7x6x128xf32>,
    %c0_32 = arith.constant 0 : index
    %c0_33 = arith.constant 0 : index
    %c2_34 = arith.constant 2 : index
    %c0_35 = arith.constant 0 : index
    %22 = vector.load %arg2[%c0_32, %c0_33, %c2_34, %c0_35] : memref<1x7x7x128xf32, #tpu.memory_space<vmem>>, vector<1x7x5x128xf32>
    %23 = vector.shape_cast %22 : vector<1x7x5x128xf32> to vector<7x5x128xf32>
    %c4 = arith.constant 4 : index
    %c2_36 = arith.constant 2 : index
    %c0_37 = arith.constant 0 : index
    %c0_38 = arith.constant 0 : index
    %24 = vector.load %arg5[%c4, %c2_36, %c0_37, %c0_38] : memref<5x11x7x128xf32, #tpu.memory_space<vmem>>, vector<1x7x5x128xf32>
    %25 = vector.shape_cast %24 : vector<1x7x5x128xf32> to vector<7x5x128xf32>
    %26 = vector.shape_cast %23 : vector<7x5x128xf32> to vector<1x7x5x128xf32>
    tpu.vector_store %arg5[%c4, %c2_36, %c0_37, %c0_38], %26 {strides = array<i32>} : memref<5x11x7x128xf32, #tpu.memory_space<vmem>>, vector<1x7x5x128xf32>,
    %c0_39 = arith.constant 0 : index
    %c0_40 = arith.constant 0 : index
    %c0_41 = arith.constant 0 : index
    %27 = vector.load %arg3[%c0_39, %c0_40, %c0_41] : memref<5x5x128xf32, #tpu.memory_space<vmem>>, vector<5x5x128xf32>
    %cst_42 = arith.constant 0.000000e+00 : f32
    %28 = vector.broadcast %cst_42 : f32 to vector<7x128xf32>
    %c0_43 = arith.constant 0 : index
    %c0_44 = arith.constant 0 : index
    %c0_45 = arith.constant 0 : index
    %c0_46 = arith.constant 0 : index
    %29 = vector.load %arg5[%c0_43, %c0_44, %c0_45, %c0_46] : memref<5x11x7x128xf32, #tpu.memory_space<vmem>>, vector<1x1x7x128xf32>
    %30 = vector.shape_cast %29 : vector<1x1x7x128xf32> to vector<7x128xf32>
    %31 = vector.extract_strided_slice %27 {offsets = [0, 0, 0], sizes = [1, 1, 128], strides = [1, 1, 1]} : vector<5x5x128xf32> to vector<1x1x128xf32>
    %32 = vector.shape_cast %31 : vector<1x1x128xf32> to vector<128xf32>
    %33 = vector.shape_cast %32 : vector<128xf32> to vector<1x128xf32>
    %34 = vector.broadcast %33 : vector<1x128xf32> to vector<7x128xf32>
    %35 = arith.mulf %30, %34 : vector<7x128xf32>
    %36 = arith.addf %28, %35 : vector<7x128xf32>
    %c0_47 = arith.constant 0 : index
    %c1_48 = arith.constant 1 : index
    %c0_49 = arith.constant 0 : index
    %c0_50 = arith.constant 0 : index
    %37 = vector.load %arg5[%c0_47, %c1_48, %c0_49, %c0_50] : memref<5x11x7x128xf32, #tpu.memory_space<vmem>>, vector<1x1x7x128xf32>
    %38 = vector.shape_cast %37 : vector<1x1x7x128xf32> to vector<7x128xf32>
    %39 = vector.extract_strided_slice %27 {offsets = [1, 0, 0], sizes = [1, 1, 128], strides = [1, 1, 1]} : vector<5x5x128xf32> to vector<1x1x128xf32>
    %40 = vector.shape_cast %39 : vector<1x1x128xf32> to vector<128xf32>
    %41 = vector.shape_cast %40 : vector<128xf32> to vector<1x128xf32>
    %42 = vector.broadcast %41 : vector<1x128xf32> to vector<7x128xf32>
    %43 = arith.mulf %38, %42 : vector<7x128xf32>
    %44 = arith.addf %36, %43 : vector<7x128xf32>
    %c0_51 = arith.constant 0 : index
    %c2_52 = arith.constant 2 : index
    %c0_53 = arith.constant 0 : index
    %c0_54 = arith.constant 0 : index
    %45 = vector.load %arg5[%c0_51, %c2_52, %c0_53, %c0_54] : memref<5x11x7x128xf32, #tpu.memory_space<vmem>>, vector<1x1x7x128xf32>
    %46 = vector.shape_cast %45 : vector<1x1x7x128xf32> to vector<7x128xf32>
    %47 = vector.extract_strided_slice %27 {offsets = [2, 0, 0], sizes = [1, 1, 128], strides = [1, 1, 1]} : vector<5x5x128xf32> to vector<1x1x128xf32>
    %48 = vector.shape_cast %47 : vector<1x1x128xf32> to vector<128xf32>
    %49 = vector.shape_cast %48 : vector<128xf32> to vector<1x128xf32>
    %50 = vector.broadcast %49 : vector<1x128xf32> to vector<7x128xf32>
    %51 = arith.mulf %46, %50 : vector<7x128xf32>
    %52 = arith.addf %44, %51 : vector<7x128xf32>
    %c0_55 = arith.constant 0 : index
    %c3_56 = arith.constant 3 : index
    %c0_57 = arith.constant 0 : index
    %c0_58 = arith.constant 0 : index
    %53 = vector.load %arg5[%c0_55, %c3_56, %c0_57, %c0_58] : memref<5x11x7x128xf32, #tpu.memory_space<vmem>>, vector<1x1x7x128xf32>
    %54 = vector.shape_cast %53 : vector<1x1x7x128xf32> to vector<7x128xf32>
    %55 = vector.extract_strided_slice %27 {offsets = [3, 0, 0], sizes = [1, 1, 128], strides = [1, 1, 1]} : vector<5x5x128xf32> to vector<1x1x128xf32>
    %56 = vector.shape_cast %55 : vector<1x1x128xf32> to vector<128xf32>
    %57 = vector.shape_cast %56 : vector<128xf32> to vector<1x128xf32>
    %58 = vector.broadcast %57 : vector<1x128xf32> to vector<7x128xf32>
    %59 = arith.mulf %54, %58 : vector<7x128xf32>
    %60 = arith.addf %52, %59 : vector<7x128xf32>
    %c0_59 = arith.constant 0 : index
    %c4_60 = arith.constant 4 : index
    %c0_61 = arith.constant 0 : index
    %c0_62 = arith.constant 0 : index
    %61 = vector.load %arg5[%c0_59, %c4_60, %c0_61, %c0_62] : memref<5x11x7x128xf32, #tpu.memory_space<vmem>>, vector<1x1x7x128xf32>
    %62 = vector.shape_cast %61 : vector<1x1x7x128xf32> to vector<7x128xf32>
    %63 = vector.extract_strided_slice %27 {offsets = [4, 0, 0], sizes = [1, 1, 128], strides = [1, 1, 1]} : vector<5x5x128xf32> to vector<1x1x128xf32>
    %64 = vector.shape_cast %63 : vector<1x1x128xf32> to vector<128xf32>
    %65 = vector.shape_cast %64 : vector<128xf32> to vector<1x128xf32>
    %66 = vector.broadcast %65 : vector<1x128xf32> to vector<7x128xf32>
    %67 = arith.mulf %62, %66 : vector<7x128xf32>
    %68 = arith.addf %60, %67 : vector<7x128xf32>
    %c1_63 = arith.constant 1 : index
    %c0_64 = arith.constant 0 : index
    %c0_65 = arith.constant 0 : index
    %c0_66 = arith.constant 0 : index
    %69 = vector.load %arg5[%c1_63, %c0_64, %c0_65, %c0_66] : memref<5x11x7x128xf32, #tpu.memory_space<vmem>>, vector<1x1x7x128xf32>
    %70 = vector.shape_cast %69 : vector<1x1x7x128xf32> to vector<7x128xf32>
    %71 = vector.extract_strided_slice %27 {offsets = [0, 1, 0], sizes = [1, 1, 128], strides = [1, 1, 1]} : vector<5x5x128xf32> to vector<1x1x128xf32>
    %72 = vector.shape_cast %71 : vector<1x1x128xf32> to vector<128xf32>
    %73 = vector.shape_cast %72 : vector<128xf32> to vector<1x128xf32>
    %74 = vector.broadcast %73 : vector<1x128xf32> to vector<7x128xf32>
    %75 = arith.mulf %70, %74 : vector<7x128xf32>
    %76 = arith.addf %68, %75 : vector<7x128xf32>
    %c1_67 = arith.constant 1 : index
    %c1_68 = arith.constant 1 : index
    %c0_69 = arith.constant 0 : index
    %c0_70 = arith.constant 0 : index
    %77 = vector.load %arg5[%c1_67, %c1_68, %c0_69, %c0_70] : memref<5x11x7x128xf32, #tpu.memory_space<vmem>>, vector<1x1x7x128xf32>
    %78 = vector.shape_cast %77 : vector<1x1x7x128xf32> to vector<7x128xf32>
    %79 = vector.extract_strided_slice %27 {offsets = [1, 1, 0], sizes = [1, 1, 128], strides = [1, 1, 1]} : vector<5x5x128xf32> to vector<1x1x128xf32>
    %80 = vector.shape_cast %79 : vector<1x1x128xf32> to vector<128xf32>
    %81 = vector.shape_cast %80 : vector<128xf32> to vector<1x128xf32>
    %82 = vector.broadcast %81 : vector<1x128xf32> to vector<7x128xf32>
    %83 = arith.mulf %78, %82 : vector<7x128xf32>
    %84 = arith.addf %76, %83 : vector<7x128xf32>
    %c1_71 = arith.constant 1 : index
    %c2_72 = arith.constant 2 : index
    %c0_73 = arith.constant 0 : index
    %c0_74 = arith.constant 0 : index
    %85 = vector.load %arg5[%c1_71, %c2_72, %c0_73, %c0_74] : memref<5x11x7x128xf32, #tpu.memory_space<vmem>>, vector<1x1x7x128xf32>
    %86 = vector.shape_cast %85 : vector<1x1x7x128xf32> to vector<7x128xf32>
    %87 = vector.extract_strided_slice %27 {offsets = [2, 1, 0], sizes = [1, 1, 128], strides = [1, 1, 1]} : vector<5x5x128xf32> to vector<1x1x128xf32>
    %88 = vector.shape_cast %87 : vector<1x1x128xf32> to vector<128xf32>
    %89 = vector.shape_cast %88 : vector<128xf32> to vector<1x128xf32>
    %90 = vector.broadcast %89 : vector<1x128xf32> to vector<7x128xf32>
    %91 = arith.mulf %86, %90 : vector<7x128xf32>
    %92 = arith.addf %84, %91 : vector<7x128xf32>
    %c1_75 = arith.constant 1 : index
    %c3_76 = arith.constant 3 : index
    %c0_77 = arith.constant 0 : index
    %c0_78 = arith.constant 0 : index
    %93 = vector.load %arg5[%c1_75, %c3_76, %c0_77, %c0_78] : memref<5x11x7x128xf32, #tpu.memory_space<vmem>>, vector<1x1x7x128xf32>
    %94 = vector.shape_cast %93 : vector<1x1x7x128xf32> to vector<7x128xf32>
    %95 = vector.extract_strided_slice %27 {offsets = [3, 1, 0], sizes = [1, 1, 128], strides = [1, 1, 1]} : vector<5x5x128xf32> to vector<1x1x128xf32>
    %96 = vector.shape_cast %95 : vector<1x1x128xf32> to vector<128xf32>
    %97 = vector.shape_cast %96 : vector<128xf32> to vector<1x128xf32>
    %98 = vector.broadcast %97 : vector<1x128xf32> to vector<7x128xf32>
    %99 = arith.mulf %94, %98 : vector<7x128xf32>
    %100 = arith.addf %92, %99 : vector<7x128xf32>
    %c1_79 = arith.constant 1 : index
    %c4_80 = arith.constant 4 : index
    %c0_81 = arith.constant 0 : index
    %c0_82 = arith.constant 0 : index
    %101 = vector.load %arg5[%c1_79, %c4_80, %c0_81, %c0_82] : memref<5x11x7x128xf32, #tpu.memory_space<vmem>>, vector<1x1x7x128xf32>
    %102 = vector.shape_cast %101 : vector<1x1x7x128xf32> to vector<7x128xf32>
    %103 = vector.extract_strided_slice %27 {offsets = [4, 1, 0], sizes = [1, 1, 128], strides = [1, 1, 1]} : vector<5x5x128xf32> to vector<1x1x128xf32>
    %104 = vector.shape_cast %103 : vector<1x1x128xf32> to vector<128xf32>
    %105 = vector.shape_cast %104 : vector<128xf32> to vector<1x128xf32>
    %106 = vector.broadcast %105 : vector<1x128xf32> to vector<7x128xf32>
    %107 = arith.mulf %102, %106 : vector<7x128xf32>
    %108 = arith.addf %100, %107 : vector<7x128xf32>
    %c2_83 = arith.constant 2 : index
    %c0_84 = arith.constant 0 : index
    %c0_85 = arith.constant 0 : index
    %c0_86 = arith.constant 0 : index
    %109 = vector.load %arg5[%c2_83, %c0_84, %c0_85, %c0_86] : memref<5x11x7x128xf32, #tpu.memory_space<vmem>>, vector<1x1x7x128xf32>
    %110 = vector.shape_cast %109 : vector<1x1x7x128xf32> to vector<7x128xf32>
    %111 = vector.extract_strided_slice %27 {offsets = [0, 2, 0], sizes = [1, 1, 128], strides = [1, 1, 1]} : vector<5x5x128xf32> to vector<1x1x128xf32>
    %112 = vector.shape_cast %111 : vector<1x1x128xf32> to vector<128xf32>
    %113 = vector.shape_cast %112 : vector<128xf32> to vector<1x128xf32>
    %114 = vector.broadcast %113 : vector<1x128xf32> to vector<7x128xf32>
    %115 = arith.mulf %110, %114 : vector<7x128xf32>
    %116 = arith.addf %108, %115 : vector<7x128xf32>
    %c2_87 = arith.constant 2 : index
    %c1_88 = arith.constant 1 : index
    %c0_89 = arith.constant 0 : index
    %c0_90 = arith.constant 0 : index
    %117 = vector.load %arg5[%c2_87, %c1_88, %c0_89, %c0_90] : memref<5x11x7x128xf32, #tpu.memory_space<vmem>>, vector<1x1x7x128xf32>
    %118 = vector.shape_cast %117 : vector<1x1x7x128xf32> to vector<7x128xf32>
    %119 = vector.extract_strided_slice %27 {offsets = [1, 2, 0], sizes = [1, 1, 128], strides = [1, 1, 1]} : vector<5x5x128xf32> to vector<1x1x128xf32>
    %120 = vector.shape_cast %119 : vector<1x1x128xf32> to vector<128xf32>
    %121 = vector.shape_cast %120 : vector<128xf32> to vector<1x128xf32>
    %122 = vector.broadcast %121 : vector<1x128xf32> to vector<7x128xf32>
    %123 = arith.mulf %118, %122 : vector<7x128xf32>
    %124 = arith.addf %116, %123 : vector<7x128xf32>
    %c2_91 = arith.constant 2 : index
    %c2_92 = arith.constant 2 : index
    %c0_93 = arith.constant 0 : index
    %c0_94 = arith.constant 0 : index
    %125 = vector.load %arg5[%c2_91, %c2_92, %c0_93, %c0_94] : memref<5x11x7x128xf32, #tpu.memory_space<vmem>>, vector<1x1x7x128xf32>
    %126 = vector.shape_cast %125 : vector<1x1x7x128xf32> to vector<7x128xf32>
    %127 = vector.extract_strided_slice %27 {offsets = [2, 2, 0], sizes = [1, 1, 128], strides = [1, 1, 1]} : vector<5x5x128xf32> to vector<1x1x128xf32>
    %128 = vector.shape_cast %127 : vector<1x1x128xf32> to vector<128xf32>
    %129 = vector.shape_cast %128 : vector<128xf32> to vector<1x128xf32>
    %130 = vector.broadcast %129 : vector<1x128xf32> to vector<7x128xf32>
    %131 = arith.mulf %126, %130 : vector<7x128xf32>
    %132 = arith.addf %124, %131 : vector<7x128xf32>
    %c2_95 = arith.constant 2 : index
    %c3_96 = arith.constant 3 : index
    %c0_97 = arith.constant 0 : index
    %c0_98 = arith.constant 0 : index
    %133 = vector.load %arg5[%c2_95, %c3_96, %c0_97, %c0_98] : memref<5x11x7x128xf32, #tpu.memory_space<vmem>>, vector<1x1x7x128xf32>
    %134 = vector.shape_cast %133 : vector<1x1x7x128xf32> to vector<7x128xf32>
    %135 = vector.extract_strided_slice %27 {offsets = [3, 2, 0], sizes = [1, 1, 128], strides = [1, 1, 1]} : vector<5x5x128xf32> to vector<1x1x128xf32>
    %136 = vector.shape_cast %135 : vector<1x1x128xf32> to vector<128xf32>
    %137 = vector.shape_cast %136 : vector<128xf32> to vector<1x128xf32>
    %138 = vector.broadcast %137 : vector<1x128xf32> to vector<7x128xf32>
    %139 = arith.mulf %134, %138 : vector<7x128xf32>
    %140 = arith.addf %132, %139 : vector<7x128xf32>
    %c2_99 = arith.constant 2 : index
    %c4_100 = arith.constant 4 : index
    %c0_101 = arith.constant 0 : index
    %c0_102 = arith.constant 0 : index
    %141 = vector.load %arg5[%c2_99, %c4_100, %c0_101, %c0_102] : memref<5x11x7x128xf32, #tpu.memory_space<vmem>>, vector<1x1x7x128xf32>
    %142 = vector.shape_cast %141 : vector<1x1x7x128xf32> to vector<7x128xf32>
    %143 = vector.extract_strided_slice %27 {offsets = [4, 2, 0], sizes = [1, 1, 128], strides = [1, 1, 1]} : vector<5x5x128xf32> to vector<1x1x128xf32>
    %144 = vector.shape_cast %143 : vector<1x1x128xf32> to vector<128xf32>
    %145 = vector.shape_cast %144 : vector<128xf32> to vector<1x128xf32>
    %146 = vector.broadcast %145 : vector<1x128xf32> to vector<7x128xf32>
    %147 = arith.mulf %142, %146 : vector<7x128xf32>
    %148 = arith.addf %140, %147 : vector<7x128xf32>
    %c3_103 = arith.constant 3 : index
    %c0_104 = arith.constant 0 : index
    %c0_105 = arith.constant 0 : index
    %c0_106 = arith.constant 0 : index
    %149 = vector.load %arg5[%c3_103, %c0_104, %c0_105, %c0_106] : memref<5x11x7x128xf32, #tpu.memory_space<vmem>>, vector<1x1x7x128xf32>
    %150 = vector.shape_cast %149 : vector<1x1x7x128xf32> to vector<7x128xf32>
    %151 = vector.extract_strided_slice %27 {offsets = [0, 3, 0], sizes = [1, 1, 128], strides = [1, 1, 1]} : vector<5x5x128xf32> to vector<1x1x128xf32>
    %152 = vector.shape_cast %151 : vector<1x1x128xf32> to vector<128xf32>
    %153 = vector.shape_cast %152 : vector<128xf32> to vector<1x128xf32>
    %154 = vector.broadcast %153 : vector<1x128xf32> to vector<7x128xf32>
    %155 = arith.mulf %150, %154 : vector<7x128xf32>
    %156 = arith.addf %148, %155 : vector<7x128xf32>
    %c3_107 = arith.constant 3 : index
    %c1_108 = arith.constant 1 : index
    %c0_109 = arith.constant 0 : index
    %c0_110 = arith.constant 0 : index
    %157 = vector.load %arg5[%c3_107, %c1_108, %c0_109, %c0_110] : memref<5x11x7x128xf32, #tpu.memory_space<vmem>>, vector<1x1x7x128xf32>
    %158 = vector.shape_cast %157 : vector<1x1x7x128xf32> to vector<7x128xf32>
    %159 = vector.extract_strided_slice %27 {offsets = [1, 3, 0], sizes = [1, 1, 128], strides = [1, 1, 1]} : vector<5x5x128xf32> to vector<1x1x128xf32>
    %160 = vector.shape_cast %159 : vector<1x1x128xf32> to vector<128xf32>
    %161 = vector.shape_cast %160 : vector<128xf32> to vector<1x128xf32>
    %162 = vector.broadcast %161 : vector<1x128xf32> to vector<7x128xf32>
    %163 = arith.mulf %158, %162 : vector<7x128xf32>
    %164 = arith.addf %156, %163 : vector<7x128xf32>
    %c3_111 = arith.constant 3 : index
    %c2_112 = arith.constant 2 : index
    %c0_113 = arith.constant 0 : index
    %c0_114 = arith.constant 0 : index
    %165 = vector.load %arg5[%c3_111, %c2_112, %c0_113, %c0_114] : memref<5x11x7x128xf32, #tpu.memory_space<vmem>>, vector<1x1x7x128xf32>
    %166 = vector.shape_cast %165 : vector<1x1x7x128xf32> to vector<7x128xf32>
    %167 = vector.extract_strided_slice %27 {offsets = [2, 3, 0], sizes = [1, 1, 128], strides = [1, 1, 1]} : vector<5x5x128xf32> to vector<1x1x128xf32>
    %168 = vector.shape_cast %167 : vector<1x1x128xf32> to vector<128xf32>
    %169 = vector.shape_cast %168 : vector<128xf32> to vector<1x128xf32>
    %170 = vector.broadcast %169 : vector<1x128xf32> to vector<7x128xf32>
    %171 = arith.mulf %166, %170 : vector<7x128xf32>
    %172 = arith.addf %164, %171 : vector<7x128xf32>
    %c3_115 = arith.constant 3 : index
    %c3_116 = arith.constant 3 : index
    %c0_117 = arith.constant 0 : index
    %c0_118 = arith.constant 0 : index
    %173 = vector.load %arg5[%c3_115, %c3_116, %c0_117, %c0_118] : memref<5x11x7x128xf32, #tpu.memory_space<vmem>>, vector<1x1x7x128xf32>
    %174 = vector.shape_cast %173 : vector<1x1x7x128xf32> to vector<7x128xf32>
    %175 = vector.extract_strided_slice %27 {offsets = [3, 3, 0], sizes = [1, 1, 128], strides = [1, 1, 1]} : vector<5x5x128xf32> to vector<1x1x128xf32>
    %176 = vector.shape_cast %175 : vector<1x1x128xf32> to vector<128xf32>
    %177 = vector.shape_cast %176 : vector<128xf32> to vector<1x128xf32>
    %178 = vector.broadcast %177 : vector<1x128xf32> to vector<7x128xf32>
    %179 = arith.mulf %174, %178 : vector<7x128xf32>
    %180 = arith.addf %172, %179 : vector<7x128xf32>
    %c3_119 = arith.constant 3 : index
    %c4_120 = arith.constant 4 : index
    %c0_121 = arith.constant 0 : index
    %c0_122 = arith.constant 0 : index
    %181 = vector.load %arg5[%c3_119, %c4_120, %c0_121, %c0_122] : memref<5x11x7x128xf32, #tpu.memory_space<vmem>>, vector<1x1x7x128xf32>
    %182 = vector.shape_cast %181 : vector<1x1x7x128xf32> to vector<7x128xf32>
    %183 = vector.extract_strided_slice %27 {offsets = [4, 3, 0], sizes = [1, 1, 128], strides = [1, 1, 1]} : vector<5x5x128xf32> to vector<1x1x128xf32>
    %184 = vector.shape_cast %183 : vector<1x1x128xf32> to vector<128xf32>
    %185 = vector.shape_cast %184 : vector<128xf32> to vector<1x128xf32>
    %186 = vector.broadcast %185 : vector<1x128xf32> to vector<7x128xf32>
    %187 = arith.mulf %182, %186 : vector<7x128xf32>
    %188 = arith.addf %180, %187 : vector<7x128xf32>
    %c4_123 = arith.constant 4 : index
    %c0_124 = arith.constant 0 : index
    %c0_125 = arith.constant 0 : index
    %c0_126 = arith.constant 0 : index
    %189 = vector.load %arg5[%c4_123, %c0_124, %c0_125, %c0_126] : memref<5x11x7x128xf32, #tpu.memory_space<vmem>>, vector<1x1x7x128xf32>
    %190 = vector.shape_cast %189 : vector<1x1x7x128xf32> to vector<7x128xf32>
    %191 = vector.extract_strided_slice %27 {offsets = [0, 4, 0], sizes = [1, 1, 128], strides = [1, 1, 1]} : vector<5x5x128xf32> to vector<1x1x128xf32>
    %192 = vector.shape_cast %191 : vector<1x1x128xf32> to vector<128xf32>
    %193 = vector.shape_cast %192 : vector<128xf32> to vector<1x128xf32>
    %194 = vector.broadcast %193 : vector<1x128xf32> to vector<7x128xf32>
    %195 = arith.mulf %190, %194 : vector<7x128xf32>
    %196 = arith.addf %188, %195 : vector<7x128xf32>
    %c4_127 = arith.constant 4 : index
    %c1_128 = arith.constant 1 : index
    %c0_129 = arith.constant 0 : index
    %c0_130 = arith.constant 0 : index
    %197 = vector.load %arg5[%c4_127, %c1_128, %c0_129, %c0_130] : memref<5x11x7x128xf32, #tpu.memory_space<vmem>>, vector<1x1x7x128xf32>
    %198 = vector.shape_cast %197 : vector<1x1x7x128xf32> to vector<7x128xf32>
    %199 = vector.extract_strided_slice %27 {offsets = [1, 4, 0], sizes = [1, 1, 128], strides = [1, 1, 1]} : vector<5x5x128xf32> to vector<1x1x128xf32>
    %200 = vector.shape_cast %199 : vector<1x1x128xf32> to vector<128xf32>
    %201 = vector.shape_cast %200 : vector<128xf32> to vector<1x128xf32>
    %202 = vector.broadcast %201 : vector<1x128xf32> to vector<7x128xf32>
    %203 = arith.mulf %198, %202 : vector<7x128xf32>
    %204 = arith.addf %196, %203 : vector<7x128xf32>
    %c4_131 = arith.constant 4 : index
    %c2_132 = arith.constant 2 : index
    %c0_133 = arith.constant 0 : index
    %c0_134 = arith.constant 0 : index
    %205 = vector.load %arg5[%c4_131, %c2_132, %c0_133, %c0_134] : memref<5x11x7x128xf32, #tpu.memory_space<vmem>>, vector<1x1x7x128xf32>
    %206 = vector.shape_cast %205 : vector<1x1x7x128xf32> to vector<7x128xf32>
    %207 = vector.extract_strided_slice %27 {offsets = [2, 4, 0], sizes = [1, 1, 128], strides = [1, 1, 1]} : vector<5x5x128xf32> to vector<1x1x128xf32>
    %208 = vector.shape_cast %207 : vector<1x1x128xf32> to vector<128xf32>
    %209 = vector.shape_cast %208 : vector<128xf32> to vector<1x128xf32>
    %210 = vector.broadcast %209 : vector<1x128xf32> to vector<7x128xf32>
    %211 = arith.mulf %206, %210 : vector<7x128xf32>
    %212 = arith.addf %204, %211 : vector<7x128xf32>
    %c4_135 = arith.constant 4 : index
    %c3_136 = arith.constant 3 : index
    %c0_137 = arith.constant 0 : index
    %c0_138 = arith.constant 0 : index
    %213 = vector.load %arg5[%c4_135, %c3_136, %c0_137, %c0_138] : memref<5x11x7x128xf32, #tpu.memory_space<vmem>>, vector<1x1x7x128xf32>
    %214 = vector.shape_cast %213 : vector<1x1x7x128xf32> to vector<7x128xf32>
    %215 = vector.extract_strided_slice %27 {offsets = [3, 4, 0], sizes = [1, 1, 128], strides = [1, 1, 1]} : vector<5x5x128xf32> to vector<1x1x128xf32>
    %216 = vector.shape_cast %215 : vector<1x1x128xf32> to vector<128xf32>
    %217 = vector.shape_cast %216 : vector<128xf32> to vector<1x128xf32>
    %218 = vector.broadcast %217 : vector<1x128xf32> to vector<7x128xf32>
    %219 = arith.mulf %214, %218 : vector<7x128xf32>
    %220 = arith.addf %212, %219 : vector<7x128xf32>
    %c4_139 = arith.constant 4 : index
    %c4_140 = arith.constant 4 : index
    %c0_141 = arith.constant 0 : index
    %c0_142 = arith.constant 0 : index
    %221 = vector.load %arg5[%c4_139, %c4_140, %c0_141, %c0_142] : memref<5x11x7x128xf32, #tpu.memory_space<vmem>>, vector<1x1x7x128xf32>
    %222 = vector.shape_cast %221 : vector<1x1x7x128xf32> to vector<7x128xf32>
    %223 = vector.extract_strided_slice %27 {offsets = [4, 4, 0], sizes = [1, 1, 128], strides = [1, 1, 1]} : vector<5x5x128xf32> to vector<1x1x128xf32>
    %224 = vector.shape_cast %223 : vector<1x1x128xf32> to vector<128xf32>
    %225 = vector.shape_cast %224 : vector<128xf32> to vector<1x128xf32>
    %226 = vector.broadcast %225 : vector<1x128xf32> to vector<7x128xf32>
    %227 = arith.mulf %222, %226 : vector<7x128xf32>
    %228 = arith.addf %220, %227 : vector<7x128xf32>
    %c0_143 = arith.constant 0 : index
    %c0_144 = arith.constant 0 : index
    %c0_145 = arith.constant 0 : index
    %c0_146 = arith.constant 0 : index
    %229 = vector.load %arg4[%c0_143, %c0_144, %c0_145, %c0_146] : memref<1x7x7x128xf32, #tpu.memory_space<vmem>>, vector<1x1x7x128xf32>
    %230 = vector.shape_cast %229 : vector<1x1x7x128xf32> to vector<7x128xf32>
    %231 = vector.shape_cast %228 : vector<7x128xf32> to vector<1x1x7x128xf32>
    tpu.vector_store %arg4[%c0_143, %c0_144, %c0_145, %c0_146], %231 {strides = array<i32>} : memref<1x7x7x128xf32, #tpu.memory_space<vmem>>, vector<1x1x7x128xf32>,
    %cst_147 = arith.constant 0.000000e+00 : f32
    %232 = vector.broadcast %cst_147 : f32 to vector<7x128xf32>
    %c0_148 = arith.constant 0 : index
    %c1_149 = arith.constant 1 : index
    %c0_150 = arith.constant 0 : index
    %c0_151 = arith.constant 0 : index
    %233 = vector.load %arg5[%c0_148, %c1_149, %c0_150, %c0_151] : memref<5x11x7x128xf32, #tpu.memory_space<vmem>>, vector<1x1x7x128xf32>
    %234 = vector.shape_cast %233 : vector<1x1x7x128xf32> to vector<7x128xf32>
    %235 = vector.extract_strided_slice %27 {offsets = [0, 0, 0], sizes = [1, 1, 128], strides = [1, 1, 1]} : vector<5x5x128xf32> to vector<1x1x128xf32>
    %236 = vector.shape_cast %235 : vector<1x1x128xf32> to vector<128xf32>
    %237 = vector.shape_cast %236 : vector<128xf32> to vector<1x128xf32>
    %238 = vector.broadcast %237 : vector<1x128xf32> to vector<7x128xf32>
    %239 = arith.mulf %234, %238 : vector<7x128xf32>
    %240 = arith.addf %232, %239 : vector<7x128xf32>
    %c0_152 = arith.constant 0 : index
    %c2_153 = arith.constant 2 : index
    %c0_154 = arith.constant 0 : index
    %c0_155 = arith.constant 0 : index
    %241 = vector.load %arg5[%c0_152, %c2_153, %c0_154, %c0_155] : memref<5x11x7x128xf32, #tpu.memory_space<vmem>>, vector<1x1x7x128xf32>
    %242 = vector.shape_cast %241 : vector<1x1x7x128xf32> to vector<7x128xf32>
    %243 = vector.extract_strided_slice %27 {offsets = [1, 0, 0], sizes = [1, 1, 128], strides = [1, 1, 1]} : vector<5x5x128xf32> to vector<1x1x128xf32>
    %244 = vector.shape_cast %243 : vector<1x1x128xf32> to vector<128xf32>
    %245 = vector.shape_cast %244 : vector<128xf32> to vector<1x128xf32>
    %246 = vector.broadcast %245 : vector<1x128xf32> to vector<7x128xf32>
    %247 = arith.mulf %242, %246 : vector<7x128xf32>
    %248 = arith.addf %240, %247 : vector<7x128xf32>
    %c0_156 = arith.constant 0 : index
    %c3_157 = arith.constant 3 : index
    %c0_158 = arith.constant 0 : index
    %c0_159 = arith.constant 0 : index
    %249 = vector.load %arg5[%c0_156, %c3_157, %c0_158, %c0_159] : memref<5x11x7x128xf32, #tpu.memory_space<vmem>>, vector<1x1x7x128xf32>
    %250 = vector.shape_cast %249 : vector<1x1x7x128xf32> to vector<7x128xf32>
    %251 = vector.extract_strided_slice %27 {offsets = [2, 0, 0], sizes = [1, 1, 128], strides = [1, 1, 1]} : vector<5x5x128xf32> to vector<1x1x128xf32>
    %252 = vector.shape_cast %251 : vector<1x1x128xf32> to vector<128xf32>
    %253 = vector.shape_cast %252 : vector<128xf32> to vector<1x128xf32>
    %254 = vector.broadcast %253 : vector<1x128xf32> to vector<7x128xf32>
    %255 = arith.mulf %250, %254 : vector<7x128xf32>
    %256 = arith.addf %248, %255 : vector<7x128xf32>
    %c0_160 = arith.constant 0 : index
    %c4_161 = arith.constant 4 : index
    %c0_162 = arith.constant 0 : index
    %c0_163 = arith.constant 0 : index
    %257 = vector.load %arg5[%c0_160, %c4_161, %c0_162, %c0_163] : memref<5x11x7x128xf32, #tpu.memory_space<vmem>>, vector<1x1x7x128xf32>
    %258 = vector.shape_cast %257 : vector<1x1x7x128xf32> to vector<7x128xf32>
    %259 = vector.extract_strided_slice %27 {offsets = [3, 0, 0], sizes = [1, 1, 128], strides = [1, 1, 1]} : vector<5x5x128xf32> to vector<1x1x128xf32>
    %260 = vector.shape_cast %259 : vector<1x1x128xf32> to vector<128xf32>
    %261 = vector.shape_cast %260 : vector<128xf32> to vector<1x128xf32>
    %262 = vector.broadcast %261 : vector<1x128xf32> to vector<7x128xf32>
    %263 = arith.mulf %258, %262 : vector<7x128xf32>
    %264 = arith.addf %256, %263 : vector<7x128xf32>
    %c0_164 = arith.constant 0 : index
    %c5 = arith.constant 5 : index
    %c0_165 = arith.constant 0 : index
    %c0_166 = arith.constant 0 : index
    %265 = vector.load %arg5[%c0_164, %c5, %c0_165, %c0_166] : memref<5x11x7x128xf32, #tpu.memory_space<vmem>>, vector<1x1x7x128xf32>
    %266 = vector.shape_cast %265 : vector<1x1x7x128xf32> to vector<7x128xf32>
    %267 = vector.extract_strided_slice %27 {offsets = [4, 0, 0], sizes = [1, 1, 128], strides = [1, 1, 1]} : vector<5x5x128xf32> to vector<1x1x128xf32>
    %268 = vector.shape_cast %267 : vector<1x1x128xf32> to vector<128xf32>
    %269 = vector.shape_cast %268 : vector<128xf32> to vector<1x128xf32>
    %270 = vector.broadcast %269 : vector<1x128xf32> to vector<7x128xf32>
    %271 = arith.mulf %266, %270 : vector<7x128xf32>
    %272 = arith.addf %264, %271 : vector<7x128xf32>
    %c1_167 = arith.constant 1 : index
    %c1_168 = arith.constant 1 : index
    %c0_169 = arith.constant 0 : index
    %c0_170 = arith.constant 0 : index
    %273 = vector.load %arg5[%c1_167, %c1_168, %c0_169, %c0_170] : memref<5x11x7x128xf32, #tpu.memory_space<vmem>>, vector<1x1x7x128xf32>
    %274 = vector.shape_cast %273 : vector<1x1x7x128xf32> to vector<7x128xf32>
    %275 = vector.extract_strided_slice %27 {offsets = [0, 1, 0], sizes = [1, 1, 128], strides = [1, 1, 1]} : vector<5x5x128xf32> to vector<1x1x128xf32>
    %276 = vector.shape_cast %275 : vector<1x1x128xf32> to vector<128xf32>
    %277 = vector.shape_cast %276 : vector<128xf32> to vector<1x128xf32>
    %278 = vector.broadcast %277 : vector<1x128xf32> to vector<7x128xf32>
    %279 = arith.mulf %274, %278 : vector<7x128xf32>
    %280 = arith.addf %272, %279 : vector<7x128xf32>
    %c1_171 = arith.constant 1 : index
    %c2_172 = arith.constant 2 : index
    %c0_173 = arith.constant 0 : index
    %c0_174 = arith.constant 0 : index
    %281 = vector.load %arg5[%c1_171, %c2_172, %c0_173, %c0_174] : memref<5x11x7x128xf32, #tpu.memory_space<vmem>>, vector<1x1x7x128xf32>
    %282 = vector.shape_cast %281 : vector<1x1x7x128xf32> to vector<7x128xf32>
    %283 = vector.extract_strided_slice %27 {offsets = [1, 1, 0], sizes = [1, 1, 128], strides = [1, 1, 1]} : vector<5x5x128xf32> to vector<1x1x128xf32>
    %284 = vector.shape_cast %283 : vector<1x1x128xf32> to vector<128xf32>
    %285 = vector.shape_cast %284 : vector<128xf32> to vector<1x128xf32>
    %286 = vector.broadcast %285 : vector<1x128xf32> to vector<7x128xf32>
    %287 = arith.mulf %282, %286 : vector<7x128xf32>
    %288 = arith.addf %280, %287 : vector<7x128xf32>
    %c1_175 = arith.constant 1 : index
    %c3_176 = arith.constant 3 : index
    %c0_177 = arith.constant 0 : index
    %c0_178 = arith.constant 0 : index
    %289 = vector.load %arg5[%c1_175, %c3_176, %c0_177, %c0_178] : memref<5x11x7x128xf32, #tpu.memory_space<vmem>>, vector<1x1x7x128xf32>
    %290 = vector.shape_cast %289 : vector<1x1x7x128xf32> to vector<7x128xf32>
    %291 = vector.extract_strided_slice %27 {offsets = [2, 1, 0], sizes = [1, 1, 128], strides = [1, 1, 1]} : vector<5x5x128xf32> to vector<1x1x128xf32>
    %292 = vector.shape_cast %291 : vector<1x1x128xf32> to vector<128xf32>
    %293 = vector.shape_cast %292 : vector<128xf32> to vector<1x128xf32>
    %294 = vector.broadcast %293 : vector<1x128xf32> to vector<7x128xf32>
    %295 = arith.mulf %290, %294 : vector<7x128xf32>
    %296 = arith.addf %288, %295 : vector<7x128xf32>
    %c1_179 = arith.constant 1 : index
    %c4_180 = arith.constant 4 : index
    %c0_181 = arith.constant 0 : index
    %c0_182 = arith.constant 0 : index
    %297 = vector.load %arg5[%c1_179, %c4_180, %c0_181, %c0_182] : memref<5x11x7x128xf32, #tpu.memory_space<vmem>>, vector<1x1x7x128xf32>
    %298 = vector.shape_cast %297 : vector<1x1x7x128xf32> to vector<7x128xf32>
    %299 = vector.extract_strided_slice %27 {offsets = [3, 1, 0], sizes = [1, 1, 128], strides = [1, 1, 1]} : vector<5x5x128xf32> to vector<1x1x128xf32>
    %300 = vector.shape_cast %299 : vector<1x1x128xf32> to vector<128xf32>
    %301 = vector.shape_cast %300 : vector<128xf32> to vector<1x128xf32>
    %302 = vector.broadcast %301 : vector<1x128xf32> to vector<7x128xf32>
    %303 = arith.mulf %298, %302 : vector<7x128xf32>
    %304 = arith.addf %296, %303 : vector<7x128xf32>
    %c1_183 = arith.constant 1 : index
    %c5_184 = arith.constant 5 : index
    %c0_185 = arith.constant 0 : index
    %c0_186 = arith.constant 0 : index
    %305 = vector.load %arg5[%c1_183, %c5_184, %c0_185, %c0_186] : memref<5x11x7x128xf32, #tpu.memory_space<vmem>>, vector<1x1x7x128xf32>
    %306 = vector.shape_cast %305 : vector<1x1x7x128xf32> to vector<7x128xf32>
    %307 = vector.extract_strided_slice %27 {offsets = [4, 1, 0], sizes = [1, 1, 128], strides = [1, 1, 1]} : vector<5x5x128xf32> to vector<1x1x128xf32>
    %308 = vector.shape_cast %307 : vector<1x1x128xf32> to vector<128xf32>
    %309 = vector.shape_cast %308 : vector<128xf32> to vector<1x128xf32>
    %310 = vector.broadcast %309 : vector<1x128xf32> to vector<7x128xf32>
    %311 = arith.mulf %306, %310 : vector<7x128xf32>
    %312 = arith.addf %304, %311 : vector<7x128xf32>
    %c2_187 = arith.constant 2 : index
    %c1_188 = arith.constant 1 : index
    %c0_189 = arith.constant 0 : index
    %c0_190 = arith.constant 0 : index
    %313 = vector.load %arg5[%c2_187, %c1_188, %c0_189, %c0_190] : memref<5x11x7x128xf32, #tpu.memory_space<vmem>>, vector<1x1x7x128xf32>
    %314 = vector.shape_cast %313 : vector<1x1x7x128xf32> to vector<7x128xf32>
    %315 = vector.extract_strided_slice %27 {offsets = [0, 2, 0], sizes = [1, 1, 128], strides = [1, 1, 1]} : vector<5x5x128xf32> to vector<1x1x128xf32>
    %316 = vector.shape_cast %315 : vector<1x1x128xf32> to vector<128xf32>
    %317 = vector.shape_cast %316 : vector<128xf32> to vector<1x128xf32>
    %318 = vector.broadcast %317 : vector<1x128xf32> to vector<7x128xf32>
    %319 = arith.mulf %314, %318 : vector<7x128xf32>
    %320 = arith.addf %312, %319 : vector<7x128xf32>
    %c2_191 = arith.constant 2 : index
    %c2_192 = arith.constant 2 : index
    %c0_193 = arith.constant 0 : index
    %c0_194 = arith.constant 0 : index
    %321 = vector.load %arg5[%c2_191, %c2_192, %c0_193, %c0_194] : memref<5x11x7x128xf32, #tpu.memory_space<vmem>>, vector<1x1x7x128xf32>
    %322 = vector.shape_cast %321 : vector<1x1x7x128xf32> to vector<7x128xf32>
    %323 = vector.extract_strided_slice %27 {offsets = [1, 2, 0], sizes = [1, 1, 128], strides = [1, 1, 1]} : vector<5x5x128xf32> to vector<1x1x128xf32>
    %324 = vector.shape_cast %323 : vector<1x1x128xf32> to vector<128xf32>
    %325 = vector.shape_cast %324 : vector<128xf32> to vector<1x128xf32>
    %326 = vector.broadcast %325 : vector<1x128xf32> to vector<7x128xf32>
    %327 = arith.mulf %322, %326 : vector<7x128xf32>
    %328 = arith.addf %320, %327 : vector<7x128xf32>
    %c2_195 = arith.constant 2 : index
    %c3_196 = arith.constant 3 : index
    %c0_197 = arith.constant 0 : index
    %c0_198 = arith.constant 0 : index
    %329 = vector.load %arg5[%c2_195, %c3_196, %c0_197, %c0_198] : memref<5x11x7x128xf32, #tpu.memory_space<vmem>>, vector<1x1x7x128xf32>
    %330 = vector.shape_cast %329 : vector<1x1x7x128xf32> to vector<7x128xf32>
    %331 = vector.extract_strided_slice %27 {offsets = [2, 2, 0], sizes = [1, 1, 128], strides = [1, 1, 1]} : vector<5x5x128xf32> to vector<1x1x128xf32>
    %332 = vector.shape_cast %331 : vector<1x1x128xf32> to vector<128xf32>
    %333 = vector.shape_cast %332 : vector<128xf32> to vector<1x128xf32>
    %334 = vector.broadcast %333 : vector<1x128xf32> to vector<7x128xf32>
    %335 = arith.mulf %330, %334 : vector<7x128xf32>
    %336 = arith.addf %328, %335 : vector<7x128xf32>
    %c2_199 = arith.constant 2 : index
    %c4_200 = arith.constant 4 : index
    %c0_201 = arith.constant 0 : index
    %c0_202 = arith.constant 0 : index
    %337 = vector.load %arg5[%c2_199, %c4_200, %c0_201, %c0_202] : memref<5x11x7x128xf32, #tpu.memory_space<vmem>>, vector<1x1x7x128xf32>
    %338 = vector.shape_cast %337 : vector<1x1x7x128xf32> to vector<7x128xf32>
    %339 = vector.extract_strided_slice %27 {offsets = [3, 2, 0], sizes = [1, 1, 128], strides = [1, 1, 1]} : vector<5x5x128xf32> to vector<1x1x128xf32>
    %340 = vector.shape_cast %339 : vector<1x1x128xf32> to vector<128xf32>
    %341 = vector.shape_cast %340 : vector<128xf32> to vector<1x128xf32>
    %342 = vector.broadcast %341 : vector<1x128xf32> to vector<7x128xf32>
    %343 = arith.mulf %338, %342 : vector<7x128xf32>
    %344 = arith.addf %336, %343 : vector<7x128xf32>
    %c2_203 = arith.constant 2 : index
    %c5_204 = arith.constant 5 : index
    %c0_205 = arith.constant 0 : index
    %c0_206 = arith.constant 0 : index
    %345 = vector.load %arg5[%c2_203, %c5_204, %c0_205, %c0_206] : memref<5x11x7x128xf32, #tpu.memory_space<vmem>>, vector<1x1x7x128xf32>
    %346 = vector.shape_cast %345 : vector<1x1x7x128xf32> to vector<7x128xf32>
    %347 = vector.extract_strided_slice %27 {offsets = [4, 2, 0], sizes = [1, 1, 128], strides = [1, 1, 1]} : vector<5x5x128xf32> to vector<1x1x128xf32>
    %348 = vector.shape_cast %347 : vector<1x1x128xf32> to vector<128xf32>
    %349 = vector.shape_cast %348 : vector<128xf32> to vector<1x128xf32>
    %350 = vector.broadcast %349 : vector<1x128xf32> to vector<7x128xf32>
    %351 = arith.mulf %346, %350 : vector<7x128xf32>
    %352 = arith.addf %344, %351 : vector<7x128xf32>
    %c3_207 = arith.constant 3 : index
    %c1_208 = arith.constant 1 : index
    %c0_209 = arith.constant 0 : index
    %c0_210 = arith.constant 0 : index
    %353 = vector.load %arg5[%c3_207, %c1_208, %c0_209, %c0_210] : memref<5x11x7x128xf32, #tpu.memory_space<vmem>>, vector<1x1x7x128xf32>
    %354 = vector.shape_cast %353 : vector<1x1x7x128xf32> to vector<7x128xf32>
    %355 = vector.extract_strided_slice %27 {offsets = [0, 3, 0], sizes = [1, 1, 128], strides = [1, 1, 1]} : vector<5x5x128xf32> to vector<1x1x128xf32>
    %356 = vector.shape_cast %355 : vector<1x1x128xf32> to vector<128xf32>
    %357 = vector.shape_cast %356 : vector<128xf32> to vector<1x128xf32>
    %358 = vector.broadcast %357 : vector<1x128xf32> to vector<7x128xf32>
    %359 = arith.mulf %354, %358 : vector<7x128xf32>
    %360 = arith.addf %352, %359 : vector<7x128xf32>
    %c3_211 = arith.constant 3 : index
    %c2_212 = arith.constant 2 : index
    %c0_213 = arith.constant 0 : index
    %c0_214 = arith.constant 0 : index
    %361 = vector.load %arg5[%c3_211, %c2_212, %c0_213, %c0_214] : memref<5x11x7x128xf32, #tpu.memory_space<vmem>>, vector<1x1x7x128xf32>
    %362 = vector.shape_cast %361 : vector<1x1x7x128xf32> to vector<7x128xf32>
    %363 = vector.extract_strided_slice %27 {offsets = [1, 3, 0], sizes = [1, 1, 128], strides = [1, 1, 1]} : vector<5x5x128xf32> to vector<1x1x128xf32>
    %364 = vector.shape_cast %363 : vector<1x1x128xf32> to vector<128xf32>
    %365 = vector.shape_cast %364 : vector<128xf32> to vector<1x128xf32>
    %366 = vector.broadcast %365 : vector<1x128xf32> to vector<7x128xf32>
    %367 = arith.mulf %362, %366 : vector<7x128xf32>
    %368 = arith.addf %360, %367 : vector<7x128xf32>
    %c3_215 = arith.constant 3 : index
    %c3_216 = arith.constant 3 : index
    %c0_217 = arith.constant 0 : index
    %c0_218 = arith.constant 0 : index
    %369 = vector.load %arg5[%c3_215, %c3_216, %c0_217, %c0_218] : memref<5x11x7x128xf32, #tpu.memory_space<vmem>>, vector<1x1x7x128xf32>
    %370 = vector.shape_cast %369 : vector<1x1x7x128xf32> to vector<7x128xf32>
    %371 = vector.extract_strided_slice %27 {offsets = [2, 3, 0], sizes = [1, 1, 128], strides = [1, 1, 1]} : vector<5x5x128xf32> to vector<1x1x128xf32>
    %372 = vector.shape_cast %371 : vector<1x1x128xf32> to vector<128xf32>
    %373 = vector.shape_cast %372 : vector<128xf32> to vector<1x128xf32>
    %374 = vector.broadcast %373 : vector<1x128xf32> to vector<7x128xf32>
    %375 = arith.mulf %370, %374 : vector<7x128xf32>
    %376 = arith.addf %368, %375 : vector<7x128xf32>
    %c3_219 = arith.constant 3 : index
    %c4_220 = arith.constant 4 : index
    %c0_221 = arith.constant 0 : index
    %c0_222 = arith.constant 0 : index
    %377 = vector.load %arg5[%c3_219, %c4_220, %c0_221, %c0_222] : memref<5x11x7x128xf32, #tpu.memory_space<vmem>>, vector<1x1x7x128xf32>
    %378 = vector.shape_cast %377 : vector<1x1x7x128xf32> to vector<7x128xf32>
    %379 = vector.extract_strided_slice %27 {offsets = [3, 3, 0], sizes = [1, 1, 128], strides = [1, 1, 1]} : vector<5x5x128xf32> to vector<1x1x128xf32>
    %380 = vector.shape_cast %379 : vector<1x1x128xf32> to vector<128xf32>
    %381 = vector.shape_cast %380 : vector<128xf32> to vector<1x128xf32>
    %382 = vector.broadcast %381 : vector<1x128xf32> to vector<7x128xf32>
    %383 = arith.mulf %378, %382 : vector<7x128xf32>
    %384 = arith.addf %376, %383 : vector<7x128xf32>
    %c3_223 = arith.constant 3 : index
    %c5_224 = arith.constant 5 : index
    %c0_225 = arith.constant 0 : index
    %c0_226 = arith.constant 0 : index
    %385 = vector.load %arg5[%c3_223, %c5_224, %c0_225, %c0_226] : memref<5x11x7x128xf32, #tpu.memory_space<vmem>>, vector<1x1x7x128xf32>
    %386 = vector.shape_cast %385 : vector<1x1x7x128xf32> to vector<7x128xf32>
    %387 = vector.extract_strided_slice %27 {offsets = [4, 3, 0], sizes = [1, 1, 128], strides = [1, 1, 1]} : vector<5x5x128xf32> to vector<1x1x128xf32>
    %388 = vector.shape_cast %387 : vector<1x1x128xf32> to vector<128xf32>
    %389 = vector.shape_cast %388 : vector<128xf32> to vector<1x128xf32>
    %390 = vector.broadcast %389 : vector<1x128xf32> to vector<7x128xf32>
    %391 = arith.mulf %386, %390 : vector<7x128xf32>
    %392 = arith.addf %384, %391 : vector<7x128xf32>
    %c4_227 = arith.constant 4 : index
    %c1_228 = arith.constant 1 : index
    %c0_229 = arith.constant 0 : index
    %c0_230 = arith.constant 0 : index
    %393 = vector.load %arg5[%c4_227, %c1_228, %c0_229, %c0_230] : memref<5x11x7x128xf32, #tpu.memory_space<vmem>>, vector<1x1x7x128xf32>
    %394 = vector.shape_cast %393 : vector<1x1x7x128xf32> to vector<7x128xf32>
    %395 = vector.extract_strided_slice %27 {offsets = [0, 4, 0], sizes = [1, 1, 128], strides = [1, 1, 1]} : vector<5x5x128xf32> to vector<1x1x128xf32>
    %396 = vector.shape_cast %395 : vector<1x1x128xf32> to vector<128xf32>
    %397 = vector.shape_cast %396 : vector<128xf32> to vector<1x128xf32>
    %398 = vector.broadcast %397 : vector<1x128xf32> to vector<7x128xf32>
    %399 = arith.mulf %394, %398 : vector<7x128xf32>
    %400 = arith.addf %392, %399 : vector<7x128xf32>
    %c4_231 = arith.constant 4 : index
    %c2_232 = arith.constant 2 : index
    %c0_233 = arith.constant 0 : index
    %c0_234 = arith.constant 0 : index
    %401 = vector.load %arg5[%c4_231, %c2_232, %c0_233, %c0_234] : memref<5x11x7x128xf32, #tpu.memory_space<vmem>>, vector<1x1x7x128xf32>
    %402 = vector.shape_cast %401 : vector<1x1x7x128xf32> to vector<7x128xf32>
    %403 = vector.extract_strided_slice %27 {offsets = [1, 4, 0], sizes = [1, 1, 128], strides = [1, 1, 1]} : vector<5x5x128xf32> to vector<1x1x128xf32>
    %404 = vector.shape_cast %403 : vector<1x1x128xf32> to vector<128xf32>
    %405 = vector.shape_cast %404 : vector<128xf32> to vector<1x128xf32>
    %406 = vector.broadcast %405 : vector<1x128xf32> to vector<7x128xf32>
    %407 = arith.mulf %402, %406 : vector<7x128xf32>
    %408 = arith.addf %400, %407 : vector<7x128xf32>
    %c4_235 = arith.constant 4 : index
    %c3_236 = arith.constant 3 : index
    %c0_237 = arith.constant 0 : index
    %c0_238 = arith.constant 0 : index
    %409 = vector.load %arg5[%c4_235, %c3_236, %c0_237, %c0_238] : memref<5x11x7x128xf32, #tpu.memory_space<vmem>>, vector<1x1x7x128xf32>
    %410 = vector.shape_cast %409 : vector<1x1x7x128xf32> to vector<7x128xf32>
    %411 = vector.extract_strided_slice %27 {offsets = [2, 4, 0], sizes = [1, 1, 128], strides = [1, 1, 1]} : vector<5x5x128xf32> to vector<1x1x128xf32>
    %412 = vector.shape_cast %411 : vector<1x1x128xf32> to vector<128xf32>
    %413 = vector.shape_cast %412 : vector<128xf32> to vector<1x128xf32>
    %414 = vector.broadcast %413 : vector<1x128xf32> to vector<7x128xf32>
    %415 = arith.mulf %410, %414 : vector<7x128xf32>
    %416 = arith.addf %408, %415 : vector<7x128xf32>
    %c4_239 = arith.constant 4 : index
    %c4_240 = arith.constant 4 : index
    %c0_241 = arith.constant 0 : index
    %c0_242 = arith.constant 0 : index
    %417 = vector.load %arg5[%c4_239, %c4_240, %c0_241, %c0_242] : memref<5x11x7x128xf32, #tpu.memory_space<vmem>>, vector<1x1x7x128xf32>
    %418 = vector.shape_cast %417 : vector<1x1x7x128xf32> to vector<7x128xf32>
    %419 = vector.extract_strided_slice %27 {offsets = [3, 4, 0], sizes = [1, 1, 128], strides = [1, 1, 1]} : vector<5x5x128xf32> to vector<1x1x128xf32>
    %420 = vector.shape_cast %419 : vector<1x1x128xf32> to vector<128xf32>
    %421 = vector.shape_cast %420 : vector<128xf32> to vector<1x128xf32>
    %422 = vector.broadcast %421 : vector<1x128xf32> to vector<7x128xf32>
    %423 = arith.mulf %418, %422 : vector<7x128xf32>
    %424 = arith.addf %416, %423 : vector<7x128xf32>
    %c4_243 = arith.constant 4 : index
    %c5_244 = arith.constant 5 : index
    %c0_245 = arith.constant 0 : index
    %c0_246 = arith.constant 0 : index
    %425 = vector.load %arg5[%c4_243, %c5_244, %c0_245, %c0_246] : memref<5x11x7x128xf32, #tpu.memory_space<vmem>>, vector<1x1x7x128xf32>
    %426 = vector.shape_cast %425 : vector<1x1x7x128xf32> to vector<7x128xf32>
    %427 = vector.extract_strided_slice %27 {offsets = [4, 4, 0], sizes = [1, 1, 128], strides = [1, 1, 1]} : vector<5x5x128xf32> to vector<1x1x128xf32>
    %428 = vector.shape_cast %427 : vector<1x1x128xf32> to vector<128xf32>
    %429 = vector.shape_cast %428 : vector<128xf32> to vector<1x128xf32>
    %430 = vector.broadcast %429 : vector<1x128xf32> to vector<7x128xf32>
    %431 = arith.mulf %426, %430 : vector<7x128xf32>
    %432 = arith.addf %424, %431 : vector<7x128xf32>
    %c0_247 = arith.constant 0 : index
    %c1_248 = arith.constant 1 : index
    %c0_249 = arith.constant 0 : index
    %c0_250 = arith.constant 0 : index
    %433 = vector.load %arg4[%c0_247, %c1_248, %c0_249, %c0_250] : memref<1x7x7x128xf32, #tpu.memory_space<vmem>>, vector<1x1x7x128xf32>
    %434 = vector.shape_cast %433 : vector<1x1x7x128xf32> to vector<7x128xf32>
    %435 = vector.shape_cast %432 : vector<7x128xf32> to vector<1x1x7x128xf32>
    tpu.vector_store %arg4[%c0_247, %c1_248, %c0_249, %c0_250], %435 {strides = array<i32>} : memref<1x7x7x128xf32, #tpu.memory_space<vmem>>, vector<1x1x7x128xf32>,
    %cst_251 = arith.constant 0.000000e+00 : f32
    %436 = vector.broadcast %cst_251 : f32 to vector<7x128xf32>
    %c0_252 = arith.constant 0 : index
    %c2_253 = arith.constant 2 : index
    %c0_254 = arith.constant 0 : index
    %c0_255 = arith.constant 0 : index
    %437 = vector.load %arg5[%c0_252, %c2_253, %c0_254, %c0_255] : memref<5x11x7x128xf32, #tpu.memory_space<vmem>>, vector<1x1x7x128xf32>
    %438 = vector.shape_cast %437 : vector<1x1x7x128xf32> to vector<7x128xf32>
    %439 = vector.extract_strided_slice %27 {offsets = [0, 0, 0], sizes = [1, 1, 128], strides = [1, 1, 1]} : vector<5x5x128xf32> to vector<1x1x128xf32>
    %440 = vector.shape_cast %439 : vector<1x1x128xf32> to vector<128xf32>
    %441 = vector.shape_cast %440 : vector<128xf32> to vector<1x128xf32>
    %442 = vector.broadcast %441 : vector<1x128xf32> to vector<7x128xf32>
    %443 = arith.mulf %438, %442 : vector<7x128xf32>
    %444 = arith.addf %436, %443 : vector<7x128xf32>
    %c0_256 = arith.constant 0 : index
    %c3_257 = arith.constant 3 : index
    %c0_258 = arith.constant 0 : index
    %c0_259 = arith.constant 0 : index
    %445 = vector.load %arg5[%c0_256, %c3_257, %c0_258, %c0_259] : memref<5x11x7x128xf32, #tpu.memory_space<vmem>>, vector<1x1x7x128xf32>
    %446 = vector.shape_cast %445 : vector<1x1x7x128xf32> to vector<7x128xf32>
    %447 = vector.extract_strided_slice %27 {offsets = [1, 0, 0], sizes = [1, 1, 128], strides = [1, 1, 1]} : vector<5x5x128xf32> to vector<1x1x128xf32>
    %448 = vector.shape_cast %447 : vector<1x1x128xf32> to vector<128xf32>
    %449 = vector.shape_cast %448 : vector<128xf32> to vector<1x128xf32>
    %450 = vector.broadcast %449 : vector<1x128xf32> to vector<7x128xf32>
    %451 = arith.mulf %446, %450 : vector<7x128xf32>
    %452 = arith.addf %444, %451 : vector<7x128xf32>
    %c0_260 = arith.constant 0 : index
    %c4_261 = arith.constant 4 : index
    %c0_262 = arith.constant 0 : index
    %c0_263 = arith.constant 0 : index
    %453 = vector.load %arg5[%c0_260, %c4_261, %c0_262, %c0_263] : memref<5x11x7x128xf32, #tpu.memory_space<vmem>>, vector<1x1x7x128xf32>
    %454 = vector.shape_cast %453 : vector<1x1x7x128xf32> to vector<7x128xf32>
    %455 = vector.extract_strided_slice %27 {offsets = [2, 0, 0], sizes = [1, 1, 128], strides = [1, 1, 1]} : vector<5x5x128xf32> to vector<1x1x128xf32>
    %456 = vector.shape_cast %455 : vector<1x1x128xf32> to vector<128xf32>
    %457 = vector.shape_cast %456 : vector<128xf32> to vector<1x128xf32>
    %458 = vector.broadcast %457 : vector<1x128xf32> to vector<7x128xf32>
    %459 = arith.mulf %454, %458 : vector<7x128xf32>
    %460 = arith.addf %452, %459 : vector<7x128xf32>
    %c0_264 = arith.constant 0 : index
    %c5_265 = arith.constant 5 : index
    %c0_266 = arith.constant 0 : index
    %c0_267 = arith.constant 0 : index
    %461 = vector.load %arg5[%c0_264, %c5_265, %c0_266, %c0_267] : memref<5x11x7x128xf32, #tpu.memory_space<vmem>>, vector<1x1x7x128xf32>
    %462 = vector.shape_cast %461 : vector<1x1x7x128xf32> to vector<7x128xf32>
    %463 = vector.extract_strided_slice %27 {offsets = [3, 0, 0], sizes = [1, 1, 128], strides = [1, 1, 1]} : vector<5x5x128xf32> to vector<1x1x128xf32>
    %464 = vector.shape_cast %463 : vector<1x1x128xf32> to vector<128xf32>
    %465 = vector.shape_cast %464 : vector<128xf32> to vector<1x128xf32>
    %466 = vector.broadcast %465 : vector<1x128xf32> to vector<7x128xf32>
    %467 = arith.mulf %462, %466 : vector<7x128xf32>
    %468 = arith.addf %460, %467 : vector<7x128xf32>
    %c0_268 = arith.constant 0 : index
    %c6 = arith.constant 6 : index
    %c0_269 = arith.constant 0 : index
    %c0_270 = arith.constant 0 : index
    %469 = vector.load %arg5[%c0_268, %c6, %c0_269, %c0_270] : memref<5x11x7x128xf32, #tpu.memory_space<vmem>>, vector<1x1x7x128xf32>
    %470 = vector.shape_cast %469 : vector<1x1x7x128xf32> to vector<7x128xf32>
    %471 = vector.extract_strided_slice %27 {offsets = [4, 0, 0], sizes = [1, 1, 128], strides = [1, 1, 1]} : vector<5x5x128xf32> to vector<1x1x128xf32>
    %472 = vector.shape_cast %471 : vector<1x1x128xf32> to vector<128xf32>
    %473 = vector.shape_cast %472 : vector<128xf32> to vector<1x128xf32>
    %474 = vector.broadcast %473 : vector<1x128xf32> to vector<7x128xf32>
    %475 = arith.mulf %470, %474 : vector<7x128xf32>
    %476 = arith.addf %468, %475 : vector<7x128xf32>
    %c1_271 = arith.constant 1 : index
    %c2_272 = arith.constant 2 : index
    %c0_273 = arith.constant 0 : index
    %c0_274 = arith.constant 0 : index
    %477 = vector.load %arg5[%c1_271, %c2_272, %c0_273, %c0_274] : memref<5x11x7x128xf32, #tpu.memory_space<vmem>>, vector<1x1x7x128xf32>
    %478 = vector.shape_cast %477 : vector<1x1x7x128xf32> to vector<7x128xf32>
    %479 = vector.extract_strided_slice %27 {offsets = [0, 1, 0], sizes = [1, 1, 128], strides = [1, 1, 1]} : vector<5x5x128xf32> to vector<1x1x128xf32>
    %480 = vector.shape_cast %479 : vector<1x1x128xf32> to vector<128xf32>
    %481 = vector.shape_cast %480 : vector<128xf32> to vector<1x128xf32>
    %482 = vector.broadcast %481 : vector<1x128xf32> to vector<7x128xf32>
    %483 = arith.mulf %478, %482 : vector<7x128xf32>
    %484 = arith.addf %476, %483 : vector<7x128xf32>
    %c1_275 = arith.constant 1 : index
    %c3_276 = arith.constant 3 : index
    %c0_277 = arith.constant 0 : index
    %c0_278 = arith.constant 0 : index
    %485 = vector.load %arg5[%c1_275, %c3_276, %c0_277, %c0_278] : memref<5x11x7x128xf32, #tpu.memory_space<vmem>>, vector<1x1x7x128xf32>
    %486 = vector.shape_cast %485 : vector<1x1x7x128xf32> to vector<7x128xf32>
    %487 = vector.extract_strided_slice %27 {offsets = [1, 1, 0], sizes = [1, 1, 128], strides = [1, 1, 1]} : vector<5x5x128xf32> to vector<1x1x128xf32>
    %488 = vector.shape_cast %487 : vector<1x1x128xf32> to vector<128xf32>
    %489 = vector.shape_cast %488 : vector<128xf32> to vector<1x128xf32>
    %490 = vector.broadcast %489 : vector<1x128xf32> to vector<7x128xf32>
    %491 = arith.mulf %486, %490 : vector<7x128xf32>
    %492 = arith.addf %484, %491 : vector<7x128xf32>
    %c1_279 = arith.constant 1 : index
    %c4_280 = arith.constant 4 : index
    %c0_281 = arith.constant 0 : index
    %c0_282 = arith.constant 0 : index
    %493 = vector.load %arg5[%c1_279, %c4_280, %c0_281, %c0_282] : memref<5x11x7x128xf32, #tpu.memory_space<vmem>>, vector<1x1x7x128xf32>
    %494 = vector.shape_cast %493 : vector<1x1x7x128xf32> to vector<7x128xf32>
    %495 = vector.extract_strided_slice %27 {offsets = [2, 1, 0], sizes = [1, 1, 128], strides = [1, 1, 1]} : vector<5x5x128xf32> to vector<1x1x128xf32>
    %496 = vector.shape_cast %495 : vector<1x1x128xf32> to vector<128xf32>
    %497 = vector.shape_cast %496 : vector<128xf32> to vector<1x128xf32>
    %498 = vector.broadcast %497 : vector<1x128xf32> to vector<7x128xf32>
    %499 = arith.mulf %494, %498 : vector<7x128xf32>
    %500 = arith.addf %492, %499 : vector<7x128xf32>
    %c1_283 = arith.constant 1 : index
    %c5_284 = arith.constant 5 : index
    %c0_285 = arith.constant 0 : index
    %c0_286 = arith.constant 0 : index
    %501 = vector.load %arg5[%c1_283, %c5_284, %c0_285, %c0_286] : memref<5x11x7x128xf32, #tpu.memory_space<vmem>>, vector<1x1x7x128xf32>
    %502 = vector.shape_cast %501 : vector<1x1x7x128xf32> to vector<7x128xf32>
    %503 = vector.extract_strided_slice %27 {offsets = [3, 1, 0], sizes = [1, 1, 128], strides = [1, 1, 1]} : vector<5x5x128xf32> to vector<1x1x128xf32>
    %504 = vector.shape_cast %503 : vector<1x1x128xf32> to vector<128xf32>
    %505 = vector.shape_cast %504 : vector<128xf32> to vector<1x128xf32>
    %506 = vector.broadcast %505 : vector<1x128xf32> to vector<7x128xf32>
    %507 = arith.mulf %502, %506 : vector<7x128xf32>
    %508 = arith.addf %500, %507 : vector<7x128xf32>
    %c1_287 = arith.constant 1 : index
    %c6_288 = arith.constant 6 : index
    %c0_289 = arith.constant 0 : index
    %c0_290 = arith.constant 0 : index
    %509 = vector.load %arg5[%c1_287, %c6_288, %c0_289, %c0_290] : memref<5x11x7x128xf32, #tpu.memory_space<vmem>>, vector<1x1x7x128xf32>
    %510 = vector.shape_cast %509 : vector<1x1x7x128xf32> to vector<7x128xf32>
    %511 = vector.extract_strided_slice %27 {offsets = [4, 1, 0], sizes = [1, 1, 128], strides = [1, 1, 1]} : vector<5x5x128xf32> to vector<1x1x128xf32>
    %512 = vector.shape_cast %511 : vector<1x1x128xf32> to vector<128xf32>
    %513 = vector.shape_cast %512 : vector<128xf32> to vector<1x128xf32>
    %514 = vector.broadcast %513 : vector<1x128xf32> to vector<7x128xf32>
    %515 = arith.mulf %510, %514 : vector<7x128xf32>
    %516 = arith.addf %508, %515 : vector<7x128xf32>
    %c2_291 = arith.constant 2 : index
    %c2_292 = arith.constant 2 : index
    %c0_293 = arith.constant 0 : index
    %c0_294 = arith.constant 0 : index
    %517 = vector.load %arg5[%c2_291, %c2_292, %c0_293, %c0_294] : memref<5x11x7x128xf32, #tpu.memory_space<vmem>>, vector<1x1x7x128xf32>
    %518 = vector.shape_cast %517 : vector<1x1x7x128xf32> to vector<7x128xf32>
    %519 = vector.extract_strided_slice %27 {offsets = [0, 2, 0], sizes = [1, 1, 128], strides = [1, 1, 1]} : vector<5x5x128xf32> to vector<1x1x128xf32>
    %520 = vector.shape_cast %519 : vector<1x1x128xf32> to vector<128xf32>
    %521 = vector.shape_cast %520 : vector<128xf32> to vector<1x128xf32>
    %522 = vector.broadcast %521 : vector<1x128xf32> to vector<7x128xf32>
    %523 = arith.mulf %518, %522 : vector<7x128xf32>
    %524 = arith.addf %516, %523 : vector<7x128xf32>
    %c2_295 = arith.constant 2 : index
    %c3_296 = arith.constant 3 : index
    %c0_297 = arith.constant 0 : index
    %c0_298 = arith.constant 0 : index
    %525 = vector.load %arg5[%c2_295, %c3_296, %c0_297, %c0_298] : memref<5x11x7x128xf32, #tpu.memory_space<vmem>>, vector<1x1x7x128xf32>
    %526 = vector.shape_cast %525 : vector<1x1x7x128xf32> to vector<7x128xf32>
    %527 = vector.extract_strided_slice %27 {offsets = [1, 2, 0], sizes = [1, 1, 128], strides = [1, 1, 1]} : vector<5x5x128xf32> to vector<1x1x128xf32>
    %528 = vector.shape_cast %527 : vector<1x1x128xf32> to vector<128xf32>
    %529 = vector.shape_cast %528 : vector<128xf32> to vector<1x128xf32>
    %530 = vector.broadcast %529 : vector<1x128xf32> to vector<7x128xf32>
    %531 = arith.mulf %526, %530 : vector<7x128xf32>
    %532 = arith.addf %524, %531 : vector<7x128xf32>
    %c2_299 = arith.constant 2 : index
    %c4_300 = arith.constant 4 : index
    %c0_301 = arith.constant 0 : index
    %c0_302 = arith.constant 0 : index
    %533 = vector.load %arg5[%c2_299, %c4_300, %c0_301, %c0_302] : memref<5x11x7x128xf32, #tpu.memory_space<vmem>>, vector<1x1x7x128xf32>
    %534 = vector.shape_cast %533 : vector<1x1x7x128xf32> to vector<7x128xf32>
    %535 = vector.extract_strided_slice %27 {offsets = [2, 2, 0], sizes = [1, 1, 128], strides = [1, 1, 1]} : vector<5x5x128xf32> to vector<1x1x128xf32>
    %536 = vector.shape_cast %535 : vector<1x1x128xf32> to vector<128xf32>
    %537 = vector.shape_cast %536 : vector<128xf32> to vector<1x128xf32>
    %538 = vector.broadcast %537 : vector<1x128xf32> to vector<7x128xf32>
    %539 = arith.mulf %534, %538 : vector<7x128xf32>
    %540 = arith.addf %532, %539 : vector<7x128xf32>
    %c2_303 = arith.constant 2 : index
    %c5_304 = arith.constant 5 : index
    %c0_305 = arith.constant 0 : index
    %c0_306 = arith.constant 0 : index
    %541 = vector.load %arg5[%c2_303, %c5_304, %c0_305, %c0_306] : memref<5x11x7x128xf32, #tpu.memory_space<vmem>>, vector<1x1x7x128xf32>
    %542 = vector.shape_cast %541 : vector<1x1x7x128xf32> to vector<7x128xf32>
    %543 = vector.extract_strided_slice %27 {offsets = [3, 2, 0], sizes = [1, 1, 128], strides = [1, 1, 1]} : vector<5x5x128xf32> to vector<1x1x128xf32>
    %544 = vector.shape_cast %543 : vector<1x1x128xf32> to vector<128xf32>
    %545 = vector.shape_cast %544 : vector<128xf32> to vector<1x128xf32>
    %546 = vector.broadcast %545 : vector<1x128xf32> to vector<7x128xf32>
    %547 = arith.mulf %542, %546 : vector<7x128xf32>
    %548 = arith.addf %540, %547 : vector<7x128xf32>
    %c2_307 = arith.constant 2 : index
    %c6_308 = arith.constant 6 : index
    %c0_309 = arith.constant 0 : index
    %c0_310 = arith.constant 0 : index
    %549 = vector.load %arg5[%c2_307, %c6_308, %c0_309, %c0_310] : memref<5x11x7x128xf32, #tpu.memory_space<vmem>>, vector<1x1x7x128xf32>
    %550 = vector.shape_cast %549 : vector<1x1x7x128xf32> to vector<7x128xf32>
    %551 = vector.extract_strided_slice %27 {offsets = [4, 2, 0], sizes = [1, 1, 128], strides = [1, 1, 1]} : vector<5x5x128xf32> to vector<1x1x128xf32>
    %552 = vector.shape_cast %551 : vector<1x1x128xf32> to vector<128xf32>
    %553 = vector.shape_cast %552 : vector<128xf32> to vector<1x128xf32>
    %554 = vector.broadcast %553 : vector<1x128xf32> to vector<7x128xf32>
    %555 = arith.mulf %550, %554 : vector<7x128xf32>
    %556 = arith.addf %548, %555 : vector<7x128xf32>
    %c3_311 = arith.constant 3 : index
    %c2_312 = arith.constant 2 : index
    %c0_313 = arith.constant 0 : index
    %c0_314 = arith.constant 0 : index
    %557 = vector.load %arg5[%c3_311, %c2_312, %c0_313, %c0_314] : memref<5x11x7x128xf32, #tpu.memory_space<vmem>>, vector<1x1x7x128xf32>
    %558 = vector.shape_cast %557 : vector<1x1x7x128xf32> to vector<7x128xf32>
    %559 = vector.extract_strided_slice %27 {offsets = [0, 3, 0], sizes = [1, 1, 128], strides = [1, 1, 1]} : vector<5x5x128xf32> to vector<1x1x128xf32>
    %560 = vector.shape_cast %559 : vector<1x1x128xf32> to vector<128xf32>
    %561 = vector.shape_cast %560 : vector<128xf32> to vector<1x128xf32>
    %562 = vector.broadcast %561 : vector<1x128xf32> to vector<7x128xf32>
    %563 = arith.mulf %558, %562 : vector<7x128xf32>
    %564 = arith.addf %556, %563 : vector<7x128xf32>
    %c3_315 = arith.constant 3 : index
    %c3_316 = arith.constant 3 : index
    %c0_317 = arith.constant 0 : index
    %c0_318 = arith.constant 0 : index
    %565 = vector.load %arg5[%c3_315, %c3_316, %c0_317, %c0_318] : memref<5x11x7x128xf32, #tpu.memory_space<vmem>>, vector<1x1x7x128xf32>
    %566 = vector.shape_cast %565 : vector<1x1x7x128xf32> to vector<7x128xf32>
    %567 = vector.extract_strided_slice %27 {offsets = [1, 3, 0], sizes = [1, 1, 128], strides = [1, 1, 1]} : vector<5x5x128xf32> to vector<1x1x128xf32>
    %568 = vector.shape_cast %567 : vector<1x1x128xf32> to vector<128xf32>
    %569 = vector.shape_cast %568 : vector<128xf32> to vector<1x128xf32>
    %570 = vector.broadcast %569 : vector<1x128xf32> to vector<7x128xf32>
    %571 = arith.mulf %566, %570 : vector<7x128xf32>
    %572 = arith.addf %564, %571 : vector<7x128xf32>
    %c3_319 = arith.constant 3 : index
    %c4_320 = arith.constant 4 : index
    %c0_321 = arith.constant 0 : index
    %c0_322 = arith.constant 0 : index
    %573 = vector.load %arg5[%c3_319, %c4_320, %c0_321, %c0_322] : memref<5x11x7x128xf32, #tpu.memory_space<vmem>>, vector<1x1x7x128xf32>
    %574 = vector.shape_cast %573 : vector<1x1x7x128xf32> to vector<7x128xf32>
    %575 = vector.extract_strided_slice %27 {offsets = [2, 3, 0], sizes = [1, 1, 128], strides = [1, 1, 1]} : vector<5x5x128xf32> to vector<1x1x128xf32>
    %576 = vector.shape_cast %575 : vector<1x1x128xf32> to vector<128xf32>
    %577 = vector.shape_cast %576 : vector<128xf32> to vector<1x128xf32>
    %578 = vector.broadcast %577 : vector<1x128xf32> to vector<7x128xf32>
    %579 = arith.mulf %574, %578 : vector<7x128xf32>
    %580 = arith.addf %572, %579 : vector<7x128xf32>
    %c3_323 = arith.constant 3 : index
    %c5_324 = arith.constant 5 : index
    %c0_325 = arith.constant 0 : index
    %c0_326 = arith.constant 0 : index
    %581 = vector.load %arg5[%c3_323, %c5_324, %c0_325, %c0_326] : memref<5x11x7x128xf32, #tpu.memory_space<vmem>>, vector<1x1x7x128xf32>
    %582 = vector.shape_cast %581 : vector<1x1x7x128xf32> to vector<7x128xf32>
    %583 = vector.extract_strided_slice %27 {offsets = [3, 3, 0], sizes = [1, 1, 128], strides = [1, 1, 1]} : vector<5x5x128xf32> to vector<1x1x128xf32>
    %584 = vector.shape_cast %583 : vector<1x1x128xf32> to vector<128xf32>
    %585 = vector.shape_cast %584 : vector<128xf32> to vector<1x128xf32>
    %586 = vector.broadcast %585 : vector<1x128xf32> to vector<7x128xf32>
    %587 = arith.mulf %582, %586 : vector<7x128xf32>
    %588 = arith.addf %580, %587 : vector<7x128xf32>
    %c3_327 = arith.constant 3 : index
    %c6_328 = arith.constant 6 : index
    %c0_329 = arith.constant 0 : index
    %c0_330 = arith.constant 0 : index
    %589 = vector.load %arg5[%c3_327, %c6_328, %c0_329, %c0_330] : memref<5x11x7x128xf32, #tpu.memory_space<vmem>>, vector<1x1x7x128xf32>
    %590 = vector.shape_cast %589 : vector<1x1x7x128xf32> to vector<7x128xf32>
    %591 = vector.extract_strided_slice %27 {offsets = [4, 3, 0], sizes = [1, 1, 128], strides = [1, 1, 1]} : vector<5x5x128xf32> to vector<1x1x128xf32>
    %592 = vector.shape_cast %591 : vector<1x1x128xf32> to vector<128xf32>
    %593 = vector.shape_cast %592 : vector<128xf32> to vector<1x128xf32>
    %594 = vector.broadcast %593 : vector<1x128xf32> to vector<7x128xf32>
    %595 = arith.mulf %590, %594 : vector<7x128xf32>
    %596 = arith.addf %588, %595 : vector<7x128xf32>
    %c4_331 = arith.constant 4 : index
    %c2_332 = arith.constant 2 : index
    %c0_333 = arith.constant 0 : index
    %c0_334 = arith.constant 0 : index
    %597 = vector.load %arg5[%c4_331, %c2_332, %c0_333, %c0_334] : memref<5x11x7x128xf32, #tpu.memory_space<vmem>>, vector<1x1x7x128xf32>
    %598 = vector.shape_cast %597 : vector<1x1x7x128xf32> to vector<7x128xf32>
    %599 = vector.extract_strided_slice %27 {offsets = [0, 4, 0], sizes = [1, 1, 128], strides = [1, 1, 1]} : vector<5x5x128xf32> to vector<1x1x128xf32>
    %600 = vector.shape_cast %599 : vector<1x1x128xf32> to vector<128xf32>
    %601 = vector.shape_cast %600 : vector<128xf32> to vector<1x128xf32>
    %602 = vector.broadcast %601 : vector<1x128xf32> to vector<7x128xf32>
    %603 = arith.mulf %598, %602 : vector<7x128xf32>
    %604 = arith.addf %596, %603 : vector<7x128xf32>
    %c4_335 = arith.constant 4 : index
    %c3_336 = arith.constant 3 : index
    %c0_337 = arith.constant 0 : index
    %c0_338 = arith.constant 0 : index
    %605 = vector.load %arg5[%c4_335, %c3_336, %c0_337, %c0_338] : memref<5x11x7x128xf32, #tpu.memory_space<vmem>>, vector<1x1x7x128xf32>
    %606 = vector.shape_cast %605 : vector<1x1x7x128xf32> to vector<7x128xf32>
    %607 = vector.extract_strided_slice %27 {offsets = [1, 4, 0], sizes = [1, 1, 128], strides = [1, 1, 1]} : vector<5x5x128xf32> to vector<1x1x128xf32>
    %608 = vector.shape_cast %607 : vector<1x1x128xf32> to vector<128xf32>
    %609 = vector.shape_cast %608 : vector<128xf32> to vector<1x128xf32>
    %610 = vector.broadcast %609 : vector<1x128xf32> to vector<7x128xf32>
    %611 = arith.mulf %606, %610 : vector<7x128xf32>
    %612 = arith.addf %604, %611 : vector<7x128xf32>
    %c4_339 = arith.constant 4 : index
    %c4_340 = arith.constant 4 : index
    %c0_341 = arith.constant 0 : index
    %c0_342 = arith.constant 0 : index
    %613 = vector.load %arg5[%c4_339, %c4_340, %c0_341, %c0_342] : memref<5x11x7x128xf32, #tpu.memory_space<vmem>>, vector<1x1x7x128xf32>
    %614 = vector.shape_cast %613 : vector<1x1x7x128xf32> to vector<7x128xf32>
    %615 = vector.extract_strided_slice %27 {offsets = [2, 4, 0], sizes = [1, 1, 128], strides = [1, 1, 1]} : vector<5x5x128xf32> to vector<1x1x128xf32>
    %616 = vector.shape_cast %615 : vector<1x1x128xf32> to vector<128xf32>
    %617 = vector.shape_cast %616 : vector<128xf32> to vector<1x128xf32>
    %618 = vector.broadcast %617 : vector<1x128xf32> to vector<7x128xf32>
    %619 = arith.mulf %614, %618 : vector<7x128xf32>
    %620 = arith.addf %612, %619 : vector<7x128xf32>
    %c4_343 = arith.constant 4 : index
    %c5_344 = arith.constant 5 : index
    %c0_345 = arith.constant 0 : index
    %c0_346 = arith.constant 0 : index
    %621 = vector.load %arg5[%c4_343, %c5_344, %c0_345, %c0_346] : memref<5x11x7x128xf32, #tpu.memory_space<vmem>>, vector<1x1x7x128xf32>
    %622 = vector.shape_cast %621 : vector<1x1x7x128xf32> to vector<7x128xf32>
    %623 = vector.extract_strided_slice %27 {offsets = [3, 4, 0], sizes = [1, 1, 128], strides = [1, 1, 1]} : vector<5x5x128xf32> to vector<1x1x128xf32>
    %624 = vector.shape_cast %623 : vector<1x1x128xf32> to vector<128xf32>
    %625 = vector.shape_cast %624 : vector<128xf32> to vector<1x128xf32>
    %626 = vector.broadcast %625 : vector<1x128xf32> to vector<7x128xf32>
    %627 = arith.mulf %622, %626 : vector<7x128xf32>
    %628 = arith.addf %620, %627 : vector<7x128xf32>
    %c4_347 = arith.constant 4 : index
    %c6_348 = arith.constant 6 : index
    %c0_349 = arith.constant 0 : index
    %c0_350 = arith.constant 0 : index
    %629 = vector.load %arg5[%c4_347, %c6_348, %c0_349, %c0_350] : memref<5x11x7x128xf32, #tpu.memory_space<vmem>>, vector<1x1x7x128xf32>
    %630 = vector.shape_cast %629 : vector<1x1x7x128xf32> to vector<7x128xf32>
    %631 = vector.extract_strided_slice %27 {offsets = [4, 4, 0], sizes = [1, 1, 128], strides = [1, 1, 1]} : vector<5x5x128xf32> to vector<1x1x128xf32>
    %632 = vector.shape_cast %631 : vector<1x1x128xf32> to vector<128xf32>
    %633 = vector.shape_cast %632 : vector<128xf32> to vector<1x128xf32>
    %634 = vector.broadcast %633 : vector<1x128xf32> to vector<7x128xf32>
    %635 = arith.mulf %630, %634 : vector<7x128xf32>
    %636 = arith.addf %628, %635 : vector<7x128xf32>
    %c0_351 = arith.constant 0 : index
    %c2_352 = arith.constant 2 : index
    %c0_353 = arith.constant 0 : index
    %c0_354 = arith.constant 0 : index
    %637 = vector.load %arg4[%c0_351, %c2_352, %c0_353, %c0_354] : memref<1x7x7x128xf32, #tpu.memory_space<vmem>>, vector<1x1x7x128xf32>
    %638 = vector.shape_cast %637 : vector<1x1x7x128xf32> to vector<7x128xf32>
    %639 = vector.shape_cast %636 : vector<7x128xf32> to vector<1x1x7x128xf32>
    tpu.vector_store %arg4[%c0_351, %c2_352, %c0_353, %c0_354], %639 {strides = array<i32>} : memref<1x7x7x128xf32, #tpu.memory_space<vmem>>, vector<1x1x7x128xf32>,
    %cst_355 = arith.constant 0.000000e+00 : f32
    %640 = vector.broadcast %cst_355 : f32 to vector<7x128xf32>
    %c0_356 = arith.constant 0 : index
    %c3_357 = arith.constant 3 : index
    %c0_358 = arith.constant 0 : index
    %c0_359 = arith.constant 0 : index
    %641 = vector.load %arg5[%c0_356, %c3_357, %c0_358, %c0_359] : memref<5x11x7x128xf32, #tpu.memory_space<vmem>>, vector<1x1x7x128xf32>
    %642 = vector.shape_cast %641 : vector<1x1x7x128xf32> to vector<7x128xf32>
    %643 = vector.extract_strided_slice %27 {offsets = [0, 0, 0], sizes = [1, 1, 128], strides = [1, 1, 1]} : vector<5x5x128xf32> to vector<1x1x128xf32>
    %644 = vector.shape_cast %643 : vector<1x1x128xf32> to vector<128xf32>
    %645 = vector.shape_cast %644 : vector<128xf32> to vector<1x128xf32>
    %646 = vector.broadcast %645 : vector<1x128xf32> to vector<7x128xf32>
    %647 = arith.mulf %642, %646 : vector<7x128xf32>
    %648 = arith.addf %640, %647 : vector<7x128xf32>
    %c0_360 = arith.constant 0 : index
    %c4_361 = arith.constant 4 : index
    %c0_362 = arith.constant 0 : index
    %c0_363 = arith.constant 0 : index
    %649 = vector.load %arg5[%c0_360, %c4_361, %c0_362, %c0_363] : memref<5x11x7x128xf32, #tpu.memory_space<vmem>>, vector<1x1x7x128xf32>
    %650 = vector.shape_cast %649 : vector<1x1x7x128xf32> to vector<7x128xf32>
    %651 = vector.extract_strided_slice %27 {offsets = [1, 0, 0], sizes = [1, 1, 128], strides = [1, 1, 1]} : vector<5x5x128xf32> to vector<1x1x128xf32>
    %652 = vector.shape_cast %651 : vector<1x1x128xf32> to vector<128xf32>
    %653 = vector.shape_cast %652 : vector<128xf32> to vector<1x128xf32>
    %654 = vector.broadcast %653 : vector<1x128xf32> to vector<7x128xf32>
    %655 = arith.mulf %650, %654 : vector<7x128xf32>
    %656 = arith.addf %648, %655 : vector<7x128xf32>
    %c0_364 = arith.constant 0 : index
    %c5_365 = arith.constant 5 : index
    %c0_366 = arith.constant 0 : index
    %c0_367 = arith.constant 0 : index
    %657 = vector.load %arg5[%c0_364, %c5_365, %c0_366, %c0_367] : memref<5x11x7x128xf32, #tpu.memory_space<vmem>>, vector<1x1x7x128xf32>
    %658 = vector.shape_cast %657 : vector<1x1x7x128xf32> to vector<7x128xf32>
    %659 = vector.extract_strided_slice %27 {offsets = [2, 0, 0], sizes = [1, 1, 128], strides = [1, 1, 1]} : vector<5x5x128xf32> to vector<1x1x128xf32>
    %660 = vector.shape_cast %659 : vector<1x1x128xf32> to vector<128xf32>
    %661 = vector.shape_cast %660 : vector<128xf32> to vector<1x128xf32>
    %662 = vector.broadcast %661 : vector<1x128xf32> to vector<7x128xf32>
    %663 = arith.mulf %658, %662 : vector<7x128xf32>
    %664 = arith.addf %656, %663 : vector<7x128xf32>
    %c0_368 = arith.constant 0 : index
    %c6_369 = arith.constant 6 : index
    %c0_370 = arith.constant 0 : index
    %c0_371 = arith.constant 0 : index
    %665 = vector.load %arg5[%c0_368, %c6_369, %c0_370, %c0_371] : memref<5x11x7x128xf32, #tpu.memory_space<vmem>>, vector<1x1x7x128xf32>
    %666 = vector.shape_cast %665 : vector<1x1x7x128xf32> to vector<7x128xf32>
    %667 = vector.extract_strided_slice %27 {offsets = [3, 0, 0], sizes = [1, 1, 128], strides = [1, 1, 1]} : vector<5x5x128xf32> to vector<1x1x128xf32>
    %668 = vector.shape_cast %667 : vector<1x1x128xf32> to vector<128xf32>
    %669 = vector.shape_cast %668 : vector<128xf32> to vector<1x128xf32>
    %670 = vector.broadcast %669 : vector<1x128xf32> to vector<7x128xf32>
    %671 = arith.mulf %666, %670 : vector<7x128xf32>
    %672 = arith.addf %664, %671 : vector<7x128xf32>
    %c0_372 = arith.constant 0 : index
    %c7 = arith.constant 7 : index
    %c0_373 = arith.constant 0 : index
    %c0_374 = arith.constant 0 : index
    %673 = vector.load %arg5[%c0_372, %c7, %c0_373, %c0_374] : memref<5x11x7x128xf32, #tpu.memory_space<vmem>>, vector<1x1x7x128xf32>
    %674 = vector.shape_cast %673 : vector<1x1x7x128xf32> to vector<7x128xf32>
    %675 = vector.extract_strided_slice %27 {offsets = [4, 0, 0], sizes = [1, 1, 128], strides = [1, 1, 1]} : vector<5x5x128xf32> to vector<1x1x128xf32>
    %676 = vector.shape_cast %675 : vector<1x1x128xf32> to vector<128xf32>
    %677 = vector.shape_cast %676 : vector<128xf32> to vector<1x128xf32>
    %678 = vector.broadcast %677 : vector<1x128xf32> to vector<7x128xf32>
    %679 = arith.mulf %674, %678 : vector<7x128xf32>
    %680 = arith.addf %672, %679 : vector<7x128xf32>
    %c1_375 = arith.constant 1 : index
    %c3_376 = arith.constant 3 : index
    %c0_377 = arith.constant 0 : index
    %c0_378 = arith.constant 0 : index
    %681 = vector.load %arg5[%c1_375, %c3_376, %c0_377, %c0_378] : memref<5x11x7x128xf32, #tpu.memory_space<vmem>>, vector<1x1x7x128xf32>
    %682 = vector.shape_cast %681 : vector<1x1x7x128xf32> to vector<7x128xf32>
    %683 = vector.extract_strided_slice %27 {offsets = [0, 1, 0], sizes = [1, 1, 128], strides = [1, 1, 1]} : vector<5x5x128xf32> to vector<1x1x128xf32>
    %684 = vector.shape_cast %683 : vector<1x1x128xf32> to vector<128xf32>
    %685 = vector.shape_cast %684 : vector<128xf32> to vector<1x128xf32>
    %686 = vector.broadcast %685 : vector<1x128xf32> to vector<7x128xf32>
    %687 = arith.mulf %682, %686 : vector<7x128xf32>
    %688 = arith.addf %680, %687 : vector<7x128xf32>
    %c1_379 = arith.constant 1 : index
    %c4_380 = arith.constant 4 : index
    %c0_381 = arith.constant 0 : index
    %c0_382 = arith.constant 0 : index
    %689 = vector.load %arg5[%c1_379, %c4_380, %c0_381, %c0_382] : memref<5x11x7x128xf32, #tpu.memory_space<vmem>>, vector<1x1x7x128xf32>
    %690 = vector.shape_cast %689 : vector<1x1x7x128xf32> to vector<7x128xf32>
    %691 = vector.extract_strided_slice %27 {offsets = [1, 1, 0], sizes = [1, 1, 128], strides = [1, 1, 1]} : vector<5x5x128xf32> to vector<1x1x128xf32>
    %692 = vector.shape_cast %691 : vector<1x1x128xf32> to vector<128xf32>
    %693 = vector.shape_cast %692 : vector<128xf32> to vector<1x128xf32>
    %694 = vector.broadcast %693 : vector<1x128xf32> to vector<7x128xf32>
    %695 = arith.mulf %690, %694 : vector<7x128xf32>
    %696 = arith.addf %688, %695 : vector<7x128xf32>
    %c1_383 = arith.constant 1 : index
    %c5_384 = arith.constant 5 : index
    %c0_385 = arith.constant 0 : index
    %c0_386 = arith.constant 0 : index
    %697 = vector.load %arg5[%c1_383, %c5_384, %c0_385, %c0_386] : memref<5x11x7x128xf32, #tpu.memory_space<vmem>>, vector<1x1x7x128xf32>
    %698 = vector.shape_cast %697 : vector<1x1x7x128xf32> to vector<7x128xf32>
    %699 = vector.extract_strided_slice %27 {offsets = [2, 1, 0], sizes = [1, 1, 128], strides = [1, 1, 1]} : vector<5x5x128xf32> to vector<1x1x128xf32>
    %700 = vector.shape_cast %699 : vector<1x1x128xf32> to vector<128xf32>
    %701 = vector.shape_cast %700 : vector<128xf32> to vector<1x128xf32>
    %702 = vector.broadcast %701 : vector<1x128xf32> to vector<7x128xf32>
    %703 = arith.mulf %698, %702 : vector<7x128xf32>
    %704 = arith.addf %696, %703 : vector<7x128xf32>
    %c1_387 = arith.constant 1 : index
    %c6_388 = arith.constant 6 : index
    %c0_389 = arith.constant 0 : index
    %c0_390 = arith.constant 0 : index
    %705 = vector.load %arg5[%c1_387, %c6_388, %c0_389, %c0_390] : memref<5x11x7x128xf32, #tpu.memory_space<vmem>>, vector<1x1x7x128xf32>
    %706 = vector.shape_cast %705 : vector<1x1x7x128xf32> to vector<7x128xf32>
    %707 = vector.extract_strided_slice %27 {offsets = [3, 1, 0], sizes = [1, 1, 128], strides = [1, 1, 1]} : vector<5x5x128xf32> to vector<1x1x128xf32>
    %708 = vector.shape_cast %707 : vector<1x1x128xf32> to vector<128xf32>
    %709 = vector.shape_cast %708 : vector<128xf32> to vector<1x128xf32>
    %710 = vector.broadcast %709 : vector<1x128xf32> to vector<7x128xf32>
    %711 = arith.mulf %706, %710 : vector<7x128xf32>
    %712 = arith.addf %704, %711 : vector<7x128xf32>
    %c1_391 = arith.constant 1 : index
    %c7_392 = arith.constant 7 : index
    %c0_393 = arith.constant 0 : index
    %c0_394 = arith.constant 0 : index
    %713 = vector.load %arg5[%c1_391, %c7_392, %c0_393, %c0_394] : memref<5x11x7x128xf32, #tpu.memory_space<vmem>>, vector<1x1x7x128xf32>
    %714 = vector.shape_cast %713 : vector<1x1x7x128xf32> to vector<7x128xf32>
    %715 = vector.extract_strided_slice %27 {offsets = [4, 1, 0], sizes = [1, 1, 128], strides = [1, 1, 1]} : vector<5x5x128xf32> to vector<1x1x128xf32>
    %716 = vector.shape_cast %715 : vector<1x1x128xf32> to vector<128xf32>
    %717 = vector.shape_cast %716 : vector<128xf32> to vector<1x128xf32>
    %718 = vector.broadcast %717 : vector<1x128xf32> to vector<7x128xf32>
    %719 = arith.mulf %714, %718 : vector<7x128xf32>
    %720 = arith.addf %712, %719 : vector<7x128xf32>
    %c2_395 = arith.constant 2 : index
    %c3_396 = arith.constant 3 : index
    %c0_397 = arith.constant 0 : index
    %c0_398 = arith.constant 0 : index
    %721 = vector.load %arg5[%c2_395, %c3_396, %c0_397, %c0_398] : memref<5x11x7x128xf32, #tpu.memory_space<vmem>>, vector<1x1x7x128xf32>
    %722 = vector.shape_cast %721 : vector<1x1x7x128xf32> to vector<7x128xf32>
    %723 = vector.extract_strided_slice %27 {offsets = [0, 2, 0], sizes = [1, 1, 128], strides = [1, 1, 1]} : vector<5x5x128xf32> to vector<1x1x128xf32>
    %724 = vector.shape_cast %723 : vector<1x1x128xf32> to vector<128xf32>
    %725 = vector.shape_cast %724 : vector<128xf32> to vector<1x128xf32>
    %726 = vector.broadcast %725 : vector<1x128xf32> to vector<7x128xf32>
    %727 = arith.mulf %722, %726 : vector<7x128xf32>
    %728 = arith.addf %720, %727 : vector<7x128xf32>
    %c2_399 = arith.constant 2 : index
    %c4_400 = arith.constant 4 : index
    %c0_401 = arith.constant 0 : index
    %c0_402 = arith.constant 0 : index
    %729 = vector.load %arg5[%c2_399, %c4_400, %c0_401, %c0_402] : memref<5x11x7x128xf32, #tpu.memory_space<vmem>>, vector<1x1x7x128xf32>
    %730 = vector.shape_cast %729 : vector<1x1x7x128xf32> to vector<7x128xf32>
    %731 = vector.extract_strided_slice %27 {offsets = [1, 2, 0], sizes = [1, 1, 128], strides = [1, 1, 1]} : vector<5x5x128xf32> to vector<1x1x128xf32>
    %732 = vector.shape_cast %731 : vector<1x1x128xf32> to vector<128xf32>
    %733 = vector.shape_cast %732 : vector<128xf32> to vector<1x128xf32>
    %734 = vector.broadcast %733 : vector<1x128xf32> to vector<7x128xf32>
    %735 = arith.mulf %730, %734 : vector<7x128xf32>
    %736 = arith.addf %728, %735 : vector<7x128xf32>
    %c2_403 = arith.constant 2 : index
    %c5_404 = arith.constant 5 : index
    %c0_405 = arith.constant 0 : index
    %c0_406 = arith.constant 0 : index
    %737 = vector.load %arg5[%c2_403, %c5_404, %c0_405, %c0_406] : memref<5x11x7x128xf32, #tpu.memory_space<vmem>>, vector<1x1x7x128xf32>
    %738 = vector.shape_cast %737 : vector<1x1x7x128xf32> to vector<7x128xf32>
    %739 = vector.extract_strided_slice %27 {offsets = [2, 2, 0], sizes = [1, 1, 128], strides = [1, 1, 1]} : vector<5x5x128xf32> to vector<1x1x128xf32>
    %740 = vector.shape_cast %739 : vector<1x1x128xf32> to vector<128xf32>
    %741 = vector.shape_cast %740 : vector<128xf32> to vector<1x128xf32>
    %742 = vector.broadcast %741 : vector<1x128xf32> to vector<7x128xf32>
    %743 = arith.mulf %738, %742 : vector<7x128xf32>
    %744 = arith.addf %736, %743 : vector<7x128xf32>
    %c2_407 = arith.constant 2 : index
    %c6_408 = arith.constant 6 : index
    %c0_409 = arith.constant 0 : index
    %c0_410 = arith.constant 0 : index
    %745 = vector.load %arg5[%c2_407, %c6_408, %c0_409, %c0_410] : memref<5x11x7x128xf32, #tpu.memory_space<vmem>>, vector<1x1x7x128xf32>
    %746 = vector.shape_cast %745 : vector<1x1x7x128xf32> to vector<7x128xf32>
    %747 = vector.extract_strided_slice %27 {offsets = [3, 2, 0], sizes = [1, 1, 128], strides = [1, 1, 1]} : vector<5x5x128xf32> to vector<1x1x128xf32>
    %748 = vector.shape_cast %747 : vector<1x1x128xf32> to vector<128xf32>
    %749 = vector.shape_cast %748 : vector<128xf32> to vector<1x128xf32>
    %750 = vector.broadcast %749 : vector<1x128xf32> to vector<7x128xf32>
    %751 = arith.mulf %746, %750 : vector<7x128xf32>
    %752 = arith.addf %744, %751 : vector<7x128xf32>
    %c2_411 = arith.constant 2 : index
    %c7_412 = arith.constant 7 : index
    %c0_413 = arith.constant 0 : index
    %c0_414 = arith.constant 0 : index
    %753 = vector.load %arg5[%c2_411, %c7_412, %c0_413, %c0_414] : memref<5x11x7x128xf32, #tpu.memory_space<vmem>>, vector<1x1x7x128xf32>
    %754 = vector.shape_cast %753 : vector<1x1x7x128xf32> to vector<7x128xf32>
    %755 = vector.extract_strided_slice %27 {offsets = [4, 2, 0], sizes = [1, 1, 128], strides = [1, 1, 1]} : vector<5x5x128xf32> to vector<1x1x128xf32>
    %756 = vector.shape_cast %755 : vector<1x1x128xf32> to vector<128xf32>
    %757 = vector.shape_cast %756 : vector<128xf32> to vector<1x128xf32>
    %758 = vector.broadcast %757 : vector<1x128xf32> to vector<7x128xf32>
    %759 = arith.mulf %754, %758 : vector<7x128xf32>
    %760 = arith.addf %752, %759 : vector<7x128xf32>
    %c3_415 = arith.constant 3 : index
    %c3_416 = arith.constant 3 : index
    %c0_417 = arith.constant 0 : index
    %c0_418 = arith.constant 0 : index
    %761 = vector.load %arg5[%c3_415, %c3_416, %c0_417, %c0_418] : memref<5x11x7x128xf32, #tpu.memory_space<vmem>>, vector<1x1x7x128xf32>
    %762 = vector.shape_cast %761 : vector<1x1x7x128xf32> to vector<7x128xf32>
    %763 = vector.extract_strided_slice %27 {offsets = [0, 3, 0], sizes = [1, 1, 128], strides = [1, 1, 1]} : vector<5x5x128xf32> to vector<1x1x128xf32>
    %764 = vector.shape_cast %763 : vector<1x1x128xf32> to vector<128xf32>
    %765 = vector.shape_cast %764 : vector<128xf32> to vector<1x128xf32>
    %766 = vector.broadcast %765 : vector<1x128xf32> to vector<7x128xf32>
    %767 = arith.mulf %762, %766 : vector<7x128xf32>
    %768 = arith.addf %760, %767 : vector<7x128xf32>
    %c3_419 = arith.constant 3 : index
    %c4_420 = arith.constant 4 : index
    %c0_421 = arith.constant 0 : index
    %c0_422 = arith.constant 0 : index
    %769 = vector.load %arg5[%c3_419, %c4_420, %c0_421, %c0_422] : memref<5x11x7x128xf32, #tpu.memory_space<vmem>>, vector<1x1x7x128xf32>
    %770 = vector.shape_cast %769 : vector<1x1x7x128xf32> to vector<7x128xf32>
    %771 = vector.extract_strided_slice %27 {offsets = [1, 3, 0], sizes = [1, 1, 128], strides = [1, 1, 1]} : vector<5x5x128xf32> to vector<1x1x128xf32>
    %772 = vector.shape_cast %771 : vector<1x1x128xf32> to vector<128xf32>
    %773 = vector.shape_cast %772 : vector<128xf32> to vector<1x128xf32>
    %774 = vector.broadcast %773 : vector<1x128xf32> to vector<7x128xf32>
    %775 = arith.mulf %770, %774 : vector<7x128xf32>
    %776 = arith.addf %768, %775 : vector<7x128xf32>
    %c3_423 = arith.constant 3 : index
    %c5_424 = arith.constant 5 : index
    %c0_425 = arith.constant 0 : index
    %c0_426 = arith.constant 0 : index
    %777 = vector.load %arg5[%c3_423, %c5_424, %c0_425, %c0_426] : memref<5x11x7x128xf32, #tpu.memory_space<vmem>>, vector<1x1x7x128xf32>
    %778 = vector.shape_cast %777 : vector<1x1x7x128xf32> to vector<7x128xf32>
    %779 = vector.extract_strided_slice %27 {offsets = [2, 3, 0], sizes = [1, 1, 128], strides = [1, 1, 1]} : vector<5x5x128xf32> to vector<1x1x128xf32>
    %780 = vector.shape_cast %779 : vector<1x1x128xf32> to vector<128xf32>
    %781 = vector.shape_cast %780 : vector<128xf32> to vector<1x128xf32>
    %782 = vector.broadcast %781 : vector<1x128xf32> to vector<7x128xf32>
    %783 = arith.mulf %778, %782 : vector<7x128xf32>
    %784 = arith.addf %776, %783 : vector<7x128xf32>
    %c3_427 = arith.constant 3 : index
    %c6_428 = arith.constant 6 : index
    %c0_429 = arith.constant 0 : index
    %c0_430 = arith.constant 0 : index
    %785 = vector.load %arg5[%c3_427, %c6_428, %c0_429, %c0_430] : memref<5x11x7x128xf32, #tpu.memory_space<vmem>>, vector<1x1x7x128xf32>
    %786 = vector.shape_cast %785 : vector<1x1x7x128xf32> to vector<7x128xf32>
    %787 = vector.extract_strided_slice %27 {offsets = [3, 3, 0], sizes = [1, 1, 128], strides = [1, 1, 1]} : vector<5x5x128xf32> to vector<1x1x128xf32>
    %788 = vector.shape_cast %787 : vector<1x1x128xf32> to vector<128xf32>
    %789 = vector.shape_cast %788 : vector<128xf32> to vector<1x128xf32>
    %790 = vector.broadcast %789 : vector<1x128xf32> to vector<7x128xf32>
    %791 = arith.mulf %786, %790 : vector<7x128xf32>
    %792 = arith.addf %784, %791 : vector<7x128xf32>
    %c3_431 = arith.constant 3 : index
    %c7_432 = arith.constant 7 : index
    %c0_433 = arith.constant 0 : index
    %c0_434 = arith.constant 0 : index
    %793 = vector.load %arg5[%c3_431, %c7_432, %c0_433, %c0_434] : memref<5x11x7x128xf32, #tpu.memory_space<vmem>>, vector<1x1x7x128xf32>
    %794 = vector.shape_cast %793 : vector<1x1x7x128xf32> to vector<7x128xf32>
    %795 = vector.extract_strided_slice %27 {offsets = [4, 3, 0], sizes = [1, 1, 128], strides = [1, 1, 1]} : vector<5x5x128xf32> to vector<1x1x128xf32>
    %796 = vector.shape_cast %795 : vector<1x1x128xf32> to vector<128xf32>
    %797 = vector.shape_cast %796 : vector<128xf32> to vector<1x128xf32>
    %798 = vector.broadcast %797 : vector<1x128xf32> to vector<7x128xf32>
    %799 = arith.mulf %794, %798 : vector<7x128xf32>
    %800 = arith.addf %792, %799 : vector<7x128xf32>
    %c4_435 = arith.constant 4 : index
    %c3_436 = arith.constant 3 : index
    %c0_437 = arith.constant 0 : index
    %c0_438 = arith.constant 0 : index
    %801 = vector.load %arg5[%c4_435, %c3_436, %c0_437, %c0_438] : memref<5x11x7x128xf32, #tpu.memory_space<vmem>>, vector<1x1x7x128xf32>
    %802 = vector.shape_cast %801 : vector<1x1x7x128xf32> to vector<7x128xf32>
    %803 = vector.extract_strided_slice %27 {offsets = [0, 4, 0], sizes = [1, 1, 128], strides = [1, 1, 1]} : vector<5x5x128xf32> to vector<1x1x128xf32>
    %804 = vector.shape_cast %803 : vector<1x1x128xf32> to vector<128xf32>
    %805 = vector.shape_cast %804 : vector<128xf32> to vector<1x128xf32>
    %806 = vector.broadcast %805 : vector<1x128xf32> to vector<7x128xf32>
    %807 = arith.mulf %802, %806 : vector<7x128xf32>
    %808 = arith.addf %800, %807 : vector<7x128xf32>
    %c4_439 = arith.constant 4 : index
    %c4_440 = arith.constant 4 : index
    %c0_441 = arith.constant 0 : index
    %c0_442 = arith.constant 0 : index
    %809 = vector.load %arg5[%c4_439, %c4_440, %c0_441, %c0_442] : memref<5x11x7x128xf32, #tpu.memory_space<vmem>>, vector<1x1x7x128xf32>
    %810 = vector.shape_cast %809 : vector<1x1x7x128xf32> to vector<7x128xf32>
    %811 = vector.extract_strided_slice %27 {offsets = [1, 4, 0], sizes = [1, 1, 128], strides = [1, 1, 1]} : vector<5x5x128xf32> to vector<1x1x128xf32>
    %812 = vector.shape_cast %811 : vector<1x1x128xf32> to vector<128xf32>
    %813 = vector.shape_cast %812 : vector<128xf32> to vector<1x128xf32>
    %814 = vector.broadcast %813 : vector<1x128xf32> to vector<7x128xf32>
    %815 = arith.mulf %810, %814 : vector<7x128xf32>
    %816 = arith.addf %808, %815 : vector<7x128xf32>
    %c4_443 = arith.constant 4 : index
    %c5_444 = arith.constant 5 : index
    %c0_445 = arith.constant 0 : index
    %c0_446 = arith.constant 0 : index
    %817 = vector.load %arg5[%c4_443, %c5_444, %c0_445, %c0_446] : memref<5x11x7x128xf32, #tpu.memory_space<vmem>>, vector<1x1x7x128xf32>
    %818 = vector.shape_cast %817 : vector<1x1x7x128xf32> to vector<7x128xf32>
    %819 = vector.extract_strided_slice %27 {offsets = [2, 4, 0], sizes = [1, 1, 128], strides = [1, 1, 1]} : vector<5x5x128xf32> to vector<1x1x128xf32>
    %820 = vector.shape_cast %819 : vector<1x1x128xf32> to vector<128xf32>
    %821 = vector.shape_cast %820 : vector<128xf32> to vector<1x128xf32>
    %822 = vector.broadcast %821 : vector<1x128xf32> to vector<7x128xf32>
    %823 = arith.mulf %818, %822 : vector<7x128xf32>
    %824 = arith.addf %816, %823 : vector<7x128xf32>
    %c4_447 = arith.constant 4 : index
    %c6_448 = arith.constant 6 : index
    %c0_449 = arith.constant 0 : index
    %c0_450 = arith.constant 0 : index
    %825 = vector.load %arg5[%c4_447, %c6_448, %c0_449, %c0_450] : memref<5x11x7x128xf32, #tpu.memory_space<vmem>>, vector<1x1x7x128xf32>
    %826 = vector.shape_cast %825 : vector<1x1x7x128xf32> to vector<7x128xf32>
    %827 = vector.extract_strided_slice %27 {offsets = [3, 4, 0], sizes = [1, 1, 128], strides = [1, 1, 1]} : vector<5x5x128xf32> to vector<1x1x128xf32>
    %828 = vector.shape_cast %827 : vector<1x1x128xf32> to vector<128xf32>
    %829 = vector.shape_cast %828 : vector<128xf32> to vector<1x128xf32>
    %830 = vector.broadcast %829 : vector<1x128xf32> to vector<7x128xf32>
    %831 = arith.mulf %826, %830 : vector<7x128xf32>
    %832 = arith.addf %824, %831 : vector<7x128xf32>
    %c4_451 = arith.constant 4 : index
    %c7_452 = arith.constant 7 : index
    %c0_453 = arith.constant 0 : index
    %c0_454 = arith.constant 0 : index
    %833 = vector.load %arg5[%c4_451, %c7_452, %c0_453, %c0_454] : memref<5x11x7x128xf32, #tpu.memory_space<vmem>>, vector<1x1x7x128xf32>
    %834 = vector.shape_cast %833 : vector<1x1x7x128xf32> to vector<7x128xf32>
    %835 = vector.extract_strided_slice %27 {offsets = [4, 4, 0], sizes = [1, 1, 128], strides = [1, 1, 1]} : vector<5x5x128xf32> to vector<1x1x128xf32>
    %836 = vector.shape_cast %835 : vector<1x1x128xf32> to vector<128xf32>
    %837 = vector.shape_cast %836 : vector<128xf32> to vector<1x128xf32>
    %838 = vector.broadcast %837 : vector<1x128xf32> to vector<7x128xf32>
    %839 = arith.mulf %834, %838 : vector<7x128xf32>
    %840 = arith.addf %832, %839 : vector<7x128xf32>
    %c0_455 = arith.constant 0 : index
    %c3_456 = arith.constant 3 : index
    %c0_457 = arith.constant 0 : index
    %c0_458 = arith.constant 0 : index
    %841 = vector.load %arg4[%c0_455, %c3_456, %c0_457, %c0_458] : memref<1x7x7x128xf32, #tpu.memory_space<vmem>>, vector<1x1x7x128xf32>
    %842 = vector.shape_cast %841 : vector<1x1x7x128xf32> to vector<7x128xf32>
    %843 = vector.shape_cast %840 : vector<7x128xf32> to vector<1x1x7x128xf32>
    tpu.vector_store %arg4[%c0_455, %c3_456, %c0_457, %c0_458], %843 {strides = array<i32>} : memref<1x7x7x128xf32, #tpu.memory_space<vmem>>, vector<1x1x7x128xf32>,
    %cst_459 = arith.constant 0.000000e+00 : f32
    %844 = vector.broadcast %cst_459 : f32 to vector<7x128xf32>
    %c0_460 = arith.constant 0 : index
    %c4_461 = arith.constant 4 : index
    %c0_462 = arith.constant 0 : index
    %c0_463 = arith.constant 0 : index
    %845 = vector.load %arg5[%c0_460, %c4_461, %c0_462, %c0_463] : memref<5x11x7x128xf32, #tpu.memory_space<vmem>>, vector<1x1x7x128xf32>
    %846 = vector.shape_cast %845 : vector<1x1x7x128xf32> to vector<7x128xf32>
    %847 = vector.extract_strided_slice %27 {offsets = [0, 0, 0], sizes = [1, 1, 128], strides = [1, 1, 1]} : vector<5x5x128xf32> to vector<1x1x128xf32>
    %848 = vector.shape_cast %847 : vector<1x1x128xf32> to vector<128xf32>
    %849 = vector.shape_cast %848 : vector<128xf32> to vector<1x128xf32>
    %850 = vector.broadcast %849 : vector<1x128xf32> to vector<7x128xf32>
    %851 = arith.mulf %846, %850 : vector<7x128xf32>
    %852 = arith.addf %844, %851 : vector<7x128xf32>
    %c0_464 = arith.constant 0 : index
    %c5_465 = arith.constant 5 : index
    %c0_466 = arith.constant 0 : index
    %c0_467 = arith.constant 0 : index
    %853 = vector.load %arg5[%c0_464, %c5_465, %c0_466, %c0_467] : memref<5x11x7x128xf32, #tpu.memory_space<vmem>>, vector<1x1x7x128xf32>
    %854 = vector.shape_cast %853 : vector<1x1x7x128xf32> to vector<7x128xf32>
    %855 = vector.extract_strided_slice %27 {offsets = [1, 0, 0], sizes = [1, 1, 128], strides = [1, 1, 1]} : vector<5x5x128xf32> to vector<1x1x128xf32>
    %856 = vector.shape_cast %855 : vector<1x1x128xf32> to vector<128xf32>
    %857 = vector.shape_cast %856 : vector<128xf32> to vector<1x128xf32>
    %858 = vector.broadcast %857 : vector<1x128xf32> to vector<7x128xf32>
    %859 = arith.mulf %854, %858 : vector<7x128xf32>
    %860 = arith.addf %852, %859 : vector<7x128xf32>
    %c0_468 = arith.constant 0 : index
    %c6_469 = arith.constant 6 : index
    %c0_470 = arith.constant 0 : index
    %c0_471 = arith.constant 0 : index
    %861 = vector.load %arg5[%c0_468, %c6_469, %c0_470, %c0_471] : memref<5x11x7x128xf32, #tpu.memory_space<vmem>>, vector<1x1x7x128xf32>
    %862 = vector.shape_cast %861 : vector<1x1x7x128xf32> to vector<7x128xf32>
    %863 = vector.extract_strided_slice %27 {offsets = [2, 0, 0], sizes = [1, 1, 128], strides = [1, 1, 1]} : vector<5x5x128xf32> to vector<1x1x128xf32>
    %864 = vector.shape_cast %863 : vector<1x1x128xf32> to vector<128xf32>
    %865 = vector.shape_cast %864 : vector<128xf32> to vector<1x128xf32>
    %866 = vector.broadcast %865 : vector<1x128xf32> to vector<7x128xf32>
    %867 = arith.mulf %862, %866 : vector<7x128xf32>
    %868 = arith.addf %860, %867 : vector<7x128xf32>
    %c0_472 = arith.constant 0 : index
    %c7_473 = arith.constant 7 : index
    %c0_474 = arith.constant 0 : index
    %c0_475 = arith.constant 0 : index
    %869 = vector.load %arg5[%c0_472, %c7_473, %c0_474, %c0_475] : memref<5x11x7x128xf32, #tpu.memory_space<vmem>>, vector<1x1x7x128xf32>
    %870 = vector.shape_cast %869 : vector<1x1x7x128xf32> to vector<7x128xf32>
    %871 = vector.extract_strided_slice %27 {offsets = [3, 0, 0], sizes = [1, 1, 128], strides = [1, 1, 1]} : vector<5x5x128xf32> to vector<1x1x128xf32>
    %872 = vector.shape_cast %871 : vector<1x1x128xf32> to vector<128xf32>
    %873 = vector.shape_cast %872 : vector<128xf32> to vector<1x128xf32>
    %874 = vector.broadcast %873 : vector<1x128xf32> to vector<7x128xf32>
    %875 = arith.mulf %870, %874 : vector<7x128xf32>
    %876 = arith.addf %868, %875 : vector<7x128xf32>
    %c0_476 = arith.constant 0 : index
    %c8 = arith.constant 8 : index
    %c0_477 = arith.constant 0 : index
    %c0_478 = arith.constant 0 : index
    %877 = vector.load %arg5[%c0_476, %c8, %c0_477, %c0_478] : memref<5x11x7x128xf32, #tpu.memory_space<vmem>>, vector<1x1x7x128xf32>
    %878 = vector.shape_cast %877 : vector<1x1x7x128xf32> to vector<7x128xf32>
    %879 = vector.extract_strided_slice %27 {offsets = [4, 0, 0], sizes = [1, 1, 128], strides = [1, 1, 1]} : vector<5x5x128xf32> to vector<1x1x128xf32>
    %880 = vector.shape_cast %879 : vector<1x1x128xf32> to vector<128xf32>
    %881 = vector.shape_cast %880 : vector<128xf32> to vector<1x128xf32>
    %882 = vector.broadcast %881 : vector<1x128xf32> to vector<7x128xf32>
    %883 = arith.mulf %878, %882 : vector<7x128xf32>
    %884 = arith.addf %876, %883 : vector<7x128xf32>
    %c1_479 = arith.constant 1 : index
    %c4_480 = arith.constant 4 : index
    %c0_481 = arith.constant 0 : index
    %c0_482 = arith.constant 0 : index
    %885 = vector.load %arg5[%c1_479, %c4_480, %c0_481, %c0_482] : memref<5x11x7x128xf32, #tpu.memory_space<vmem>>, vector<1x1x7x128xf32>
    %886 = vector.shape_cast %885 : vector<1x1x7x128xf32> to vector<7x128xf32>
    %887 = vector.extract_strided_slice %27 {offsets = [0, 1, 0], sizes = [1, 1, 128], strides = [1, 1, 1]} : vector<5x5x128xf32> to vector<1x1x128xf32>
    %888 = vector.shape_cast %887 : vector<1x1x128xf32> to vector<128xf32>
    %889 = vector.shape_cast %888 : vector<128xf32> to vector<1x128xf32>
    %890 = vector.broadcast %889 : vector<1x128xf32> to vector<7x128xf32>
    %891 = arith.mulf %886, %890 : vector<7x128xf32>
    %892 = arith.addf %884, %891 : vector<7x128xf32>
    %c1_483 = arith.constant 1 : index
    %c5_484 = arith.constant 5 : index
    %c0_485 = arith.constant 0 : index
    %c0_486 = arith.constant 0 : index
    %893 = vector.load %arg5[%c1_483, %c5_484, %c0_485, %c0_486] : memref<5x11x7x128xf32, #tpu.memory_space<vmem>>, vector<1x1x7x128xf32>
    %894 = vector.shape_cast %893 : vector<1x1x7x128xf32> to vector<7x128xf32>
    %895 = vector.extract_strided_slice %27 {offsets = [1, 1, 0], sizes = [1, 1, 128], strides = [1, 1, 1]} : vector<5x5x128xf32> to vector<1x1x128xf32>
    %896 = vector.shape_cast %895 : vector<1x1x128xf32> to vector<128xf32>
    %897 = vector.shape_cast %896 : vector<128xf32> to vector<1x128xf32>
    %898 = vector.broadcast %897 : vector<1x128xf32> to vector<7x128xf32>
    %899 = arith.mulf %894, %898 : vector<7x128xf32>
    %900 = arith.addf %892, %899 : vector<7x128xf32>
    %c1_487 = arith.constant 1 : index
    %c6_488 = arith.constant 6 : index
    %c0_489 = arith.constant 0 : index
    %c0_490 = arith.constant 0 : index
    %901 = vector.load %arg5[%c1_487, %c6_488, %c0_489, %c0_490] : memref<5x11x7x128xf32, #tpu.memory_space<vmem>>, vector<1x1x7x128xf32>
    %902 = vector.shape_cast %901 : vector<1x1x7x128xf32> to vector<7x128xf32>
    %903 = vector.extract_strided_slice %27 {offsets = [2, 1, 0], sizes = [1, 1, 128], strides = [1, 1, 1]} : vector<5x5x128xf32> to vector<1x1x128xf32>
    %904 = vector.shape_cast %903 : vector<1x1x128xf32> to vector<128xf32>
    %905 = vector.shape_cast %904 : vector<128xf32> to vector<1x128xf32>
    %906 = vector.broadcast %905 : vector<1x128xf32> to vector<7x128xf32>
    %907 = arith.mulf %902, %906 : vector<7x128xf32>
    %908 = arith.addf %900, %907 : vector<7x128xf32>
    %c1_491 = arith.constant 1 : index
    %c7_492 = arith.constant 7 : index
    %c0_493 = arith.constant 0 : index
    %c0_494 = arith.constant 0 : index
    %909 = vector.load %arg5[%c1_491, %c7_492, %c0_493, %c0_494] : memref<5x11x7x128xf32, #tpu.memory_space<vmem>>, vector<1x1x7x128xf32>
    %910 = vector.shape_cast %909 : vector<1x1x7x128xf32> to vector<7x128xf32>
    %911 = vector.extract_strided_slice %27 {offsets = [3, 1, 0], sizes = [1, 1, 128], strides = [1, 1, 1]} : vector<5x5x128xf32> to vector<1x1x128xf32>
    %912 = vector.shape_cast %911 : vector<1x1x128xf32> to vector<128xf32>
    %913 = vector.shape_cast %912 : vector<128xf32> to vector<1x128xf32>
    %914 = vector.broadcast %913 : vector<1x128xf32> to vector<7x128xf32>
    %915 = arith.mulf %910, %914 : vector<7x128xf32>
    %916 = arith.addf %908, %915 : vector<7x128xf32>
    %c1_495 = arith.constant 1 : index
    %c8_496 = arith.constant 8 : index
    %c0_497 = arith.constant 0 : index
    %c0_498 = arith.constant 0 : index
    %917 = vector.load %arg5[%c1_495, %c8_496, %c0_497, %c0_498] : memref<5x11x7x128xf32, #tpu.memory_space<vmem>>, vector<1x1x7x128xf32>
    %918 = vector.shape_cast %917 : vector<1x1x7x128xf32> to vector<7x128xf32>
    %919 = vector.extract_strided_slice %27 {offsets = [4, 1, 0], sizes = [1, 1, 128], strides = [1, 1, 1]} : vector<5x5x128xf32> to vector<1x1x128xf32>
    %920 = vector.shape_cast %919 : vector<1x1x128xf32> to vector<128xf32>
    %921 = vector.shape_cast %920 : vector<128xf32> to vector<1x128xf32>
    %922 = vector.broadcast %921 : vector<1x128xf32> to vector<7x128xf32>
    %923 = arith.mulf %918, %922 : vector<7x128xf32>
    %924 = arith.addf %916, %923 : vector<7x128xf32>
    %c2_499 = arith.constant 2 : index
    %c4_500 = arith.constant 4 : index
    %c0_501 = arith.constant 0 : index
    %c0_502 = arith.constant 0 : index
    %925 = vector.load %arg5[%c2_499, %c4_500, %c0_501, %c0_502] : memref<5x11x7x128xf32, #tpu.memory_space<vmem>>, vector<1x1x7x128xf32>
    %926 = vector.shape_cast %925 : vector<1x1x7x128xf32> to vector<7x128xf32>
    %927 = vector.extract_strided_slice %27 {offsets = [0, 2, 0], sizes = [1, 1, 128], strides = [1, 1, 1]} : vector<5x5x128xf32> to vector<1x1x128xf32>
    %928 = vector.shape_cast %927 : vector<1x1x128xf32> to vector<128xf32>
    %929 = vector.shape_cast %928 : vector<128xf32> to vector<1x128xf32>
    %930 = vector.broadcast %929 : vector<1x128xf32> to vector<7x128xf32>
    %931 = arith.mulf %926, %930 : vector<7x128xf32>
    %932 = arith.addf %924, %931 : vector<7x128xf32>
    %c2_503 = arith.constant 2 : index
    %c5_504 = arith.constant 5 : index
    %c0_505 = arith.constant 0 : index
    %c0_506 = arith.constant 0 : index
    %933 = vector.load %arg5[%c2_503, %c5_504, %c0_505, %c0_506] : memref<5x11x7x128xf32, #tpu.memory_space<vmem>>, vector<1x1x7x128xf32>
    %934 = vector.shape_cast %933 : vector<1x1x7x128xf32> to vector<7x128xf32>
    %935 = vector.extract_strided_slice %27 {offsets = [1, 2, 0], sizes = [1, 1, 128], strides = [1, 1, 1]} : vector<5x5x128xf32> to vector<1x1x128xf32>
    %936 = vector.shape_cast %935 : vector<1x1x128xf32> to vector<128xf32>
    %937 = vector.shape_cast %936 : vector<128xf32> to vector<1x128xf32>
    %938 = vector.broadcast %937 : vector<1x128xf32> to vector<7x128xf32>
    %939 = arith.mulf %934, %938 : vector<7x128xf32>
    %940 = arith.addf %932, %939 : vector<7x128xf32>
    %c2_507 = arith.constant 2 : index
    %c6_508 = arith.constant 6 : index
    %c0_509 = arith.constant 0 : index
    %c0_510 = arith.constant 0 : index
    %941 = vector.load %arg5[%c2_507, %c6_508, %c0_509, %c0_510] : memref<5x11x7x128xf32, #tpu.memory_space<vmem>>, vector<1x1x7x128xf32>
    %942 = vector.shape_cast %941 : vector<1x1x7x128xf32> to vector<7x128xf32>
    %943 = vector.extract_strided_slice %27 {offsets = [2, 2, 0], sizes = [1, 1, 128], strides = [1, 1, 1]} : vector<5x5x128xf32> to vector<1x1x128xf32>
    %944 = vector.shape_cast %943 : vector<1x1x128xf32> to vector<128xf32>
    %945 = vector.shape_cast %944 : vector<128xf32> to vector<1x128xf32>
    %946 = vector.broadcast %945 : vector<1x128xf32> to vector<7x128xf32>
    %947 = arith.mulf %942, %946 : vector<7x128xf32>
    %948 = arith.addf %940, %947 : vector<7x128xf32>
    %c2_511 = arith.constant 2 : index
    %c7_512 = arith.constant 7 : index
    %c0_513 = arith.constant 0 : index
    %c0_514 = arith.constant 0 : index
    %949 = vector.load %arg5[%c2_511, %c7_512, %c0_513, %c0_514] : memref<5x11x7x128xf32, #tpu.memory_space<vmem>>, vector<1x1x7x128xf32>
    %950 = vector.shape_cast %949 : vector<1x1x7x128xf32> to vector<7x128xf32>
    %951 = vector.extract_strided_slice %27 {offsets = [3, 2, 0], sizes = [1, 1, 128], strides = [1, 1, 1]} : vector<5x5x128xf32> to vector<1x1x128xf32>
    %952 = vector.shape_cast %951 : vector<1x1x128xf32> to vector<128xf32>
    %953 = vector.shape_cast %952 : vector<128xf32> to vector<1x128xf32>
    %954 = vector.broadcast %953 : vector<1x128xf32> to vector<7x128xf32>
    %955 = arith.mulf %950, %954 : vector<7x128xf32>
    %956 = arith.addf %948, %955 : vector<7x128xf32>
    %c2_515 = arith.constant 2 : index
    %c8_516 = arith.constant 8 : index
    %c0_517 = arith.constant 0 : index
    %c0_518 = arith.constant 0 : index
    %957 = vector.load %arg5[%c2_515, %c8_516, %c0_517, %c0_518] : memref<5x11x7x128xf32, #tpu.memory_space<vmem>>, vector<1x1x7x128xf32>
    %958 = vector.shape_cast %957 : vector<1x1x7x128xf32> to vector<7x128xf32>
    %959 = vector.extract_strided_slice %27 {offsets = [4, 2, 0], sizes = [1, 1, 128], strides = [1, 1, 1]} : vector<5x5x128xf32> to vector<1x1x128xf32>
    %960 = vector.shape_cast %959 : vector<1x1x128xf32> to vector<128xf32>
    %961 = vector.shape_cast %960 : vector<128xf32> to vector<1x128xf32>
    %962 = vector.broadcast %961 : vector<1x128xf32> to vector<7x128xf32>
    %963 = arith.mulf %958, %962 : vector<7x128xf32>
    %964 = arith.addf %956, %963 : vector<7x128xf32>
    %c3_519 = arith.constant 3 : index
    %c4_520 = arith.constant 4 : index
    %c0_521 = arith.constant 0 : index
    %c0_522 = arith.constant 0 : index
    %965 = vector.load %arg5[%c3_519, %c4_520, %c0_521, %c0_522] : memref<5x11x7x128xf32, #tpu.memory_space<vmem>>, vector<1x1x7x128xf32>
    %966 = vector.shape_cast %965 : vector<1x1x7x128xf32> to vector<7x128xf32>
    %967 = vector.extract_strided_slice %27 {offsets = [0, 3, 0], sizes = [1, 1, 128], strides = [1, 1, 1]} : vector<5x5x128xf32> to vector<1x1x128xf32>
    %968 = vector.shape_cast %967 : vector<1x1x128xf32> to vector<128xf32>
    %969 = vector.shape_cast %968 : vector<128xf32> to vector<1x128xf32>
    %970 = vector.broadcast %969 : vector<1x128xf32> to vector<7x128xf32>
    %971 = arith.mulf %966, %970 : vector<7x128xf32>
    %972 = arith.addf %964, %971 : vector<7x128xf32>
    %c3_523 = arith.constant 3 : index
    %c5_524 = arith.constant 5 : index
    %c0_525 = arith.constant 0 : index
    %c0_526 = arith.constant 0 : index
    %973 = vector.load %arg5[%c3_523, %c5_524, %c0_525, %c0_526] : memref<5x11x7x128xf32, #tpu.memory_space<vmem>>, vector<1x1x7x128xf32>
    %974 = vector.shape_cast %973 : vector<1x1x7x128xf32> to vector<7x128xf32>
    %975 = vector.extract_strided_slice %27 {offsets = [1, 3, 0], sizes = [1, 1, 128], strides = [1, 1, 1]} : vector<5x5x128xf32> to vector<1x1x128xf32>
    %976 = vector.shape_cast %975 : vector<1x1x128xf32> to vector<128xf32>
    %977 = vector.shape_cast %976 : vector<128xf32> to vector<1x128xf32>
    %978 = vector.broadcast %977 : vector<1x128xf32> to vector<7x128xf32>
    %979 = arith.mulf %974, %978 : vector<7x128xf32>
    %980 = arith.addf %972, %979 : vector<7x128xf32>
    %c3_527 = arith.constant 3 : index
    %c6_528 = arith.constant 6 : index
    %c0_529 = arith.constant 0 : index
    %c0_530 = arith.constant 0 : index
    %981 = vector.load %arg5[%c3_527, %c6_528, %c0_529, %c0_530] : memref<5x11x7x128xf32, #tpu.memory_space<vmem>>, vector<1x1x7x128xf32>
    %982 = vector.shape_cast %981 : vector<1x1x7x128xf32> to vector<7x128xf32>
    %983 = vector.extract_strided_slice %27 {offsets = [2, 3, 0], sizes = [1, 1, 128], strides = [1, 1, 1]} : vector<5x5x128xf32> to vector<1x1x128xf32>
    %984 = vector.shape_cast %983 : vector<1x1x128xf32> to vector<128xf32>
    %985 = vector.shape_cast %984 : vector<128xf32> to vector<1x128xf32>
    %986 = vector.broadcast %985 : vector<1x128xf32> to vector<7x128xf32>
    %987 = arith.mulf %982, %986 : vector<7x128xf32>
    %988 = arith.addf %980, %987 : vector<7x128xf32>
    %c3_531 = arith.constant 3 : index
    %c7_532 = arith.constant 7 : index
    %c0_533 = arith.constant 0 : index
    %c0_534 = arith.constant 0 : index
    %989 = vector.load %arg5[%c3_531, %c7_532, %c0_533, %c0_534] : memref<5x11x7x128xf32, #tpu.memory_space<vmem>>, vector<1x1x7x128xf32>
    %990 = vector.shape_cast %989 : vector<1x1x7x128xf32> to vector<7x128xf32>
    %991 = vector.extract_strided_slice %27 {offsets = [3, 3, 0], sizes = [1, 1, 128], strides = [1, 1, 1]} : vector<5x5x128xf32> to vector<1x1x128xf32>
    %992 = vector.shape_cast %991 : vector<1x1x128xf32> to vector<128xf32>
    %993 = vector.shape_cast %992 : vector<128xf32> to vector<1x128xf32>
    %994 = vector.broadcast %993 : vector<1x128xf32> to vector<7x128xf32>
    %995 = arith.mulf %990, %994 : vector<7x128xf32>
    %996 = arith.addf %988, %995 : vector<7x128xf32>
    %c3_535 = arith.constant 3 : index
    %c8_536 = arith.constant 8 : index
    %c0_537 = arith.constant 0 : index
    %c0_538 = arith.constant 0 : index
    %997 = vector.load %arg5[%c3_535, %c8_536, %c0_537, %c0_538] : memref<5x11x7x128xf32, #tpu.memory_space<vmem>>, vector<1x1x7x128xf32>
    %998 = vector.shape_cast %997 : vector<1x1x7x128xf32> to vector<7x128xf32>
    %999 = vector.extract_strided_slice %27 {offsets = [4, 3, 0], sizes = [1, 1, 128], strides = [1, 1, 1]} : vector<5x5x128xf32> to vector<1x1x128xf32>
    %1000 = vector.shape_cast %999 : vector<1x1x128xf32> to vector<128xf32>
    %1001 = vector.shape_cast %1000 : vector<128xf32> to vector<1x128xf32>
    %1002 = vector.broadcast %1001 : vector<1x128xf32> to vector<7x128xf32>
    %1003 = arith.mulf %998, %1002 : vector<7x128xf32>
    %1004 = arith.addf %996, %1003 : vector<7x128xf32>
    %c4_539 = arith.constant 4 : index
    %c4_540 = arith.constant 4 : index
    %c0_541 = arith.constant 0 : index
    %c0_542 = arith.constant 0 : index
    %1005 = vector.load %arg5[%c4_539, %c4_540, %c0_541, %c0_542] : memref<5x11x7x128xf32, #tpu.memory_space<vmem>>, vector<1x1x7x128xf32>
    %1006 = vector.shape_cast %1005 : vector<1x1x7x128xf32> to vector<7x128xf32>
    %1007 = vector.extract_strided_slice %27 {offsets = [0, 4, 0], sizes = [1, 1, 128], strides = [1, 1, 1]} : vector<5x5x128xf32> to vector<1x1x128xf32>
    %1008 = vector.shape_cast %1007 : vector<1x1x128xf32> to vector<128xf32>
    %1009 = vector.shape_cast %1008 : vector<128xf32> to vector<1x128xf32>
    %1010 = vector.broadcast %1009 : vector<1x128xf32> to vector<7x128xf32>
    %1011 = arith.mulf %1006, %1010 : vector<7x128xf32>
    %1012 = arith.addf %1004, %1011 : vector<7x128xf32>
    %c4_543 = arith.constant 4 : index
    %c5_544 = arith.constant 5 : index
    %c0_545 = arith.constant 0 : index
    %c0_546 = arith.constant 0 : index
    %1013 = vector.load %arg5[%c4_543, %c5_544, %c0_545, %c0_546] : memref<5x11x7x128xf32, #tpu.memory_space<vmem>>, vector<1x1x7x128xf32>
    %1014 = vector.shape_cast %1013 : vector<1x1x7x128xf32> to vector<7x128xf32>
    %1015 = vector.extract_strided_slice %27 {offsets = [1, 4, 0], sizes = [1, 1, 128], strides = [1, 1, 1]} : vector<5x5x128xf32> to vector<1x1x128xf32>
    %1016 = vector.shape_cast %1015 : vector<1x1x128xf32> to vector<128xf32>
    %1017 = vector.shape_cast %1016 : vector<128xf32> to vector<1x128xf32>
    %1018 = vector.broadcast %1017 : vector<1x128xf32> to vector<7x128xf32>
    %1019 = arith.mulf %1014, %1018 : vector<7x128xf32>
    %1020 = arith.addf %1012, %1019 : vector<7x128xf32>
    %c4_547 = arith.constant 4 : index
    %c6_548 = arith.constant 6 : index
    %c0_549 = arith.constant 0 : index
    %c0_550 = arith.constant 0 : index
    %1021 = vector.load %arg5[%c4_547, %c6_548, %c0_549, %c0_550] : memref<5x11x7x128xf32, #tpu.memory_space<vmem>>, vector<1x1x7x128xf32>
    %1022 = vector.shape_cast %1021 : vector<1x1x7x128xf32> to vector<7x128xf32>
    %1023 = vector.extract_strided_slice %27 {offsets = [2, 4, 0], sizes = [1, 1, 128], strides = [1, 1, 1]} : vector<5x5x128xf32> to vector<1x1x128xf32>
    %1024 = vector.shape_cast %1023 : vector<1x1x128xf32> to vector<128xf32>
    %1025 = vector.shape_cast %1024 : vector<128xf32> to vector<1x128xf32>
    %1026 = vector.broadcast %1025 : vector<1x128xf32> to vector<7x128xf32>
    %1027 = arith.mulf %1022, %1026 : vector<7x128xf32>
    %1028 = arith.addf %1020, %1027 : vector<7x128xf32>
    %c4_551 = arith.constant 4 : index
    %c7_552 = arith.constant 7 : index
    %c0_553 = arith.constant 0 : index
    %c0_554 = arith.constant 0 : index
    %1029 = vector.load %arg5[%c4_551, %c7_552, %c0_553, %c0_554] : memref<5x11x7x128xf32, #tpu.memory_space<vmem>>, vector<1x1x7x128xf32>
    %1030 = vector.shape_cast %1029 : vector<1x1x7x128xf32> to vector<7x128xf32>
    %1031 = vector.extract_strided_slice %27 {offsets = [3, 4, 0], sizes = [1, 1, 128], strides = [1, 1, 1]} : vector<5x5x128xf32> to vector<1x1x128xf32>
    %1032 = vector.shape_cast %1031 : vector<1x1x128xf32> to vector<128xf32>
    %1033 = vector.shape_cast %1032 : vector<128xf32> to vector<1x128xf32>
    %1034 = vector.broadcast %1033 : vector<1x128xf32> to vector<7x128xf32>
    %1035 = arith.mulf %1030, %1034 : vector<7x128xf32>
    %1036 = arith.addf %1028, %1035 : vector<7x128xf32>
    %c4_555 = arith.constant 4 : index
    %c8_556 = arith.constant 8 : index
    %c0_557 = arith.constant 0 : index
    %c0_558 = arith.constant 0 : index
    %1037 = vector.load %arg5[%c4_555, %c8_556, %c0_557, %c0_558] : memref<5x11x7x128xf32, #tpu.memory_space<vmem>>, vector<1x1x7x128xf32>
    %1038 = vector.shape_cast %1037 : vector<1x1x7x128xf32> to vector<7x128xf32>
    %1039 = vector.extract_strided_slice %27 {offsets = [4, 4, 0], sizes = [1, 1, 128], strides = [1, 1, 1]} : vector<5x5x128xf32> to vector<1x1x128xf32>
    %1040 = vector.shape_cast %1039 : vector<1x1x128xf32> to vector<128xf32>
    %1041 = vector.shape_cast %1040 : vector<128xf32> to vector<1x128xf32>
    %1042 = vector.broadcast %1041 : vector<1x128xf32> to vector<7x128xf32>
    %1043 = arith.mulf %1038, %1042 : vector<7x128xf32>
    %1044 = arith.addf %1036, %1043 : vector<7x128xf32>
    %c0_559 = arith.constant 0 : index
    %c4_560 = arith.constant 4 : index
    %c0_561 = arith.constant 0 : index
    %c0_562 = arith.constant 0 : index
    %1045 = vector.load %arg4[%c0_559, %c4_560, %c0_561, %c0_562] : memref<1x7x7x128xf32, #tpu.memory_space<vmem>>, vector<1x1x7x128xf32>
    %1046 = vector.shape_cast %1045 : vector<1x1x7x128xf32> to vector<7x128xf32>
    %1047 = vector.shape_cast %1044 : vector<7x128xf32> to vector<1x1x7x128xf32>
    tpu.vector_store %arg4[%c0_559, %c4_560, %c0_561, %c0_562], %1047 {strides = array<i32>} : memref<1x7x7x128xf32, #tpu.memory_space<vmem>>, vector<1x1x7x128xf32>,
    %cst_563 = arith.constant 0.000000e+00 : f32
    %1048 = vector.broadcast %cst_563 : f32 to vector<7x128xf32>
    %c0_564 = arith.constant 0 : index
    %c5_565 = arith.constant 5 : index
    %c0_566 = arith.constant 0 : index
    %c0_567 = arith.constant 0 : index
    %1049 = vector.load %arg5[%c0_564, %c5_565, %c0_566, %c0_567] : memref<5x11x7x128xf32, #tpu.memory_space<vmem>>, vector<1x1x7x128xf32>
    %1050 = vector.shape_cast %1049 : vector<1x1x7x128xf32> to vector<7x128xf32>
    %1051 = vector.extract_strided_slice %27 {offsets = [0, 0, 0], sizes = [1, 1, 128], strides = [1, 1, 1]} : vector<5x5x128xf32> to vector<1x1x128xf32>
    %1052 = vector.shape_cast %1051 : vector<1x1x128xf32> to vector<128xf32>
    %1053 = vector.shape_cast %1052 : vector<128xf32> to vector<1x128xf32>
    %1054 = vector.broadcast %1053 : vector<1x128xf32> to vector<7x128xf32>
    %1055 = arith.mulf %1050, %1054 : vector<7x128xf32>
    %1056 = arith.addf %1048, %1055 : vector<7x128xf32>
    %c0_568 = arith.constant 0 : index
    %c6_569 = arith.constant 6 : index
    %c0_570 = arith.constant 0 : index
    %c0_571 = arith.constant 0 : index
    %1057 = vector.load %arg5[%c0_568, %c6_569, %c0_570, %c0_571] : memref<5x11x7x128xf32, #tpu.memory_space<vmem>>, vector<1x1x7x128xf32>
    %1058 = vector.shape_cast %1057 : vector<1x1x7x128xf32> to vector<7x128xf32>
    %1059 = vector.extract_strided_slice %27 {offsets = [1, 0, 0], sizes = [1, 1, 128], strides = [1, 1, 1]} : vector<5x5x128xf32> to vector<1x1x128xf32>
    %1060 = vector.shape_cast %1059 : vector<1x1x128xf32> to vector<128xf32>
    %1061 = vector.shape_cast %1060 : vector<128xf32> to vector<1x128xf32>
    %1062 = vector.broadcast %1061 : vector<1x128xf32> to vector<7x128xf32>
    %1063 = arith.mulf %1058, %1062 : vector<7x128xf32>
    %1064 = arith.addf %1056, %1063 : vector<7x128xf32>
    %c0_572 = arith.constant 0 : index
    %c7_573 = arith.constant 7 : index
    %c0_574 = arith.constant 0 : index
    %c0_575 = arith.constant 0 : index
    %1065 = vector.load %arg5[%c0_572, %c7_573, %c0_574, %c0_575] : memref<5x11x7x128xf32, #tpu.memory_space<vmem>>, vector<1x1x7x128xf32>
    %1066 = vector.shape_cast %1065 : vector<1x1x7x128xf32> to vector<7x128xf32>
    %1067 = vector.extract_strided_slice %27 {offsets = [2, 0, 0], sizes = [1, 1, 128], strides = [1, 1, 1]} : vector<5x5x128xf32> to vector<1x1x128xf32>
    %1068 = vector.shape_cast %1067 : vector<1x1x128xf32> to vector<128xf32>
    %1069 = vector.shape_cast %1068 : vector<128xf32> to vector<1x128xf32>
    %1070 = vector.broadcast %1069 : vector<1x128xf32> to vector<7x128xf32>
    %1071 = arith.mulf %1066, %1070 : vector<7x128xf32>
    %1072 = arith.addf %1064, %1071 : vector<7x128xf32>
    %c0_576 = arith.constant 0 : index
    %c8_577 = arith.constant 8 : index
    %c0_578 = arith.constant 0 : index
    %c0_579 = arith.constant 0 : index
    %1073 = vector.load %arg5[%c0_576, %c8_577, %c0_578, %c0_579] : memref<5x11x7x128xf32, #tpu.memory_space<vmem>>, vector<1x1x7x128xf32>
    %1074 = vector.shape_cast %1073 : vector<1x1x7x128xf32> to vector<7x128xf32>
    %1075 = vector.extract_strided_slice %27 {offsets = [3, 0, 0], sizes = [1, 1, 128], strides = [1, 1, 1]} : vector<5x5x128xf32> to vector<1x1x128xf32>
    %1076 = vector.shape_cast %1075 : vector<1x1x128xf32> to vector<128xf32>
    %1077 = vector.shape_cast %1076 : vector<128xf32> to vector<1x128xf32>
    %1078 = vector.broadcast %1077 : vector<1x128xf32> to vector<7x128xf32>
    %1079 = arith.mulf %1074, %1078 : vector<7x128xf32>
    %1080 = arith.addf %1072, %1079 : vector<7x128xf32>
    %c0_580 = arith.constant 0 : index
    %c9 = arith.constant 9 : index
    %c0_581 = arith.constant 0 : index
    %c0_582 = arith.constant 0 : index
    %1081 = vector.load %arg5[%c0_580, %c9, %c0_581, %c0_582] : memref<5x11x7x128xf32, #tpu.memory_space<vmem>>, vector<1x1x7x128xf32>
    %1082 = vector.shape_cast %1081 : vector<1x1x7x128xf32> to vector<7x128xf32>
    %1083 = vector.extract_strided_slice %27 {offsets = [4, 0, 0], sizes = [1, 1, 128], strides = [1, 1, 1]} : vector<5x5x128xf32> to vector<1x1x128xf32>
    %1084 = vector.shape_cast %1083 : vector<1x1x128xf32> to vector<128xf32>
    %1085 = vector.shape_cast %1084 : vector<128xf32> to vector<1x128xf32>
    %1086 = vector.broadcast %1085 : vector<1x128xf32> to vector<7x128xf32>
    %1087 = arith.mulf %1082, %1086 : vector<7x128xf32>
    %1088 = arith.addf %1080, %1087 : vector<7x128xf32>
    %c1_583 = arith.constant 1 : index
    %c5_584 = arith.constant 5 : index
    %c0_585 = arith.constant 0 : index
    %c0_586 = arith.constant 0 : index
    %1089 = vector.load %arg5[%c1_583, %c5_584, %c0_585, %c0_586] : memref<5x11x7x128xf32, #tpu.memory_space<vmem>>, vector<1x1x7x128xf32>
    %1090 = vector.shape_cast %1089 : vector<1x1x7x128xf32> to vector<7x128xf32>
    %1091 = vector.extract_strided_slice %27 {offsets = [0, 1, 0], sizes = [1, 1, 128], strides = [1, 1, 1]} : vector<5x5x128xf32> to vector<1x1x128xf32>
    %1092 = vector.shape_cast %1091 : vector<1x1x128xf32> to vector<128xf32>
    %1093 = vector.shape_cast %1092 : vector<128xf32> to vector<1x128xf32>
    %1094 = vector.broadcast %1093 : vector<1x128xf32> to vector<7x128xf32>
    %1095 = arith.mulf %1090, %1094 : vector<7x128xf32>
    %1096 = arith.addf %1088, %1095 : vector<7x128xf32>
    %c1_587 = arith.constant 1 : index
    %c6_588 = arith.constant 6 : index
    %c0_589 = arith.constant 0 : index
    %c0_590 = arith.constant 0 : index
    %1097 = vector.load %arg5[%c1_587, %c6_588, %c0_589, %c0_590] : memref<5x11x7x128xf32, #tpu.memory_space<vmem>>, vector<1x1x7x128xf32>
    %1098 = vector.shape_cast %1097 : vector<1x1x7x128xf32> to vector<7x128xf32>
    %1099 = vector.extract_strided_slice %27 {offsets = [1, 1, 0], sizes = [1, 1, 128], strides = [1, 1, 1]} : vector<5x5x128xf32> to vector<1x1x128xf32>
    %1100 = vector.shape_cast %1099 : vector<1x1x128xf32> to vector<128xf32>
    %1101 = vector.shape_cast %1100 : vector<128xf32> to vector<1x128xf32>
    %1102 = vector.broadcast %1101 : vector<1x128xf32> to vector<7x128xf32>
    %1103 = arith.mulf %1098, %1102 : vector<7x128xf32>
    %1104 = arith.addf %1096, %1103 : vector<7x128xf32>
    %c1_591 = arith.constant 1 : index
    %c7_592 = arith.constant 7 : index
    %c0_593 = arith.constant 0 : index
    %c0_594 = arith.constant 0 : index
    %1105 = vector.load %arg5[%c1_591, %c7_592, %c0_593, %c0_594] : memref<5x11x7x128xf32, #tpu.memory_space<vmem>>, vector<1x1x7x128xf32>
    %1106 = vector.shape_cast %1105 : vector<1x1x7x128xf32> to vector<7x128xf32>
    %1107 = vector.extract_strided_slice %27 {offsets = [2, 1, 0], sizes = [1, 1, 128], strides = [1, 1, 1]} : vector<5x5x128xf32> to vector<1x1x128xf32>
    %1108 = vector.shape_cast %1107 : vector<1x1x128xf32> to vector<128xf32>
    %1109 = vector.shape_cast %1108 : vector<128xf32> to vector<1x128xf32>
    %1110 = vector.broadcast %1109 : vector<1x128xf32> to vector<7x128xf32>
    %1111 = arith.mulf %1106, %1110 : vector<7x128xf32>
    %1112 = arith.addf %1104, %1111 : vector<7x128xf32>
    %c1_595 = arith.constant 1 : index
    %c8_596 = arith.constant 8 : index
    %c0_597 = arith.constant 0 : index
    %c0_598 = arith.constant 0 : index
    %1113 = vector.load %arg5[%c1_595, %c8_596, %c0_597, %c0_598] : memref<5x11x7x128xf32, #tpu.memory_space<vmem>>, vector<1x1x7x128xf32>
    %1114 = vector.shape_cast %1113 : vector<1x1x7x128xf32> to vector<7x128xf32>
    %1115 = vector.extract_strided_slice %27 {offsets = [3, 1, 0], sizes = [1, 1, 128], strides = [1, 1, 1]} : vector<5x5x128xf32> to vector<1x1x128xf32>
    %1116 = vector.shape_cast %1115 : vector<1x1x128xf32> to vector<128xf32>
    %1117 = vector.shape_cast %1116 : vector<128xf32> to vector<1x128xf32>
    %1118 = vector.broadcast %1117 : vector<1x128xf32> to vector<7x128xf32>
    %1119 = arith.mulf %1114, %1118 : vector<7x128xf32>
    %1120 = arith.addf %1112, %1119 : vector<7x128xf32>
    %c1_599 = arith.constant 1 : index
    %c9_600 = arith.constant 9 : index
    %c0_601 = arith.constant 0 : index
    %c0_602 = arith.constant 0 : index
    %1121 = vector.load %arg5[%c1_599, %c9_600, %c0_601, %c0_602] : memref<5x11x7x128xf32, #tpu.memory_space<vmem>>, vector<1x1x7x128xf32>
    %1122 = vector.shape_cast %1121 : vector<1x1x7x128xf32> to vector<7x128xf32>
    %1123 = vector.extract_strided_slice %27 {offsets = [4, 1, 0], sizes = [1, 1, 128], strides = [1, 1, 1]} : vector<5x5x128xf32> to vector<1x1x128xf32>
    %1124 = vector.shape_cast %1123 : vector<1x1x128xf32> to vector<128xf32>
    %1125 = vector.shape_cast %1124 : vector<128xf32> to vector<1x128xf32>
    %1126 = vector.broadcast %1125 : vector<1x128xf32> to vector<7x128xf32>
    %1127 = arith.mulf %1122, %1126 : vector<7x128xf32>
    %1128 = arith.addf %1120, %1127 : vector<7x128xf32>
    %c2_603 = arith.constant 2 : index
    %c5_604 = arith.constant 5 : index
    %c0_605 = arith.constant 0 : index
    %c0_606 = arith.constant 0 : index
    %1129 = vector.load %arg5[%c2_603, %c5_604, %c0_605, %c0_606] : memref<5x11x7x128xf32, #tpu.memory_space<vmem>>, vector<1x1x7x128xf32>
    %1130 = vector.shape_cast %1129 : vector<1x1x7x128xf32> to vector<7x128xf32>
    %1131 = vector.extract_strided_slice %27 {offsets = [0, 2, 0], sizes = [1, 1, 128], strides = [1, 1, 1]} : vector<5x5x128xf32> to vector<1x1x128xf32>
    %1132 = vector.shape_cast %1131 : vector<1x1x128xf32> to vector<128xf32>
    %1133 = vector.shape_cast %1132 : vector<128xf32> to vector<1x128xf32>
    %1134 = vector.broadcast %1133 : vector<1x128xf32> to vector<7x128xf32>
    %1135 = arith.mulf %1130, %1134 : vector<7x128xf32>
    %1136 = arith.addf %1128, %1135 : vector<7x128xf32>
    %c2_607 = arith.constant 2 : index
    %c6_608 = arith.constant 6 : index
    %c0_609 = arith.constant 0 : index
    %c0_610 = arith.constant 0 : index
    %1137 = vector.load %arg5[%c2_607, %c6_608, %c0_609, %c0_610] : memref<5x11x7x128xf32, #tpu.memory_space<vmem>>, vector<1x1x7x128xf32>
    %1138 = vector.shape_cast %1137 : vector<1x1x7x128xf32> to vector<7x128xf32>
    %1139 = vector.extract_strided_slice %27 {offsets = [1, 2, 0], sizes = [1, 1, 128], strides = [1, 1, 1]} : vector<5x5x128xf32> to vector<1x1x128xf32>
    %1140 = vector.shape_cast %1139 : vector<1x1x128xf32> to vector<128xf32>
    %1141 = vector.shape_cast %1140 : vector<128xf32> to vector<1x128xf32>
    %1142 = vector.broadcast %1141 : vector<1x128xf32> to vector<7x128xf32>
    %1143 = arith.mulf %1138, %1142 : vector<7x128xf32>
    %1144 = arith.addf %1136, %1143 : vector<7x128xf32>
    %c2_611 = arith.constant 2 : index
    %c7_612 = arith.constant 7 : index
    %c0_613 = arith.constant 0 : index
    %c0_614 = arith.constant 0 : index
    %1145 = vector.load %arg5[%c2_611, %c7_612, %c0_613, %c0_614] : memref<5x11x7x128xf32, #tpu.memory_space<vmem>>, vector<1x1x7x128xf32>
    %1146 = vector.shape_cast %1145 : vector<1x1x7x128xf32> to vector<7x128xf32>
    %1147 = vector.extract_strided_slice %27 {offsets = [2, 2, 0], sizes = [1, 1, 128], strides = [1, 1, 1]} : vector<5x5x128xf32> to vector<1x1x128xf32>
    %1148 = vector.shape_cast %1147 : vector<1x1x128xf32> to vector<128xf32>
    %1149 = vector.shape_cast %1148 : vector<128xf32> to vector<1x128xf32>
    %1150 = vector.broadcast %1149 : vector<1x128xf32> to vector<7x128xf32>
    %1151 = arith.mulf %1146, %1150 : vector<7x128xf32>
    %1152 = arith.addf %1144, %1151 : vector<7x128xf32>
    %c2_615 = arith.constant 2 : index
    %c8_616 = arith.constant 8 : index
    %c0_617 = arith.constant 0 : index
    %c0_618 = arith.constant 0 : index
    %1153 = vector.load %arg5[%c2_615, %c8_616, %c0_617, %c0_618] : memref<5x11x7x128xf32, #tpu.memory_space<vmem>>, vector<1x1x7x128xf32>
    %1154 = vector.shape_cast %1153 : vector<1x1x7x128xf32> to vector<7x128xf32>
    %1155 = vector.extract_strided_slice %27 {offsets = [3, 2, 0], sizes = [1, 1, 128], strides = [1, 1, 1]} : vector<5x5x128xf32> to vector<1x1x128xf32>
    %1156 = vector.shape_cast %1155 : vector<1x1x128xf32> to vector<128xf32>
    %1157 = vector.shape_cast %1156 : vector<128xf32> to vector<1x128xf32>
    %1158 = vector.broadcast %1157 : vector<1x128xf32> to vector<7x128xf32>
    %1159 = arith.mulf %1154, %1158 : vector<7x128xf32>
    %1160 = arith.addf %1152, %1159 : vector<7x128xf32>
    %c2_619 = arith.constant 2 : index
    %c9_620 = arith.constant 9 : index
    %c0_621 = arith.constant 0 : index
    %c0_622 = arith.constant 0 : index
    %1161 = vector.load %arg5[%c2_619, %c9_620, %c0_621, %c0_622] : memref<5x11x7x128xf32, #tpu.memory_space<vmem>>, vector<1x1x7x128xf32>
    %1162 = vector.shape_cast %1161 : vector<1x1x7x128xf32> to vector<7x128xf32>
    %1163 = vector.extract_strided_slice %27 {offsets = [4, 2, 0], sizes = [1, 1, 128], strides = [1, 1, 1]} : vector<5x5x128xf32> to vector<1x1x128xf32>
    %1164 = vector.shape_cast %1163 : vector<1x1x128xf32> to vector<128xf32>
    %1165 = vector.shape_cast %1164 : vector<128xf32> to vector<1x128xf32>
    %1166 = vector.broadcast %1165 : vector<1x128xf32> to vector<7x128xf32>
    %1167 = arith.mulf %1162, %1166 : vector<7x128xf32>
    %1168 = arith.addf %1160, %1167 : vector<7x128xf32>
    %c3_623 = arith.constant 3 : index
    %c5_624 = arith.constant 5 : index
    %c0_625 = arith.constant 0 : index
    %c0_626 = arith.constant 0 : index
    %1169 = vector.load %arg5[%c3_623, %c5_624, %c0_625, %c0_626] : memref<5x11x7x128xf32, #tpu.memory_space<vmem>>, vector<1x1x7x128xf32>
    %1170 = vector.shape_cast %1169 : vector<1x1x7x128xf32> to vector<7x128xf32>
    %1171 = vector.extract_strided_slice %27 {offsets = [0, 3, 0], sizes = [1, 1, 128], strides = [1, 1, 1]} : vector<5x5x128xf32> to vector<1x1x128xf32>
    %1172 = vector.shape_cast %1171 : vector<1x1x128xf32> to vector<128xf32>
    %1173 = vector.shape_cast %1172 : vector<128xf32> to vector<1x128xf32>
    %1174 = vector.broadcast %1173 : vector<1x128xf32> to vector<7x128xf32>
    %1175 = arith.mulf %1170, %1174 : vector<7x128xf32>
    %1176 = arith.addf %1168, %1175 : vector<7x128xf32>
    %c3_627 = arith.constant 3 : index
    %c6_628 = arith.constant 6 : index
    %c0_629 = arith.constant 0 : index
    %c0_630 = arith.constant 0 : index
    %1177 = vector.load %arg5[%c3_627, %c6_628, %c0_629, %c0_630] : memref<5x11x7x128xf32, #tpu.memory_space<vmem>>, vector<1x1x7x128xf32>
    %1178 = vector.shape_cast %1177 : vector<1x1x7x128xf32> to vector<7x128xf32>
    %1179 = vector.extract_strided_slice %27 {offsets = [1, 3, 0], sizes = [1, 1, 128], strides = [1, 1, 1]} : vector<5x5x128xf32> to vector<1x1x128xf32>
    %1180 = vector.shape_cast %1179 : vector<1x1x128xf32> to vector<128xf32>
    %1181 = vector.shape_cast %1180 : vector<128xf32> to vector<1x128xf32>
    %1182 = vector.broadcast %1181 : vector<1x128xf32> to vector<7x128xf32>
    %1183 = arith.mulf %1178, %1182 : vector<7x128xf32>
    %1184 = arith.addf %1176, %1183 : vector<7x128xf32>
    %c3_631 = arith.constant 3 : index
    %c7_632 = arith.constant 7 : index
    %c0_633 = arith.constant 0 : index
    %c0_634 = arith.constant 0 : index
    %1185 = vector.load %arg5[%c3_631, %c7_632, %c0_633, %c0_634] : memref<5x11x7x128xf32, #tpu.memory_space<vmem>>, vector<1x1x7x128xf32>
    %1186 = vector.shape_cast %1185 : vector<1x1x7x128xf32> to vector<7x128xf32>
    %1187 = vector.extract_strided_slice %27 {offsets = [2, 3, 0], sizes = [1, 1, 128], strides = [1, 1, 1]} : vector<5x5x128xf32> to vector<1x1x128xf32>
    %1188 = vector.shape_cast %1187 : vector<1x1x128xf32> to vector<128xf32>
    %1189 = vector.shape_cast %1188 : vector<128xf32> to vector<1x128xf32>
    %1190 = vector.broadcast %1189 : vector<1x128xf32> to vector<7x128xf32>
    %1191 = arith.mulf %1186, %1190 : vector<7x128xf32>
    %1192 = arith.addf %1184, %1191 : vector<7x128xf32>
    %c3_635 = arith.constant 3 : index
    %c8_636 = arith.constant 8 : index
    %c0_637 = arith.constant 0 : index
    %c0_638 = arith.constant 0 : index
    %1193 = vector.load %arg5[%c3_635, %c8_636, %c0_637, %c0_638] : memref<5x11x7x128xf32, #tpu.memory_space<vmem>>, vector<1x1x7x128xf32>
    %1194 = vector.shape_cast %1193 : vector<1x1x7x128xf32> to vector<7x128xf32>
    %1195 = vector.extract_strided_slice %27 {offsets = [3, 3, 0], sizes = [1, 1, 128], strides = [1, 1, 1]} : vector<5x5x128xf32> to vector<1x1x128xf32>
    %1196 = vector.shape_cast %1195 : vector<1x1x128xf32> to vector<128xf32>
    %1197 = vector.shape_cast %1196 : vector<128xf32> to vector<1x128xf32>
    %1198 = vector.broadcast %1197 : vector<1x128xf32> to vector<7x128xf32>
    %1199 = arith.mulf %1194, %1198 : vector<7x128xf32>
    %1200 = arith.addf %1192, %1199 : vector<7x128xf32>
    %c3_639 = arith.constant 3 : index
    %c9_640 = arith.constant 9 : index
    %c0_641 = arith.constant 0 : index
    %c0_642 = arith.constant 0 : index
    %1201 = vector.load %arg5[%c3_639, %c9_640, %c0_641, %c0_642] : memref<5x11x7x128xf32, #tpu.memory_space<vmem>>, vector<1x1x7x128xf32>
    %1202 = vector.shape_cast %1201 : vector<1x1x7x128xf32> to vector<7x128xf32>
    %1203 = vector.extract_strided_slice %27 {offsets = [4, 3, 0], sizes = [1, 1, 128], strides = [1, 1, 1]} : vector<5x5x128xf32> to vector<1x1x128xf32>
    %1204 = vector.shape_cast %1203 : vector<1x1x128xf32> to vector<128xf32>
    %1205 = vector.shape_cast %1204 : vector<128xf32> to vector<1x128xf32>
    %1206 = vector.broadcast %1205 : vector<1x128xf32> to vector<7x128xf32>
    %1207 = arith.mulf %1202, %1206 : vector<7x128xf32>
    %1208 = arith.addf %1200, %1207 : vector<7x128xf32>
    %c4_643 = arith.constant 4 : index
    %c5_644 = arith.constant 5 : index
    %c0_645 = arith.constant 0 : index
    %c0_646 = arith.constant 0 : index
    %1209 = vector.load %arg5[%c4_643, %c5_644, %c0_645, %c0_646] : memref<5x11x7x128xf32, #tpu.memory_space<vmem>>, vector<1x1x7x128xf32>
    %1210 = vector.shape_cast %1209 : vector<1x1x7x128xf32> to vector<7x128xf32>
    %1211 = vector.extract_strided_slice %27 {offsets = [0, 4, 0], sizes = [1, 1, 128], strides = [1, 1, 1]} : vector<5x5x128xf32> to vector<1x1x128xf32>
    %1212 = vector.shape_cast %1211 : vector<1x1x128xf32> to vector<128xf32>
    %1213 = vector.shape_cast %1212 : vector<128xf32> to vector<1x128xf32>
    %1214 = vector.broadcast %1213 : vector<1x128xf32> to vector<7x128xf32>
    %1215 = arith.mulf %1210, %1214 : vector<7x128xf32>
    %1216 = arith.addf %1208, %1215 : vector<7x128xf32>
    %c4_647 = arith.constant 4 : index
    %c6_648 = arith.constant 6 : index
    %c0_649 = arith.constant 0 : index
    %c0_650 = arith.constant 0 : index
    %1217 = vector.load %arg5[%c4_647, %c6_648, %c0_649, %c0_650] : memref<5x11x7x128xf32, #tpu.memory_space<vmem>>, vector<1x1x7x128xf32>
    %1218 = vector.shape_cast %1217 : vector<1x1x7x128xf32> to vector<7x128xf32>
    %1219 = vector.extract_strided_slice %27 {offsets = [1, 4, 0], sizes = [1, 1, 128], strides = [1, 1, 1]} : vector<5x5x128xf32> to vector<1x1x128xf32>
    %1220 = vector.shape_cast %1219 : vector<1x1x128xf32> to vector<128xf32>
    %1221 = vector.shape_cast %1220 : vector<128xf32> to vector<1x128xf32>
    %1222 = vector.broadcast %1221 : vector<1x128xf32> to vector<7x128xf32>
    %1223 = arith.mulf %1218, %1222 : vector<7x128xf32>
    %1224 = arith.addf %1216, %1223 : vector<7x128xf32>
    %c4_651 = arith.constant 4 : index
    %c7_652 = arith.constant 7 : index
    %c0_653 = arith.constant 0 : index
    %c0_654 = arith.constant 0 : index
    %1225 = vector.load %arg5[%c4_651, %c7_652, %c0_653, %c0_654] : memref<5x11x7x128xf32, #tpu.memory_space<vmem>>, vector<1x1x7x128xf32>
    %1226 = vector.shape_cast %1225 : vector<1x1x7x128xf32> to vector<7x128xf32>
    %1227 = vector.extract_strided_slice %27 {offsets = [2, 4, 0], sizes = [1, 1, 128], strides = [1, 1, 1]} : vector<5x5x128xf32> to vector<1x1x128xf32>
    %1228 = vector.shape_cast %1227 : vector<1x1x128xf32> to vector<128xf32>
    %1229 = vector.shape_cast %1228 : vector<128xf32> to vector<1x128xf32>
    %1230 = vector.broadcast %1229 : vector<1x128xf32> to vector<7x128xf32>
    %1231 = arith.mulf %1226, %1230 : vector<7x128xf32>
    %1232 = arith.addf %1224, %1231 : vector<7x128xf32>
    %c4_655 = arith.constant 4 : index
    %c8_656 = arith.constant 8 : index
    %c0_657 = arith.constant 0 : index
    %c0_658 = arith.constant 0 : index
    %1233 = vector.load %arg5[%c4_655, %c8_656, %c0_657, %c0_658] : memref<5x11x7x128xf32, #tpu.memory_space<vmem>>, vector<1x1x7x128xf32>
    %1234 = vector.shape_cast %1233 : vector<1x1x7x128xf32> to vector<7x128xf32>
    %1235 = vector.extract_strided_slice %27 {offsets = [3, 4, 0], sizes = [1, 1, 128], strides = [1, 1, 1]} : vector<5x5x128xf32> to vector<1x1x128xf32>
    %1236 = vector.shape_cast %1235 : vector<1x1x128xf32> to vector<128xf32>
    %1237 = vector.shape_cast %1236 : vector<128xf32> to vector<1x128xf32>
    %1238 = vector.broadcast %1237 : vector<1x128xf32> to vector<7x128xf32>
    %1239 = arith.mulf %1234, %1238 : vector<7x128xf32>
    %1240 = arith.addf %1232, %1239 : vector<7x128xf32>
    %c4_659 = arith.constant 4 : index
    %c9_660 = arith.constant 9 : index
    %c0_661 = arith.constant 0 : index
    %c0_662 = arith.constant 0 : index
    %1241 = vector.load %arg5[%c4_659, %c9_660, %c0_661, %c0_662] : memref<5x11x7x128xf32, #tpu.memory_space<vmem>>, vector<1x1x7x128xf32>
    %1242 = vector.shape_cast %1241 : vector<1x1x7x128xf32> to vector<7x128xf32>
    %1243 = vector.extract_strided_slice %27 {offsets = [4, 4, 0], sizes = [1, 1, 128], strides = [1, 1, 1]} : vector<5x5x128xf32> to vector<1x1x128xf32>
    %1244 = vector.shape_cast %1243 : vector<1x1x128xf32> to vector<128xf32>
    %1245 = vector.shape_cast %1244 : vector<128xf32> to vector<1x128xf32>
    %1246 = vector.broadcast %1245 : vector<1x128xf32> to vector<7x128xf32>
    %1247 = arith.mulf %1242, %1246 : vector<7x128xf32>
    %1248 = arith.addf %1240, %1247 : vector<7x128xf32>
    %c0_663 = arith.constant 0 : index
    %c5_664 = arith.constant 5 : index
    %c0_665 = arith.constant 0 : index
    %c0_666 = arith.constant 0 : index
    %1249 = vector.load %arg4[%c0_663, %c5_664, %c0_665, %c0_666] : memref<1x7x7x128xf32, #tpu.memory_space<vmem>>, vector<1x1x7x128xf32>
    %1250 = vector.shape_cast %1249 : vector<1x1x7x128xf32> to vector<7x128xf32>
    %1251 = vector.shape_cast %1248 : vector<7x128xf32> to vector<1x1x7x128xf32>
    tpu.vector_store %arg4[%c0_663, %c5_664, %c0_665, %c0_666], %1251 {strides = array<i32>} : memref<1x7x7x128xf32, #tpu.memory_space<vmem>>, vector<1x1x7x128xf32>,
    %cst_667 = arith.constant 0.000000e+00 : f32
    %1252 = vector.broadcast %cst_667 : f32 to vector<7x128xf32>
    %c0_668 = arith.constant 0 : index
    %c6_669 = arith.constant 6 : index
    %c0_670 = arith.constant 0 : index
    %c0_671 = arith.constant 0 : index
    %1253 = vector.load %arg5[%c0_668, %c6_669, %c0_670, %c0_671] : memref<5x11x7x128xf32, #tpu.memory_space<vmem>>, vector<1x1x7x128xf32>
    %1254 = vector.shape_cast %1253 : vector<1x1x7x128xf32> to vector<7x128xf32>
    %1255 = vector.extract_strided_slice %27 {offsets = [0, 0, 0], sizes = [1, 1, 128], strides = [1, 1, 1]} : vector<5x5x128xf32> to vector<1x1x128xf32>
    %1256 = vector.shape_cast %1255 : vector<1x1x128xf32> to vector<128xf32>
    %1257 = vector.shape_cast %1256 : vector<128xf32> to vector<1x128xf32>
    %1258 = vector.broadcast %1257 : vector<1x128xf32> to vector<7x128xf32>
    %1259 = arith.mulf %1254, %1258 : vector<7x128xf32>
    %1260 = arith.addf %1252, %1259 : vector<7x128xf32>
    %c0_672 = arith.constant 0 : index
    %c7_673 = arith.constant 7 : index
    %c0_674 = arith.constant 0 : index
    %c0_675 = arith.constant 0 : index
    %1261 = vector.load %arg5[%c0_672, %c7_673, %c0_674, %c0_675] : memref<5x11x7x128xf32, #tpu.memory_space<vmem>>, vector<1x1x7x128xf32>
    %1262 = vector.shape_cast %1261 : vector<1x1x7x128xf32> to vector<7x128xf32>
    %1263 = vector.extract_strided_slice %27 {offsets = [1, 0, 0], sizes = [1, 1, 128], strides = [1, 1, 1]} : vector<5x5x128xf32> to vector<1x1x128xf32>
    %1264 = vector.shape_cast %1263 : vector<1x1x128xf32> to vector<128xf32>
    %1265 = vector.shape_cast %1264 : vector<128xf32> to vector<1x128xf32>
    %1266 = vector.broadcast %1265 : vector<1x128xf32> to vector<7x128xf32>
    %1267 = arith.mulf %1262, %1266 : vector<7x128xf32>
    %1268 = arith.addf %1260, %1267 : vector<7x128xf32>
    %c0_676 = arith.constant 0 : index
    %c8_677 = arith.constant 8 : index
    %c0_678 = arith.constant 0 : index
    %c0_679 = arith.constant 0 : index
    %1269 = vector.load %arg5[%c0_676, %c8_677, %c0_678, %c0_679] : memref<5x11x7x128xf32, #tpu.memory_space<vmem>>, vector<1x1x7x128xf32>
    %1270 = vector.shape_cast %1269 : vector<1x1x7x128xf32> to vector<7x128xf32>
    %1271 = vector.extract_strided_slice %27 {offsets = [2, 0, 0], sizes = [1, 1, 128], strides = [1, 1, 1]} : vector<5x5x128xf32> to vector<1x1x128xf32>
    %1272 = vector.shape_cast %1271 : vector<1x1x128xf32> to vector<128xf32>
    %1273 = vector.shape_cast %1272 : vector<128xf32> to vector<1x128xf32>
    %1274 = vector.broadcast %1273 : vector<1x128xf32> to vector<7x128xf32>
    %1275 = arith.mulf %1270, %1274 : vector<7x128xf32>
    %1276 = arith.addf %1268, %1275 : vector<7x128xf32>
    %c0_680 = arith.constant 0 : index
    %c9_681 = arith.constant 9 : index
    %c0_682 = arith.constant 0 : index
    %c0_683 = arith.constant 0 : index
    %1277 = vector.load %arg5[%c0_680, %c9_681, %c0_682, %c0_683] : memref<5x11x7x128xf32, #tpu.memory_space<vmem>>, vector<1x1x7x128xf32>
    %1278 = vector.shape_cast %1277 : vector<1x1x7x128xf32> to vector<7x128xf32>
    %1279 = vector.extract_strided_slice %27 {offsets = [3, 0, 0], sizes = [1, 1, 128], strides = [1, 1, 1]} : vector<5x5x128xf32> to vector<1x1x128xf32>
    %1280 = vector.shape_cast %1279 : vector<1x1x128xf32> to vector<128xf32>
    %1281 = vector.shape_cast %1280 : vector<128xf32> to vector<1x128xf32>
    %1282 = vector.broadcast %1281 : vector<1x128xf32> to vector<7x128xf32>
    %1283 = arith.mulf %1278, %1282 : vector<7x128xf32>
    %1284 = arith.addf %1276, %1283 : vector<7x128xf32>
    %c0_684 = arith.constant 0 : index
    %c10 = arith.constant 10 : index
    %c0_685 = arith.constant 0 : index
    %c0_686 = arith.constant 0 : index
    %1285 = vector.load %arg5[%c0_684, %c10, %c0_685, %c0_686] : memref<5x11x7x128xf32, #tpu.memory_space<vmem>>, vector<1x1x7x128xf32>
    %1286 = vector.shape_cast %1285 : vector<1x1x7x128xf32> to vector<7x128xf32>
    %1287 = vector.extract_strided_slice %27 {offsets = [4, 0, 0], sizes = [1, 1, 128], strides = [1, 1, 1]} : vector<5x5x128xf32> to vector<1x1x128xf32>
    %1288 = vector.shape_cast %1287 : vector<1x1x128xf32> to vector<128xf32>
    %1289 = vector.shape_cast %1288 : vector<128xf32> to vector<1x128xf32>
    %1290 = vector.broadcast %1289 : vector<1x128xf32> to vector<7x128xf32>
    %1291 = arith.mulf %1286, %1290 : vector<7x128xf32>
    %1292 = arith.addf %1284, %1291 : vector<7x128xf32>
    %c1_687 = arith.constant 1 : index
    %c6_688 = arith.constant 6 : index
    %c0_689 = arith.constant 0 : index
    %c0_690 = arith.constant 0 : index
    %1293 = vector.load %arg5[%c1_687, %c6_688, %c0_689, %c0_690] : memref<5x11x7x128xf32, #tpu.memory_space<vmem>>, vector<1x1x7x128xf32>
    %1294 = vector.shape_cast %1293 : vector<1x1x7x128xf32> to vector<7x128xf32>
    %1295 = vector.extract_strided_slice %27 {offsets = [0, 1, 0], sizes = [1, 1, 128], strides = [1, 1, 1]} : vector<5x5x128xf32> to vector<1x1x128xf32>
    %1296 = vector.shape_cast %1295 : vector<1x1x128xf32> to vector<128xf32>
    %1297 = vector.shape_cast %1296 : vector<128xf32> to vector<1x128xf32>
    %1298 = vector.broadcast %1297 : vector<1x128xf32> to vector<7x128xf32>
    %1299 = arith.mulf %1294, %1298 : vector<7x128xf32>
    %1300 = arith.addf %1292, %1299 : vector<7x128xf32>
    %c1_691 = arith.constant 1 : index
    %c7_692 = arith.constant 7 : index
    %c0_693 = arith.constant 0 : index
    %c0_694 = arith.constant 0 : index
    %1301 = vector.load %arg5[%c1_691, %c7_692, %c0_693, %c0_694] : memref<5x11x7x128xf32, #tpu.memory_space<vmem>>, vector<1x1x7x128xf32>
    %1302 = vector.shape_cast %1301 : vector<1x1x7x128xf32> to vector<7x128xf32>
    %1303 = vector.extract_strided_slice %27 {offsets = [1, 1, 0], sizes = [1, 1, 128], strides = [1, 1, 1]} : vector<5x5x128xf32> to vector<1x1x128xf32>
    %1304 = vector.shape_cast %1303 : vector<1x1x128xf32> to vector<128xf32>
    %1305 = vector.shape_cast %1304 : vector<128xf32> to vector<1x128xf32>
    %1306 = vector.broadcast %1305 : vector<1x128xf32> to vector<7x128xf32>
    %1307 = arith.mulf %1302, %1306 : vector<7x128xf32>
    %1308 = arith.addf %1300, %1307 : vector<7x128xf32>
    %c1_695 = arith.constant 1 : index
    %c8_696 = arith.constant 8 : index
    %c0_697 = arith.constant 0 : index
    %c0_698 = arith.constant 0 : index
    %1309 = vector.load %arg5[%c1_695, %c8_696, %c0_697, %c0_698] : memref<5x11x7x128xf32, #tpu.memory_space<vmem>>, vector<1x1x7x128xf32>
    %1310 = vector.shape_cast %1309 : vector<1x1x7x128xf32> to vector<7x128xf32>
    %1311 = vector.extract_strided_slice %27 {offsets = [2, 1, 0], sizes = [1, 1, 128], strides = [1, 1, 1]} : vector<5x5x128xf32> to vector<1x1x128xf32>
    %1312 = vector.shape_cast %1311 : vector<1x1x128xf32> to vector<128xf32>
    %1313 = vector.shape_cast %1312 : vector<128xf32> to vector<1x128xf32>
    %1314 = vector.broadcast %1313 : vector<1x128xf32> to vector<7x128xf32>
    %1315 = arith.mulf %1310, %1314 : vector<7x128xf32>
    %1316 = arith.addf %1308, %1315 : vector<7x128xf32>
    %c1_699 = arith.constant 1 : index
    %c9_700 = arith.constant 9 : index
    %c0_701 = arith.constant 0 : index
    %c0_702 = arith.constant 0 : index
    %1317 = vector.load %arg5[%c1_699, %c9_700, %c0_701, %c0_702] : memref<5x11x7x128xf32, #tpu.memory_space<vmem>>, vector<1x1x7x128xf32>
    %1318 = vector.shape_cast %1317 : vector<1x1x7x128xf32> to vector<7x128xf32>
    %1319 = vector.extract_strided_slice %27 {offsets = [3, 1, 0], sizes = [1, 1, 128], strides = [1, 1, 1]} : vector<5x5x128xf32> to vector<1x1x128xf32>
    %1320 = vector.shape_cast %1319 : vector<1x1x128xf32> to vector<128xf32>
    %1321 = vector.shape_cast %1320 : vector<128xf32> to vector<1x128xf32>
    %1322 = vector.broadcast %1321 : vector<1x128xf32> to vector<7x128xf32>
    %1323 = arith.mulf %1318, %1322 : vector<7x128xf32>
    %1324 = arith.addf %1316, %1323 : vector<7x128xf32>
    %c1_703 = arith.constant 1 : index
    %c10_704 = arith.constant 10 : index
    %c0_705 = arith.constant 0 : index
    %c0_706 = arith.constant 0 : index
    %1325 = vector.load %arg5[%c1_703, %c10_704, %c0_705, %c0_706] : memref<5x11x7x128xf32, #tpu.memory_space<vmem>>, vector<1x1x7x128xf32>
    %1326 = vector.shape_cast %1325 : vector<1x1x7x128xf32> to vector<7x128xf32>
    %1327 = vector.extract_strided_slice %27 {offsets = [4, 1, 0], sizes = [1, 1, 128], strides = [1, 1, 1]} : vector<5x5x128xf32> to vector<1x1x128xf32>
    %1328 = vector.shape_cast %1327 : vector<1x1x128xf32> to vector<128xf32>
    %1329 = vector.shape_cast %1328 : vector<128xf32> to vector<1x128xf32>
    %1330 = vector.broadcast %1329 : vector<1x128xf32> to vector<7x128xf32>
    %1331 = arith.mulf %1326, %1330 : vector<7x128xf32>
    %1332 = arith.addf %1324, %1331 : vector<7x128xf32>
    %c2_707 = arith.constant 2 : index
    %c6_708 = arith.constant 6 : index
    %c0_709 = arith.constant 0 : index
    %c0_710 = arith.constant 0 : index
    %1333 = vector.load %arg5[%c2_707, %c6_708, %c0_709, %c0_710] : memref<5x11x7x128xf32, #tpu.memory_space<vmem>>, vector<1x1x7x128xf32>
    %1334 = vector.shape_cast %1333 : vector<1x1x7x128xf32> to vector<7x128xf32>
    %1335 = vector.extract_strided_slice %27 {offsets = [0, 2, 0], sizes = [1, 1, 128], strides = [1, 1, 1]} : vector<5x5x128xf32> to vector<1x1x128xf32>
    %1336 = vector.shape_cast %1335 : vector<1x1x128xf32> to vector<128xf32>
    %1337 = vector.shape_cast %1336 : vector<128xf32> to vector<1x128xf32>
    %1338 = vector.broadcast %1337 : vector<1x128xf32> to vector<7x128xf32>
    %1339 = arith.mulf %1334, %1338 : vector<7x128xf32>
    %1340 = arith.addf %1332, %1339 : vector<7x128xf32>
    %c2_711 = arith.constant 2 : index
    %c7_712 = arith.constant 7 : index
    %c0_713 = arith.constant 0 : index
    %c0_714 = arith.constant 0 : index
    %1341 = vector.load %arg5[%c2_711, %c7_712, %c0_713, %c0_714] : memref<5x11x7x128xf32, #tpu.memory_space<vmem>>, vector<1x1x7x128xf32>
    %1342 = vector.shape_cast %1341 : vector<1x1x7x128xf32> to vector<7x128xf32>
    %1343 = vector.extract_strided_slice %27 {offsets = [1, 2, 0], sizes = [1, 1, 128], strides = [1, 1, 1]} : vector<5x5x128xf32> to vector<1x1x128xf32>
    %1344 = vector.shape_cast %1343 : vector<1x1x128xf32> to vector<128xf32>
    %1345 = vector.shape_cast %1344 : vector<128xf32> to vector<1x128xf32>
    %1346 = vector.broadcast %1345 : vector<1x128xf32> to vector<7x128xf32>
    %1347 = arith.mulf %1342, %1346 : vector<7x128xf32>
    %1348 = arith.addf %1340, %1347 : vector<7x128xf32>
    %c2_715 = arith.constant 2 : index
    %c8_716 = arith.constant 8 : index
    %c0_717 = arith.constant 0 : index
    %c0_718 = arith.constant 0 : index
    %1349 = vector.load %arg5[%c2_715, %c8_716, %c0_717, %c0_718] : memref<5x11x7x128xf32, #tpu.memory_space<vmem>>, vector<1x1x7x128xf32>
    %1350 = vector.shape_cast %1349 : vector<1x1x7x128xf32> to vector<7x128xf32>
    %1351 = vector.extract_strided_slice %27 {offsets = [2, 2, 0], sizes = [1, 1, 128], strides = [1, 1, 1]} : vector<5x5x128xf32> to vector<1x1x128xf32>
    %1352 = vector.shape_cast %1351 : vector<1x1x128xf32> to vector<128xf32>
    %1353 = vector.shape_cast %1352 : vector<128xf32> to vector<1x128xf32>
    %1354 = vector.broadcast %1353 : vector<1x128xf32> to vector<7x128xf32>
    %1355 = arith.mulf %1350, %1354 : vector<7x128xf32>
    %1356 = arith.addf %1348, %1355 : vector<7x128xf32>
    %c2_719 = arith.constant 2 : index
    %c9_720 = arith.constant 9 : index
    %c0_721 = arith.constant 0 : index
    %c0_722 = arith.constant 0 : index
    %1357 = vector.load %arg5[%c2_719, %c9_720, %c0_721, %c0_722] : memref<5x11x7x128xf32, #tpu.memory_space<vmem>>, vector<1x1x7x128xf32>
    %1358 = vector.shape_cast %1357 : vector<1x1x7x128xf32> to vector<7x128xf32>
    %1359 = vector.extract_strided_slice %27 {offsets = [3, 2, 0], sizes = [1, 1, 128], strides = [1, 1, 1]} : vector<5x5x128xf32> to vector<1x1x128xf32>
    %1360 = vector.shape_cast %1359 : vector<1x1x128xf32> to vector<128xf32>
    %1361 = vector.shape_cast %1360 : vector<128xf32> to vector<1x128xf32>
    %1362 = vector.broadcast %1361 : vector<1x128xf32> to vector<7x128xf32>
    %1363 = arith.mulf %1358, %1362 : vector<7x128xf32>
    %1364 = arith.addf %1356, %1363 : vector<7x128xf32>
    %c2_723 = arith.constant 2 : index
    %c10_724 = arith.constant 10 : index
    %c0_725 = arith.constant 0 : index
    %c0_726 = arith.constant 0 : index
    %1365 = vector.load %arg5[%c2_723, %c10_724, %c0_725, %c0_726] : memref<5x11x7x128xf32, #tpu.memory_space<vmem>>, vector<1x1x7x128xf32>
    %1366 = vector.shape_cast %1365 : vector<1x1x7x128xf32> to vector<7x128xf32>
    %1367 = vector.extract_strided_slice %27 {offsets = [4, 2, 0], sizes = [1, 1, 128], strides = [1, 1, 1]} : vector<5x5x128xf32> to vector<1x1x128xf32>
    %1368 = vector.shape_cast %1367 : vector<1x1x128xf32> to vector<128xf32>
    %1369 = vector.shape_cast %1368 : vector<128xf32> to vector<1x128xf32>
    %1370 = vector.broadcast %1369 : vector<1x128xf32> to vector<7x128xf32>
    %1371 = arith.mulf %1366, %1370 : vector<7x128xf32>
    %1372 = arith.addf %1364, %1371 : vector<7x128xf32>
    %c3_727 = arith.constant 3 : index
    %c6_728 = arith.constant 6 : index
    %c0_729 = arith.constant 0 : index
    %c0_730 = arith.constant 0 : index
    %1373 = vector.load %arg5[%c3_727, %c6_728, %c0_729, %c0_730] : memref<5x11x7x128xf32, #tpu.memory_space<vmem>>, vector<1x1x7x128xf32>
    %1374 = vector.shape_cast %1373 : vector<1x1x7x128xf32> to vector<7x128xf32>
    %1375 = vector.extract_strided_slice %27 {offsets = [0, 3, 0], sizes = [1, 1, 128], strides = [1, 1, 1]} : vector<5x5x128xf32> to vector<1x1x128xf32>
    %1376 = vector.shape_cast %1375 : vector<1x1x128xf32> to vector<128xf32>
    %1377 = vector.shape_cast %1376 : vector<128xf32> to vector<1x128xf32>
    %1378 = vector.broadcast %1377 : vector<1x128xf32> to vector<7x128xf32>
    %1379 = arith.mulf %1374, %1378 : vector<7x128xf32>
    %1380 = arith.addf %1372, %1379 : vector<7x128xf32>
    %c3_731 = arith.constant 3 : index
    %c7_732 = arith.constant 7 : index
    %c0_733 = arith.constant 0 : index
    %c0_734 = arith.constant 0 : index
    %1381 = vector.load %arg5[%c3_731, %c7_732, %c0_733, %c0_734] : memref<5x11x7x128xf32, #tpu.memory_space<vmem>>, vector<1x1x7x128xf32>
    %1382 = vector.shape_cast %1381 : vector<1x1x7x128xf32> to vector<7x128xf32>
    %1383 = vector.extract_strided_slice %27 {offsets = [1, 3, 0], sizes = [1, 1, 128], strides = [1, 1, 1]} : vector<5x5x128xf32> to vector<1x1x128xf32>
    %1384 = vector.shape_cast %1383 : vector<1x1x128xf32> to vector<128xf32>
    %1385 = vector.shape_cast %1384 : vector<128xf32> to vector<1x128xf32>
    %1386 = vector.broadcast %1385 : vector<1x128xf32> to vector<7x128xf32>
    %1387 = arith.mulf %1382, %1386 : vector<7x128xf32>
    %1388 = arith.addf %1380, %1387 : vector<7x128xf32>
    %c3_735 = arith.constant 3 : index
    %c8_736 = arith.constant 8 : index
    %c0_737 = arith.constant 0 : index
    %c0_738 = arith.constant 0 : index
    %1389 = vector.load %arg5[%c3_735, %c8_736, %c0_737, %c0_738] : memref<5x11x7x128xf32, #tpu.memory_space<vmem>>, vector<1x1x7x128xf32>
    %1390 = vector.shape_cast %1389 : vector<1x1x7x128xf32> to vector<7x128xf32>
    %1391 = vector.extract_strided_slice %27 {offsets = [2, 3, 0], sizes = [1, 1, 128], strides = [1, 1, 1]} : vector<5x5x128xf32> to vector<1x1x128xf32>
    %1392 = vector.shape_cast %1391 : vector<1x1x128xf32> to vector<128xf32>
    %1393 = vector.shape_cast %1392 : vector<128xf32> to vector<1x128xf32>
    %1394 = vector.broadcast %1393 : vector<1x128xf32> to vector<7x128xf32>
    %1395 = arith.mulf %1390, %1394 : vector<7x128xf32>
    %1396 = arith.addf %1388, %1395 : vector<7x128xf32>
    %c3_739 = arith.constant 3 : index
    %c9_740 = arith.constant 9 : index
    %c0_741 = arith.constant 0 : index
    %c0_742 = arith.constant 0 : index
    %1397 = vector.load %arg5[%c3_739, %c9_740, %c0_741, %c0_742] : memref<5x11x7x128xf32, #tpu.memory_space<vmem>>, vector<1x1x7x128xf32>
    %1398 = vector.shape_cast %1397 : vector<1x1x7x128xf32> to vector<7x128xf32>
    %1399 = vector.extract_strided_slice %27 {offsets = [3, 3, 0], sizes = [1, 1, 128], strides = [1, 1, 1]} : vector<5x5x128xf32> to vector<1x1x128xf32>
    %1400 = vector.shape_cast %1399 : vector<1x1x128xf32> to vector<128xf32>
    %1401 = vector.shape_cast %1400 : vector<128xf32> to vector<1x128xf32>
    %1402 = vector.broadcast %1401 : vector<1x128xf32> to vector<7x128xf32>
    %1403 = arith.mulf %1398, %1402 : vector<7x128xf32>
    %1404 = arith.addf %1396, %1403 : vector<7x128xf32>
    %c3_743 = arith.constant 3 : index
    %c10_744 = arith.constant 10 : index
    %c0_745 = arith.constant 0 : index
    %c0_746 = arith.constant 0 : index
    %1405 = vector.load %arg5[%c3_743, %c10_744, %c0_745, %c0_746] : memref<5x11x7x128xf32, #tpu.memory_space<vmem>>, vector<1x1x7x128xf32>
    %1406 = vector.shape_cast %1405 : vector<1x1x7x128xf32> to vector<7x128xf32>
    %1407 = vector.extract_strided_slice %27 {offsets = [4, 3, 0], sizes = [1, 1, 128], strides = [1, 1, 1]} : vector<5x5x128xf32> to vector<1x1x128xf32>
    %1408 = vector.shape_cast %1407 : vector<1x1x128xf32> to vector<128xf32>
    %1409 = vector.shape_cast %1408 : vector<128xf32> to vector<1x128xf32>
    %1410 = vector.broadcast %1409 : vector<1x128xf32> to vector<7x128xf32>
    %1411 = arith.mulf %1406, %1410 : vector<7x128xf32>
    %1412 = arith.addf %1404, %1411 : vector<7x128xf32>
    %c4_747 = arith.constant 4 : index
    %c6_748 = arith.constant 6 : index
    %c0_749 = arith.constant 0 : index
    %c0_750 = arith.constant 0 : index
    %1413 = vector.load %arg5[%c4_747, %c6_748, %c0_749, %c0_750] : memref<5x11x7x128xf32, #tpu.memory_space<vmem>>, vector<1x1x7x128xf32>
    %1414 = vector.shape_cast %1413 : vector<1x1x7x128xf32> to vector<7x128xf32>
    %1415 = vector.extract_strided_slice %27 {offsets = [0, 4, 0], sizes = [1, 1, 128], strides = [1, 1, 1]} : vector<5x5x128xf32> to vector<1x1x128xf32>
    %1416 = vector.shape_cast %1415 : vector<1x1x128xf32> to vector<128xf32>
    %1417 = vector.shape_cast %1416 : vector<128xf32> to vector<1x128xf32>
    %1418 = vector.broadcast %1417 : vector<1x128xf32> to vector<7x128xf32>
    %1419 = arith.mulf %1414, %1418 : vector<7x128xf32>
    %1420 = arith.addf %1412, %1419 : vector<7x128xf32>
    %c4_751 = arith.constant 4 : index
    %c7_752 = arith.constant 7 : index
    %c0_753 = arith.constant 0 : index
    %c0_754 = arith.constant 0 : index
    %1421 = vector.load %arg5[%c4_751, %c7_752, %c0_753, %c0_754] : memref<5x11x7x128xf32, #tpu.memory_space<vmem>>, vector<1x1x7x128xf32>
    %1422 = vector.shape_cast %1421 : vector<1x1x7x128xf32> to vector<7x128xf32>
    %1423 = vector.extract_strided_slice %27 {offsets = [1, 4, 0], sizes = [1, 1, 128], strides = [1, 1, 1]} : vector<5x5x128xf32> to vector<1x1x128xf32>
    %1424 = vector.shape_cast %1423 : vector<1x1x128xf32> to vector<128xf32>
    %1425 = vector.shape_cast %1424 : vector<128xf32> to vector<1x128xf32>
    %1426 = vector.broadcast %1425 : vector<1x128xf32> to vector<7x128xf32>
    %1427 = arith.mulf %1422, %1426 : vector<7x128xf32>
    %1428 = arith.addf %1420, %1427 : vector<7x128xf32>
    %c4_755 = arith.constant 4 : index
    %c8_756 = arith.constant 8 : index
    %c0_757 = arith.constant 0 : index
    %c0_758 = arith.constant 0 : index
    %1429 = vector.load %arg5[%c4_755, %c8_756, %c0_757, %c0_758] : memref<5x11x7x128xf32, #tpu.memory_space<vmem>>, vector<1x1x7x128xf32>
    %1430 = vector.shape_cast %1429 : vector<1x1x7x128xf32> to vector<7x128xf32>
    %1431 = vector.extract_strided_slice %27 {offsets = [2, 4, 0], sizes = [1, 1, 128], strides = [1, 1, 1]} : vector<5x5x128xf32> to vector<1x1x128xf32>
    %1432 = vector.shape_cast %1431 : vector<1x1x128xf32> to vector<128xf32>
    %1433 = vector.shape_cast %1432 : vector<128xf32> to vector<1x128xf32>
    %1434 = vector.broadcast %1433 : vector<1x128xf32> to vector<7x128xf32>
    %1435 = arith.mulf %1430, %1434 : vector<7x128xf32>
    %1436 = arith.addf %1428, %1435 : vector<7x128xf32>
    %c4_759 = arith.constant 4 : index
    %c9_760 = arith.constant 9 : index
    %c0_761 = arith.constant 0 : index
    %c0_762 = arith.constant 0 : index
    %1437 = vector.load %arg5[%c4_759, %c9_760, %c0_761, %c0_762] : memref<5x11x7x128xf32, #tpu.memory_space<vmem>>, vector<1x1x7x128xf32>
    %1438 = vector.shape_cast %1437 : vector<1x1x7x128xf32> to vector<7x128xf32>
    %1439 = vector.extract_strided_slice %27 {offsets = [3, 4, 0], sizes = [1, 1, 128], strides = [1, 1, 1]} : vector<5x5x128xf32> to vector<1x1x128xf32>
    %1440 = vector.shape_cast %1439 : vector<1x1x128xf32> to vector<128xf32>
    %1441 = vector.shape_cast %1440 : vector<128xf32> to vector<1x128xf32>
    %1442 = vector.broadcast %1441 : vector<1x128xf32> to vector<7x128xf32>
    %1443 = arith.mulf %1438, %1442 : vector<7x128xf32>
    %1444 = arith.addf %1436, %1443 : vector<7x128xf32>
    %c4_763 = arith.constant 4 : index
    %c10_764 = arith.constant 10 : index
    %c0_765 = arith.constant 0 : index
    %c0_766 = arith.constant 0 : index
    %1445 = vector.load %arg5[%c4_763, %c10_764, %c0_765, %c0_766] : memref<5x11x7x128xf32, #tpu.memory_space<vmem>>, vector<1x1x7x128xf32>
    %1446 = vector.shape_cast %1445 : vector<1x1x7x128xf32> to vector<7x128xf32>
    %1447 = vector.extract_strided_slice %27 {offsets = [4, 4, 0], sizes = [1, 1, 128], strides = [1, 1, 1]} : vector<5x5x128xf32> to vector<1x1x128xf32>
    %1448 = vector.shape_cast %1447 : vector<1x1x128xf32> to vector<128xf32>
    %1449 = vector.shape_cast %1448 : vector<128xf32> to vector<1x128xf32>
    %1450 = vector.broadcast %1449 : vector<1x128xf32> to vector<7x128xf32>
    %1451 = arith.mulf %1446, %1450 : vector<7x128xf32>
    %1452 = arith.addf %1444, %1451 : vector<7x128xf32>
    %c0_767 = arith.constant 0 : index
    %c6_768 = arith.constant 6 : index
    %c0_769 = arith.constant 0 : index
    %c0_770 = arith.constant 0 : index
    %1453 = vector.load %arg4[%c0_767, %c6_768, %c0_769, %c0_770] : memref<1x7x7x128xf32, #tpu.memory_space<vmem>>, vector<1x1x7x128xf32>
    %1454 = vector.shape_cast %1453 : vector<1x1x7x128xf32> to vector<7x128xf32>
    %1455 = vector.shape_cast %1452 : vector<7x128xf32> to vector<1x1x7x128xf32>
    tpu.vector_store %arg4[%c0_767, %c6_768, %c0_769, %c0_770], %1455 {strides = array<i32>} : memref<1x7x7x128xf32, #tpu.memory_space<vmem>>, vector<1x1x7x128xf32>,
    return
  }
  func.func @transform_0(%arg0: i32, %arg1: i32) -> (i32, i32, i32, i32) {
    %c0_i32 = arith.constant 0 : i32
    %c0_i32_0 = arith.constant 0 : i32
    %c0_i32_1 = arith.constant 0 : i32
    return %arg0, %c0_i32, %c0_i32_0, %arg1 : i32, i32, i32, i32
  }
  func.func @transform_1(%arg0: i32, %arg1: i32) -> (i32, i32, i32) {
    %c0_i32 = arith.constant 0 : i32
    %c0_i32_0 = arith.constant 0 : i32
    %c0_i32_1 = arith.constant 0 : i32
    return %c0_i32, %c0_i32_0, %arg1 : i32, i32, i32
  }
  func.func @transform_2(%arg0: i32, %arg1: i32) -> (i32, i32, i32, i32) {
    %c0_i32 = arith.constant 0 : i32
    %c0_i32_0 = arith.constant 0 : i32
    %c0_i32_1 = arith.constant 0 : i32
    return %arg0, %c0_i32, %c0_i32_0, %arg1 : i32, i32, i32, i32
  }
}

</mosaic_0001>

<llo_original>
// kernel: tpu_custom_call.1
$region0: #{tpu_custom_call.1}
  #allocation0 [shape = 'u32[]', space=smem, size = 0x4, offset = 0x4, fixed_abs, tag = 'smem constant byte address 0x4 - core index']
  #allocation1 [shape = 'u32[144,128]{1,0:T(1,128)}', space=vmem, size = 0x12000, scoped, tag = 'internal scratch']
  #allocation2 [shape = 'f32[5,11,7,128]{3,2,1,0:T(8,128)}', space=vmem, size = 0x37000, scoped, tag = 'scratch operand']
  %s0 = inlined_call_operand.vmem [shape: f32[1,7,7,256], index: 0, kind: input, shape index: {}]
  %s1 = inlined_call_operand.vmem [shape: f32[5,5,256], index: 1, kind: input, shape index: {}]
  %s2 = inlined_call_operand.vmem [shape: f32[1,7,7,256], index: 2, kind: output, shape index: {}]
  %s3 = sld [smem:[#allocation0]]
  $region151: #{tpu_custom_call.1} parent=0
    _
  %s5 = ssub.s32 1, %s3
  %s6 = scalar_select 0, %s5, %s3
  $region1: #{tpu_custom_call.1} parent=0
    #allocation3 [shape = 'u8[57344]{0}', space=vmem, size = 0xe000, scoped, tag = 'input window, operand 0']
    #allocation4 [shape = 'u8[40960]{0}', space=vmem, size = 0xa000, scoped, tag = 'input window, operand 1']
    #allocation5 [shape = 'u8[57344]{0}', space=vmem, size = 0xe000, scoped, tag = 'output window, operand 0']
    loop: start=0, step=1, limit=4
    $region2: #{tpu_custom_call.1} parent=1 // loop_pre_header
      _
    $region3: #{tpu_custom_call.1} parent=1 // loop_header
      %s8 = sphi 0, %s12
      %p9 = scmp.ge.s32.totalorder %s8, 4
      %s15 = sphi 0, %s27
      %s16 = sphi 0, %s23
      %s17 = sphi 0, %s15
      %s18 = sphi 0, %s16
      %s19 = sphi 0, %s17
      %s20 = sphi 0, %s18
      %s32 = sphi 0, %s34
      %s35 = sphi 0, %s32
      %s36 = sphi 0, %s35
      %s52 = sphi 0, %s36
      %s58 = sphi 0, %s60
      %s61 = sphi 0, %s58
      %s62 = sphi 0, %s61
      %s78 = sphi 0, %s62
      %s86 = sphi 0, %s88
      %s89 = sphi 0, %s86
      %s90 = sphi 0, %s89
      %s106 = sphi 0, %s90
    $region4: #{tpu_custom_call.1} parent=1 // loop_header_branch
      %11 = sbr.rel (%p9) target = $region8
    $region5: #{tpu_custom_call.1} parent=1 // loop_body
      %s13 = ssub.s32 %s8, 1
      %s14 = ssub.s32 %s8, 2
      %s21 = sadd.s32 1, %s16
      %p22 = scmp.ge.s32.totalorder %s21, 2
      %s23 = scalar_select %p22, 0, %s21
      %s24 = sadd.s32 1, %s15
      %s25 = scalar_select %p22, %s24, %s15
      %p26 = scmp.ge.s32.totalorder %s25, 1
      %s27 = scalar_select %p26, 0, %s25
      %s28 = ssub.s32 %s15, %s27
      %s29 = ssub.s32 %s16, %s23
      %s30 = sor.u32 %s28, %s29
      %p31 = scmp.eq.s32.totalorder %s30, 0
      %s33 = sadd.s32 %s32, 1
      %s34 = scalar_select %p31, %s32, %s33
      %p37 = pneg %p31
      %p38 = scmp.eq.s32.totalorder %s8, 1
      %p39 = por %p37, %p38
      %p40 = scmp.ne.s32.totalorder %s32, %s35
      %p41 = scmp.eq.s32.totalorder %s8, 0
      %p42 = por %p40, %p41
      %p43 = scmp.ne.s32.totalorder %s32, %s35
      %p44 = scmp.eq.s32.totalorder %s13, 1
      %p45 = por %p43, %p44
      %p46 = scmp.ne.s32.totalorder %s35, %s36
      %p47 = scmp.eq.s32.totalorder %s13, 0
      %p48 = por %p46, %p47
      %p49 = scmp.ne.s32.totalorder %s35, %s36
      %p50 = scmp.eq.s32.totalorder %s14, 1
      %p51 = por %p49, %p50
      %p53 = scmp.ne.s32.totalorder %s36, %s52
      %p54 = scmp.eq.s32.totalorder %s14, 0
      %p55 = por %p53, %p54
      %s56 = ssub.s32 %s16, %s23
      %p57 = scmp.eq.s32.totalorder %s56, 0
      %s59 = sadd.s32 %s58, 1
      %s60 = scalar_select %p57, %s58, %s59
      %p63 = pneg %p57
      %p64 = scmp.eq.s32.totalorder %s8, 1
      %p65 = por %p63, %p64
      %p66 = scmp.ne.s32.totalorder %s58, %s61
      %p67 = scmp.eq.s32.totalorder %s8, 0
      %p68 = por %p66, %p67
      %p69 = scmp.ne.s32.totalorder %s58, %s61
      %p70 = scmp.eq.s32.totalorder %s13, 1
      %p71 = por %p69, %p70
      %p72 = scmp.ne.s32.totalorder %s61, %s62
      %p73 = scmp.eq.s32.totalorder %s13, 0
      %p74 = por %p72, %p73
      %p75 = scmp.ne.s32.totalorder %s61, %s62
      %p76 = scmp.eq.s32.totalorder %s14, 1
      %p77 = por %p75, %p76
      %p79 = scmp.ne.s32.totalorder %s62, %s78
      %p80 = scmp.eq.s32.totalorder %s14, 0
      %p81 = por %p79, %p80
      %s82 = ssub.s32 %s15, %s27
      %s83 = ssub.s32 %s16, %s23
      %s84 = sor.u32 %s82, %s83
      %p85 = scmp.eq.s32.totalorder %s84, 0
      %s87 = sadd.s32 %s86, 1
      %s88 = scalar_select %p85, %s86, %s87
      %p91 = pneg %p85
      %p92 = scmp.eq.s32.totalorder %s8, 1
      %p93 = por %p91, %p92
      %p94 = scmp.ne.s32.totalorder %s86, %s89
      %p95 = scmp.eq.s32.totalorder %s8, 0
      %p96 = por %p94, %p95
      %p97 = scmp.ne.s32.totalorder %s86, %s89
      %p98 = scmp.eq.s32.totalorder %s13, 1
      %p99 = por %p97, %p98
      %p100 = scmp.ne.s32.totalorder %s89, %s90
      %p101 = scmp.eq.s32.totalorder %s13, 0
      %p102 = por %p100, %p101
      %p103 = scmp.ne.s32.totalorder %s89, %s90
      %p104 = scmp.eq.s32.totalorder %s14, 1
      %p105 = por %p103, %p104
      %p107 = scmp.ne.s32.totalorder %s90, %s106
      %p108 = scmp.eq.s32.totalorder %s14, 0
      %p109 = por %p107, %p108
      %p110 = scmp.le.s32.totalorder 1, %s8
      %p111 = scmp.lt.s32.totalorder %s8, 3
      %p112 = pnand %p110, %p111
      %p113 = pneg %p112
      // Predicated region
      $region9: #{tpu_custom_call.1} parent=5 // pred_check
        _
      $region10: #{tpu_custom_call.1} parent=5 // pred_check_branch
        %115 = sbr.rel (%p112) target = $region12
      $region11: #{tpu_custom_call.1} parent=5 // pred_region
        %s116 = ssub.s32 %s8, 1
      $region12: #{tpu_custom_call.1} parent=5 // pred_fallthru
        _
      %p117 = scmp.lt.s32.totalorder %s8, 2
      // Predicated region
      $region13: #{tpu_custom_call.1} parent=5 // pred_check
        %p118 = pneg %p117
      $region14: #{tpu_custom_call.1} parent=5 // pred_check_branch
        %120 = sbr.rel (%p118) target = $region16
      $region15: #{tpu_custom_call.1} parent=5 // pred_region
        // Predicated region
        $region17: #{tpu_custom_call.1} parent=15 // pred_check
          %p121 = pneg %p42
        $region18: #{tpu_custom_call.1} parent=15 // pred_check_branch
          %123 = sbr.rel (%p121) target = $region20
        $region19: #{tpu_custom_call.1} parent=15 // pred_region
          %s124 = sand.u32 %s32, 1
          %s125 = sand.u32 %s32, 1
          %s126 = smul.addr %s125, 56
          %s127 = scalar_lea.vmem [#allocation3], %s126
          %s128 = smul.addr %s15, 14
          %s129 = sadd.s32 %s16, %s128
          %s130 = smul.addr %s129, 8
          %s131 = scalar_lea.vmem %s0, %s130
          // Predicated region
          $region21: #{tpu_custom_call.1} parent=19 // pred_check
            _
          $region22: #{tpu_custom_call.1} parent=19 // pred_check_branch
            %133 = sbr.rel (0) target = $region24
          $region23: #{tpu_custom_call.1} parent=19 // pred_region
            // Predicated region
            $region25: #{tpu_custom_call.1} parent=23 // pred_check
              _
            $region26: #{tpu_custom_call.1} parent=23 // pred_check_branch
              %135 = sbr.rel (0) target = $region28
            $region27: #{tpu_custom_call.1} parent=23 // pred_region
              // Predicated region
              $region40: #{tpu_custom_call.1} parent=27 // pred_check
                _
              $region41: #{tpu_custom_call.1} parent=27 // pred_check_branch
                %162 = sbr.rel (0) target = $region43
              $region42: #{tpu_custom_call.1} parent=27 // pred_region
                loop: start=0, step=1, limit=1
                $region44: #{tpu_custom_call.1} parent=42 // loop_pre_header
                  _
                $region45: #{tpu_custom_call.1} parent=42 // loop_header
                  %s164 = sphi 0, %s168
                  %p165 = scmp.ge.s32.totalorder %s164, 1
                  %s169 = sphi %s131, %s131
                  %s170 = sphi %s127, %s127
                $region46: #{tpu_custom_call.1} parent=42 // loop_header_branch
                  %167 = sbr.rel (%p165) target = $region50
                $region47: #{tpu_custom_call.1} parent=42 // loop_body
                  %v171 = vld [vmem:[%s169] sm:$0xff]
                  %172 = vst [vmem:[%s170] sm:$0xff] %v171
                  %v173 = vld [vmem:[%s169 + $0x10] sm:$0xff]
                  %174 = vst [vmem:[%s170 + $0x8] sm:$0xff] %v173
                  %v175 = vld [vmem:[%s169 + $0x20] sm:$0xff]
                  %176 = vst [vmem:[%s170 + $0x10] sm:$0xff] %v175
                  %v177 = vld [vmem:[%s169 + $0x30] sm:$0xff]
                  %178 = vst [vmem:[%s170 + $0x18] sm:$0xff] %v177
                  %v179 = vld [vmem:[%s169 + $0x40] sm:$0xff]
                  %180 = vst [vmem:[%s170 + $0x20] sm:$0xff] %v179
                  %v181 = vld [vmem:[%s169 + $0x50] sm:$0xff]
                  %182 = vst [vmem:[%s170 + $0x28] sm:$0xff] %v181
                  %v183 = vld [vmem:[%s169 + $0x60] sm:$0xff]
                  %184 = vst [vmem:[%s170 + $0x30] sm:$0xff] %v183
                $region48: #{tpu_custom_call.1} parent=42 // loop_footer
                  %s168 = sadd.s32 1, %s164
                $region49: #{tpu_custom_call.1} parent=42 // loop_footer_branch
                  %163 = sbr.rel target = $region45
                $region50: #{tpu_custom_call.1} parent=42 // loop_exit
                  _
              $region43: #{tpu_custom_call.1} parent=27 // pred_fallthru
                _
              // Predicated region
              $region51: #{tpu_custom_call.1} parent=27 // pred_check
                _
              $region52: #{tpu_custom_call.1} parent=27 // pred_check_branch
                %186 = sbr.rel target = $region54
              $region53: #{tpu_custom_call.1} parent=27 // pred_region
                _
              $region54: #{tpu_custom_call.1} parent=27 // pred_fallthru
                _
            $region28: #{tpu_custom_call.1} parent=23 // pred_fallthru
              _
            // Predicated region
            $region29: #{tpu_custom_call.1} parent=23 // pred_check
              _
            $region30: #{tpu_custom_call.1} parent=23 // pred_check_branch
              %137 = sbr.rel target = $region32
            $region31: #{tpu_custom_call.1} parent=23 // pred_region
              loop: start=0, step=1, limit=1
              $region33: #{tpu_custom_call.1} parent=31 // loop_pre_header
                _
              $region34: #{tpu_custom_call.1} parent=31 // loop_header
                %s140 = sphi 0, %s144
                %p141 = scmp.ge.s32.totalorder %s140, 1
                %s145 = sphi %s131, %s131
                %s146 = sphi %s127, %s127
              $region35: #{tpu_custom_call.1} parent=31 // loop_header_branch
                %143 = sbr.rel (%p141) target = $region39
              $region36: #{tpu_custom_call.1} parent=31 // loop_body
                %v147 = vld [vmem:[%s145] sm:$0xff]
                %148 = vst [vmem:[%s146] sm:$0xff] %v147
                %v149 = vld [vmem:[%s145 + $0x10] sm:$0xff]
                %150 = vst [vmem:[%s146 + $0x8] sm:$0xff] %v149
                %v151 = vld [vmem:[%s145 + $0x20] sm:$0xff]
                %152 = vst [vmem:[%s146 + $0x10] sm:$0xff] %v151
                %v153 = vld [vmem:[%s145 + $0x30] sm:$0xff]
                %154 = vst [vmem:[%s146 + $0x18] sm:$0xff] %v153
                %v155 = vld [vmem:[%s145 + $0x40] sm:$0xff]
                %156 = vst [vmem:[%s146 + $0x20] sm:$0xff] %v155
                %v157 = vld [vmem:[%s145 + $0x50] sm:$0xff]
                %158 = vst [vmem:[%s146 + $0x28] sm:$0xff] %v157
                %v159 = vld [vmem:[%s145 + $0x60] sm:$0xff]
                %160 = vst [vmem:[%s146 + $0x30] sm:$0xff] %v159
              $region37: #{tpu_custom_call.1} parent=31 // loop_footer
                %s144 = sadd.s32 1, %s140
              $region38: #{tpu_custom_call.1} parent=31 // loop_footer_branch
                %139 = sbr.rel target = $region34
              $region39: #{tpu_custom_call.1} parent=31 // loop_exit
                _
            $region32: #{tpu_custom_call.1} parent=23 // pred_fallthru
              _
          $region24: #{tpu_custom_call.1} parent=19 // pred_fallthru
            _
          %187 = vnop
        $region20: #{tpu_custom_call.1} parent=15 // pred_fallthru
          _
        // Predicated region
        $region55: #{tpu_custom_call.1} parent=15 // pred_check
          %p188 = pneg %p68
        $region56: #{tpu_custom_call.1} parent=15 // pred_check_branch
          %190 = sbr.rel (%p188) target = $region58
        $region57: #{tpu_custom_call.1} parent=15 // pred_region
          %s191 = sand.u32 %s58, 1
          %s192 = sand.u32 %s58, 1
          %s193 = smul.addr %s192, 40
          %s194 = scalar_lea.vmem [#allocation4], %s193
          %s195 = smul.addr %s16, 8
          %s196 = scalar_lea.vmem %s1, %s195
          // Predicated region
          $region59: #{tpu_custom_call.1} parent=57 // pred_check
            _
          $region60: #{tpu_custom_call.1} parent=57 // pred_check_branch
            %198 = sbr.rel (0) target = $region62
          $region61: #{tpu_custom_call.1} parent=57 // pred_region
            // Predicated region
            $region63: #{tpu_custom_call.1} parent=61 // pred_check
              _
            $region64: #{tpu_custom_call.1} parent=61 // pred_check_branch
              %200 = sbr.rel (0) target = $region66
            $region65: #{tpu_custom_call.1} parent=61 // pred_region
              // Predicated region
              $region78: #{tpu_custom_call.1} parent=65 // pred_check
                _
              $region79: #{tpu_custom_call.1} parent=65 // pred_check_branch
                %223 = sbr.rel (0) target = $region81
              $region80: #{tpu_custom_call.1} parent=65 // pred_region
                loop: start=0, step=1, limit=1
                $region82: #{tpu_custom_call.1} parent=80 // loop_pre_header
                  _
                $region83: #{tpu_custom_call.1} parent=80 // loop_header
                  %s225 = sphi 0, %s229
                  %p226 = scmp.ge.s32.totalorder %s225, 1
                  %s230 = sphi %s196, %s196
                  %s231 = sphi %s194, %s194
                $region84: #{tpu_custom_call.1} parent=80 // loop_header_branch
                  %228 = sbr.rel (%p226) target = $region88
                $region85: #{tpu_custom_call.1} parent=80 // loop_body
                  %v232 = vld [vmem:[%s230] sm:$0xff]
                  %233 = vst [vmem:[%s231] sm:$0xff] %v232
                  %v234 = vld [vmem:[%s230 + $0x10] sm:$0xff]
                  %235 = vst [vmem:[%s231 + $0x8] sm:$0xff] %v234
                  %v236 = vld [vmem:[%s230 + $0x20] sm:$0xff]
                  %237 = vst [vmem:[%s231 + $0x10] sm:$0xff] %v236
                  %v238 = vld [vmem:[%s230 + $0x30] sm:$0xff]
                  %239 = vst [vmem:[%s231 + $0x18] sm:$0xff] %v238
                  %v240 = vld [vmem:[%s230 + $0x40] sm:$0xff]
                  %241 = vst [vmem:[%s231 + $0x20] sm:$0xff] %v240
                $region86: #{tpu_custom_call.1} parent=80 // loop_footer
                  %s229 = sadd.s32 1, %s225
                $region87: #{tpu_custom_call.1} parent=80 // loop_footer_branch
                  %224 = sbr.rel target = $region83
                $region88: #{tpu_custom_call.1} parent=80 // loop_exit
                  _
              $region81: #{tpu_custom_call.1} parent=65 // pred_fallthru
                _
              // Predicated region
              $region89: #{tpu_custom_call.1} parent=65 // pred_check
                _
              $region90: #{tpu_custom_call.1} parent=65 // pred_check_branch
                %243 = sbr.rel target = $region92
              $region91: #{tpu_custom_call.1} parent=65 // pred_region
                _
              $region92: #{tpu_custom_call.1} parent=65 // pred_fallthru
                _
            $region66: #{tpu_custom_call.1} parent=61 // pred_fallthru
              _
            // Predicated region
            $region67: #{tpu_custom_call.1} parent=61 // pred_check
              _
            $region68: #{tpu_custom_call.1} parent=61 // pred_check_branch
              %202 = sbr.rel target = $region70
            $region69: #{tpu_custom_call.1} parent=61 // pred_region
              loop: start=0, step=1, limit=1
              $region71: #{tpu_custom_call.1} parent=69 // loop_pre_header
                _
              $region72: #{tpu_custom_call.1} parent=69 // loop_header
                %s205 = sphi 0, %s209
                %p206 = scmp.ge.s32.totalorder %s205, 1
                %s210 = sphi %s196, %s196
                %s211 = sphi %s194, %s194
              $region73: #{tpu_custom_call.1} parent=69 // loop_header_branch
                %208 = sbr.rel (%p206) target = $region77
              $region74: #{tpu_custom_call.1} parent=69 // loop_body
                %v212 = vld [vmem:[%s210] sm:$0xff]
                %213 = vst [vmem:[%s211] sm:$0xff] %v212
                %v214 = vld [vmem:[%s210 + $0x10] sm:$0xff]
                %215 = vst [vmem:[%s211 + $0x8] sm:$0xff] %v214
                %v216 = vld [vmem:[%s210 + $0x20] sm:$0xff]
                %217 = vst [vmem:[%s211 + $0x10] sm:$0xff] %v216
                %v218 = vld [vmem:[%s210 + $0x30] sm:$0xff]
                %219 = vst [vmem:[%s211 + $0x18] sm:$0xff] %v218
                %v220 = vld [vmem:[%s210 + $0x40] sm:$0xff]
                %221 = vst [vmem:[%s211 + $0x20] sm:$0xff] %v220
              $region75: #{tpu_custom_call.1} parent=69 // loop_footer
                %s209 = sadd.s32 1, %s205
              $region76: #{tpu_custom_call.1} parent=69 // loop_footer_branch
                %204 = sbr.rel target = $region72
              $region77: #{tpu_custom_call.1} parent=69 // loop_exit
                _
            $region70: #{tpu_custom_call.1} parent=61 // pred_fallthru
              _
          $region62: #{tpu_custom_call.1} parent=57 // pred_fallthru
            _
          %244 = vnop
        $region58: #{tpu_custom_call.1} parent=15 // pred_fallthru
          _
      $region16: #{tpu_custom_call.1} parent=5 // pred_fallthru
        _
      %p245 = scmp.le.s32.totalorder 1, %s8
      %p246 = scmp.lt.s32.totalorder %s8, 3
      %p247 = pnand %p245, %p246
      %p248 = pneg %p247
      // Predicated region
      $region93: #{tpu_custom_call.1} parent=5 // pred_check
        _
      $region94: #{tpu_custom_call.1} parent=5 // pred_check_branch
        %250 = sbr.rel (%p247) target = $region96
      $region95: #{tpu_custom_call.1} parent=5 // pred_region
        %s251 = ssub.s32 %s8, 1
        %s252 = sand.u32 %s35, 1
        %s253 = sand.u32 %s35, 1
        %s254 = smul.addr %s253, 56
        %s255 = scalar_lea.vmem [#allocation3], %s254
        // Predicated region
        $region97: #{tpu_custom_call.1} parent=95 // pred_check
          %p256 = pneg %p48
        $region98: #{tpu_custom_call.1} parent=95 // pred_check_branch
          %258 = sbr.rel (%p256) target = $region100
        $region99: #{tpu_custom_call.1} parent=95 // pred_region
          _
        $region100: #{tpu_custom_call.1} parent=95 // pred_fallthru
          _
        %s259 = sand.u32 %s61, 1
        %s260 = sand.u32 %s61, 1
        %s261 = smul.addr %s260, 40
        %s262 = scalar_lea.vmem [#allocation4], %s261
        // Predicated region
        $region101: #{tpu_custom_call.1} parent=95 // pred_check
          %p263 = pneg %p74
        $region102: #{tpu_custom_call.1} parent=95 // pred_check_branch
          %265 = sbr.rel (%p263) target = $region104
        $region103: #{tpu_custom_call.1} parent=95 // pred_region
          _
        $region104: #{tpu_custom_call.1} parent=95 // pred_fallthru
          _
        %s266 = sand.u32 %s35, 1
        %s267 = sand.u32 %s35, 1
        %s268 = smul.addr %s267, 56
        %s269 = scalar_lea.vmem [#allocation3], %s268
        %p270 = pneg %p48
        %p271 = pneg %p45
        %s272 = sand.u32 %s61, 1
        %s273 = sand.u32 %s61, 1
        %s274 = smul.addr %s273, 40
        %s275 = scalar_lea.vmem [#allocation4], %s274
        %p276 = pneg %p74
        %p277 = pneg %p71
        %p278 = pneg %p102
        %p279 = pneg %p99
        %s280 = sand.u32 %s89, 1
        %s281 = sand.u32 %s89, 1
        %s282 = smul.addr %s281, 56
        %s283 = scalar_lea.vmem [#allocation5], %s282
        %284 = vst [vmem:[#allocation2] sm:$0x7f] 0.0
        %285 = vst [vmem:[#allocation2 + $0x8] sm:$0x7f] 0.0
        %286 = vst [vmem:[#allocation2 + $0x10] sm:$0x7f] 0.0
        %287 = vst [vmem:[#allocation2 + $0x18] sm:$0x7f] 0.0
        %288 = vst [vmem:[#allocation2 + $0x20] sm:$0x7f] 0.0
        %289 = vst [vmem:[#allocation2 + $0x28] sm:$0x7f] 0.0
        %290 = vst [vmem:[#allocation2 + $0x30] sm:$0x7f] 0.0
        %291 = vst [vmem:[#allocation2 + $0x38] sm:$0x7f] 0.0
        %292 = vst [vmem:[#allocation2 + $0x40] sm:$0x7f] 0.0
        %293 = vst [vmem:[#allocation2 + $0x48] sm:$0x7f] 0.0
        %294 = vst [vmem:[#allocation2 + $0x50] sm:$0x7f] 0.0
        %295 = vst [vmem:[#allocation2 + $0x58] sm:$0x7f] 0.0
        %296 = vst [vmem:[#allocation2 + $0x60] sm:$0x7f] 0.0
        %297 = vst [vmem:[#allocation2 + $0x68] sm:$0x7f] 0.0
        %298 = vst [vmem:[#allocation2 + $0x70] sm:$0x7f] 0.0
        %299 = vst [vmem:[#allocation2 + $0x78] sm:$0x7f] 0.0
        %300 = vst [vmem:[#allocation2 + $0x80] sm:$0x7f] 0.0
        %301 = vst [vmem:[#allocation2 + $0x88] sm:$0x7f] 0.0
        %302 = vst [vmem:[#allocation2 + $0x90] sm:$0x7f] 0.0
        %303 = vst [vmem:[#allocation2 + $0x98] sm:$0x7f] 0.0
        %304 = vst [vmem:[#allocation2 + $0xa0] sm:$0x7f] 0.0
        %305 = vst [vmem:[#allocation2 + $0xa8] sm:$0x7f] 0.0
        %306 = vst [vmem:[#allocation2 + $0xb0] sm:$0x7f] 0.0
        %307 = vst [vmem:[#allocation2 + $0xb8] sm:$0x7f] 0.0
        %308 = vst [vmem:[#allocation2 + $0xc0] sm:$0x7f] 0.0
        %309 = vst [vmem:[#allocation2 + $0xc8] sm:$0x7f] 0.0
        %310 = vst [vmem:[#allocation2 + $0xd0] sm:$0x7f] 0.0
        %311 = vst [vmem:[#allocation2 + $0xd8] sm:$0x7f] 0.0
        %312 = vst [vmem:[#allocation2 + $0xe0] sm:$0x7f] 0.0
        %313 = vst [vmem:[#allocation2 + $0xe8] sm:$0x7f] 0.0
        %314 = vst [vmem:[#allocation2 + $0xf0] sm:$0x7f] 0.0
        %315 = vst [vmem:[#allocation2 + $0xf8] sm:$0x7f] 0.0
        %316 = vst [vmem:[#allocation2 + $0x100] sm:$0x7f] 0.0
        %317 = vst [vmem:[#allocation2 + $0x108] sm:$0x7f] 0.0
        %318 = vst [vmem:[#allocation2 + $0x110] sm:$0x7f] 0.0
        %319 = vst [vmem:[#allocation2 + $0x118] sm:$0x7f] 0.0
        %320 = vst [vmem:[#allocation2 + $0x120] sm:$0x7f] 0.0
        %321 = vst [vmem:[#allocation2 + $0x128] sm:$0x7f] 0.0
        %322 = vst [vmem:[#allocation2 + $0x130] sm:$0x7f] 0.0
        %323 = vst [vmem:[#allocation2 + $0x138] sm:$0x7f] 0.0
        %324 = vst [vmem:[#allocation2 + $0x140] sm:$0x7f] 0.0
        %325 = vst [vmem:[#allocation2 + $0x148] sm:$0x7f] 0.0
        %326 = vst [vmem:[#allocation2 + $0x150] sm:$0x7f] 0.0
        %327 = vst [vmem:[#allocation2 + $0x158] sm:$0x7f] 0.0
        %328 = vst [vmem:[#allocation2 + $0x160] sm:$0x7f] 0.0
        %329 = vst [vmem:[#allocation2 + $0x168] sm:$0x7f] 0.0
        %330 = vst [vmem:[#allocation2 + $0x170] sm:$0x7f] 0.0
        %331 = vst [vmem:[#allocation2 + $0x178] sm:$0x7f] 0.0
        %332 = vst [vmem:[#allocation2 + $0x180] sm:$0x7f] 0.0
        %333 = vst [vmem:[#allocation2 + $0x188] sm:$0x7f] 0.0
        %334 = vst [vmem:[#allocation2 + $0x190] sm:$0x7f] 0.0
        %335 = vst [vmem:[#allocation2 + $0x198] sm:$0x7f] 0.0
        %336 = vst [vmem:[#allocation2 + $0x1a0] sm:$0x7f] 0.0
        %337 = vst [vmem:[#allocation2 + $0x1a8] sm:$0x7f] 0.0
        %338 = vst [vmem:[#allocation2 + $0x1b0] sm:$0x7f] 0.0
        %v339 = vld [vmem:[%s255] sm:$0x1f]
        %v340 = vld [vmem:[%s255 + $0x8] sm:$0x1f]
        %v341 = vld [vmem:[%s255 + $0x10] sm:$0x1f]
        %v342 = vld [vmem:[%s255 + $0x18] sm:$0x1f]
        %v343 = vld [vmem:[%s255 + $0x20] sm:$0x1f]
        %v344 = vld [vmem:[%s255 + $0x28] sm:$0x1f]
        %v345 = vld [vmem:[%s255 + $0x30] sm:$0x1f]
        %s346 = scalar_lea.vmem [#allocation2], 16
        %347 = vst [vmem:[%s346 + $0x2] sm:$0x1f] %v339
        %348 = vst [vmem:[%s346 + $0xa] sm:$0x1f] %v340
        %349 = vst [vmem:[%s346 + $0x12] sm:$0x1f] %v341
        %350 = vst [vmem:[%s346 + $0x1a] sm:$0x1f] %v342
        %351 = vst [vmem:[%s346 + $0x22] sm:$0x1f] %v343
        %352 = vst [vmem:[%s346 + $0x2a] sm:$0x1f] %v344
        %353 = vst [vmem:[%s346 + $0x32] sm:$0x1f] %v345
        %v354 = vld [vmem:[%s255] sm:$0x3f]
        %v355 = vld [vmem:[%s255 + $0x8] sm:$0x3f]
        %v356 = vld [vmem:[%s255 + $0x10] sm:$0x3f]
        %v357 = vld [vmem:[%s255 + $0x18] sm:$0x3f]
        %v358 = vld [vmem:[%s255 + $0x20] sm:$0x3f]
        %v359 = vld [vmem:[%s255 + $0x28] sm:$0x3f]
        %v360 = vld [vmem:[%s255 + $0x30] sm:$0x3f]
        %s361 = scalar_lea.vmem [#allocation2], 104
        %362 = vst [vmem:[%s361 + $0x1] sm:$0x3f] %v354
        %363 = vst [vmem:[%s361 + $0x9] sm:$0x3f] %v355
        %364 = vst [vmem:[%s361 + $0x11] sm:$0x3f] %v356
        %365 = vst [vmem:[%s361 + $0x19] sm:$0x3f] %v357
        %366 = vst [vmem:[%s361 + $0x21] sm:$0x3f] %v358
        %367 = vst [vmem:[%s361 + $0x29] sm:$0x3f] %v359
        %368 = vst [vmem:[%s361 + $0x31] sm:$0x3f] %v360
        %v369 = vld [vmem:[%s255] sm:$0x7f]
        %v370 = vld [vmem:[%s255 + $0x8] sm:$0x7f]
        %v371 = vld [vmem:[%s255 + $0x10] sm:$0x7f]
        %v372 = vld [vmem:[%s255 + $0x18] sm:$0x7f]
        %v373 = vld [vmem:[%s255 + $0x20] sm:$0x7f]
        %v374 = vld [vmem:[%s255 + $0x28] sm:$0x7f]
        %v375 = vld [vmem:[%s255 + $0x30] sm:$0x7f]
        %s376 = scalar_lea.vmem [#allocation2], 192
        %377 = vst [vmem:[%s376] sm:$0x7f] %v369
        %378 = vst [vmem:[%s376 + $0x8] sm:$0x7f] %v370
        %379 = vst [vmem:[%s376 + $0x10] sm:$0x7f] %v371
        %380 = vst [vmem:[%s376 + $0x18] sm:$0x7f] %v372
        %381 = vst [vmem:[%s376 + $0x20] sm:$0x7f] %v373
        %382 = vst [vmem:[%s376 + $0x28] sm:$0x7f] %v374
        %383 = vst [vmem:[%s376 + $0x30] sm:$0x7f] %v375
        %v384 = vld [vmem:[%s255 + $0x1] sm:$0x3f]
        %v385 = vld [vmem:[%s255 + $0x9] sm:$0x3f]
        %v386 = vld [vmem:[%s255 + $0x11] sm:$0x3f]
        %v387 = vld [vmem:[%s255 + $0x19] sm:$0x3f]
        %v388 = vld [vmem:[%s255 + $0x21] sm:$0x3f]
        %v389 = vld [vmem:[%s255 + $0x29] sm:$0x3f]
        %v390 = vld [vmem:[%s255 + $0x31] sm:$0x3f]
        %s391 = scalar_lea.vmem [#allocation2], 280
        %392 = vst [vmem:[%s391] sm:$0x3f] %v384
        %393 = vst [vmem:[%s391 + $0x8] sm:$0x3f] %v385
        %394 = vst [vmem:[%s391 + $0x10] sm:$0x3f] %v386
        %395 = vst [vmem:[%s391 + $0x18] sm:$0x3f] %v387
        %396 = vst [vmem:[%s391 + $0x20] sm:$0x3f] %v388
        %397 = vst [vmem:[%s391 + $0x28] sm:$0x3f] %v389
        %398 = vst [vmem:[%s391 + $0x30] sm:$0x3f] %v390
        %v399 = vld [vmem:[%s255 + $0x2] sm:$0x1f]
        %v400 = vld [vmem:[%s255 + $0xa] sm:$0x1f]
        %v401 = vld [vmem:[%s255 + $0x12] sm:$0x1f]
        %v402 = vld [vmem:[%s255 + $0x1a] sm:$0x1f]
        %v403 = vld [vmem:[%s255 + $0x22] sm:$0x1f]
        %v404 = vld [vmem:[%s255 + $0x2a] sm:$0x1f]
        %v405 = vld [vmem:[%s255 + $0x32] sm:$0x1f]
        %s406 = scalar_lea.vmem [#allocation2], 368
        %407 = vst [vmem:[%s406] sm:$0x1f] %v399
        %408 = vst [vmem:[%s406 + $0x8] sm:$0x1f] %v400
        %409 = vst [vmem:[%s406 + $0x10] sm:$0x1f] %v401
        %410 = vst [vmem:[%s406 + $0x18] sm:$0x1f] %v402
        %411 = vst [vmem:[%s406 + $0x20] sm:$0x1f] %v403
        %412 = vst [vmem:[%s406 + $0x28] sm:$0x1f] %v404
        %413 = vst [vmem:[%s406 + $0x30] sm:$0x1f] %v405
        %v414 = vld [vmem:[%s262] sm:$0x1f]
        %v415 = vld [vmem:[%s262 + $0x8] sm:$0x1f]
        %v416 = vld [vmem:[%s262 + $0x10] sm:$0x1f]
        %v417 = vld [vmem:[%s262 + $0x18] sm:$0x1f]
        %v418 = vld [vmem:[%s262 + $0x20] sm:$0x1f]
        %v419 = vld [vmem:[#allocation2] sm:$0x7f]
        %v420 = vlaneseq
        %v421 = vshrl.u32 %v420, 7
        %v422 = vsub.s32 0, %v421
        %v423 = vrot.slane %v414, %v422
        %v424 = vmul.f32 %v419, %v423
        %v425 = vadd.f32 %v424, 0.0
        %s426 = scalar_lea.vmem [#allocation2], 8
        %v427 = vld [vmem:[%s426] sm:$0x7f]
        %v428 = vlaneseq
        %v429 = vshrl.u32 %v428, 7
        %v430 = vsub.s32 0, %v429
        %v431 = vrot.slane %v415, %v430
        %v432 = vmul.f32 %v427, %v431
        %v433 = vadd.f32 %v425, %v432
        %v434 = vld [vmem:[%s346] sm:$0x7f]
        %v435 = vlaneseq
        %v436 = vshrl.u32 %v435, 7
        %v437 = vsub.s32 0, %v436
        %v438 = vrot.slane %v416, %v437
        %v439 = vmul.f32 %v434, %v438
        %v440 = vadd.f32 %v433, %v439
        %s441 = scalar_lea.vmem [#allocation2], 24
        %v442 = vld [vmem:[%s441] sm:$0x7f]
        %v443 = vlaneseq
        %v444 = vshrl.u32 %v443, 7
        %v445 = vsub.s32 0, %v444
        %v446 = vrot.slane %v417, %v445
        %v447 = vmul.f32 %v442, %v446
        %v448 = vadd.f32 %v440, %v447
        %s449 = scalar_lea.vmem [#allocation2], 32
        %v450 = vld [vmem:[%s449] sm:$0x7f]
        %v451 = vlaneseq
        %v452 = vshrl.u32 %v451, 7
        %v453 = vsub.s32 0, %v452
        %v454 = vrot.slane %v418, %v453
        %v455 = vmul.f32 %v450, %v454
        %v456 = vadd.f32 %v448, %v455
        %s457 = scalar_lea.vmem [#allocation2], 88
        %v458 = vld [vmem:[%s457] sm:$0x7f]
        %v459 = vlaneseq
        %v460 = vshrl.u32 %v459, 7
        %v461 = vsub.s32 1, %v460
        %v462 = vrot.slane %v414, %v461
        %v463 = vmul.f32 %v458, %v462
        %v464 = vadd.f32 %v456, %v463
        %s465 = scalar_lea.vmem [#allocation2], 96
        %v466 = vld [vmem:[%s465] sm:$0x7f]
        %v467 = vlaneseq
        %v468 = vshrl.u32 %v467, 7
        %v469 = vsub.s32 1, %v468
        %v470 = vrot.slane %v415, %v469
        %v471 = vmul.f32 %v466, %v470
        %v472 = vadd.f32 %v464, %v471
        %v473 = vld [vmem:[%s361] sm:$0x7f]
        %v474 = vlaneseq
        %v475 = vshrl.u32 %v474, 7
        %v476 = vsub.s32 1, %v475
        %v477 = vrot.slane %v416, %v476
        %v478 = vmul.f32 %v473, %v477
        %v479 = vadd.f32 %v472, %v478
        %s480 = scalar_lea.vmem [#allocation2], 112
        %v481 = vld [vmem:[%s480] sm:$0x7f]
        %v482 = vlaneseq
        %v483 = vshrl.u32 %v482, 7
        %v484 = vsub.s32 1, %v483
        %v485 = vrot.slane %v417, %v484
        %v486 = vmul.f32 %v481, %v485
        %v487 = vadd.f32 %v479, %v486
        %s488 = scalar_lea.vmem [#allocation2], 120
        %v489 = vld [vmem:[%s488] sm:$0x7f]
        %v490 = vlaneseq
        %v491 = vshrl.u32 %v490, 7
        %v492 = vsub.s32 1, %v491
        %v493 = vrot.slane %v418, %v492
        %v494 = vmul.f32 %v489, %v493
        %v495 = vadd.f32 %v487, %v494
        %s496 = scalar_lea.vmem [#allocation2], 176
        %v497 = vld [vmem:[%s496] sm:$0x7f]
        %v498 = vlaneseq
        %v499 = vshrl.u32 %v498, 7
        %v500 = vsub.s32 2, %v499
        %v501 = vrot.slane %v414, %v500
        %v502 = vmul.f32 %v497, %v501
        %v503 = vadd.f32 %v495, %v502
        %s504 = scalar_lea.vmem [#allocation2], 184
        %v505 = vld [vmem:[%s504] sm:$0x7f]
        %v506 = vlaneseq
        %v507 = vshrl.u32 %v506, 7
        %v508 = vsub.s32 2, %v507
        %v509 = vrot.slane %v415, %v508
        %v510 = vmul.f32 %v505, %v509
        %v511 = vadd.f32 %v503, %v510
        %v512 = vld [vmem:[%s376] sm:$0x7f]
        %v513 = vlaneseq
        %v514 = vshrl.u32 %v513, 7
        %v515 = vsub.s32 2, %v514
        %v516 = vrot.slane %v416, %v515
        %v517 = vmul.f32 %v512, %v516
        %v518 = vadd.f32 %v511, %v517
        %s519 = scalar_lea.vmem [#allocation2], 200
        %v520 = vld [vmem:[%s519] sm:$0x7f]
        %v521 = vlaneseq
        %v522 = vshrl.u32 %v521, 7
        %v523 = vsub.s32 2, %v522
        %v524 = vrot.slane %v417, %v523
        %v525 = vmul.f32 %v520, %v524
        %v526 = vadd.f32 %v518, %v525
        %s527 = scalar_lea.vmem [#allocation2], 208
        %v528 = vld [vmem:[%s527] sm:$0x7f]
        %v529 = vlaneseq
        %v530 = vshrl.u32 %v529, 7
        %v531 = vsub.s32 2, %v530
        %v532 = vrot.slane %v418, %v531
        %v533 = vmul.f32 %v528, %v532
        %v534 = vadd.f32 %v526, %v533
        %s535 = scalar_lea.vmem [#allocation2], 264
        %v536 = vld [vmem:[%s535] sm:$0x7f]
        %v537 = vlaneseq
        %v538 = vshrl.u32 %v537, 7
        %v539 = vsub.s32 3, %v538
        %v540 = vrot.slane %v414, %v539
        %v541 = vmul.f32 %v536, %v540
        %v542 = vadd.f32 %v534, %v541
        %s543 = scalar_lea.vmem [#allocation2], 272
        %v544 = vld [vmem:[%s543] sm:$0x7f]
        %v545 = vlaneseq
        %v546 = vshrl.u32 %v545, 7
        %v547 = vsub.s32 3, %v546
        %v548 = vrot.slane %v415, %v547
        %v549 = vmul.f32 %v544, %v548
        %v550 = vadd.f32 %v542, %v549
        %v551 = vld [vmem:[%s391] sm:$0x7f]
        %v552 = vlaneseq
        %v553 = vshrl.u32 %v552, 7
        %v554 = vsub.s32 3, %v553
        %v555 = vrot.slane %v416, %v554
        %v556 = vmul.f32 %v551, %v555
        %v557 = vadd.f32 %v550, %v556
        %s558 = scalar_lea.vmem [#allocation2], 288
        %v559 = vld [vmem:[%s558] sm:$0x7f]
        %v560 = vlaneseq
        %v561 = vshrl.u32 %v560, 7
        %v562 = vsub.s32 3, %v561
        %v563 = vrot.slane %v417, %v562
        %v564 = vmul.f32 %v559, %v563
        %v565 = vadd.f32 %v557, %v564
        %s566 = scalar_lea.vmem [#allocation2], 296
        %v567 = vld [vmem:[%s566] sm:$0x7f]
        %v568 = vlaneseq
        %v569 = vshrl.u32 %v568, 7
        %v570 = vsub.s32 3, %v569
        %v571 = vrot.slane %v418, %v570
        %v572 = vmul.f32 %v567, %v571
        %v573 = vadd.f32 %v565, %v572
        %s574 = scalar_lea.vmem [#allocation2], 352
        %v575 = vld [vmem:[%s574] sm:$0x7f]
        %v576 = vlaneseq
        %v577 = vshrl.u32 %v576, 7
        %v578 = vsub.s32 4, %v577
        %v579 = vrot.slane %v414, %v578
        %v580 = vmul.f32 %v575, %v579
        %v581 = vadd.f32 %v573, %v580
        %s582 = scalar_lea.vmem [#allocation2], 360
        %v583 = vld [vmem:[%s582] sm:$0x7f]
        %v584 = vlaneseq
        %v585 = vshrl.u32 %v584, 7
        %v586 = vsub.s32 4, %v585
        %v587 = vrot.slane %v415, %v586
        %v588 = vmul.f32 %v583, %v587
        %v589 = vadd.f32 %v581, %v588
        %v590 = vld [vmem:[%s406] sm:$0x7f]
        %v591 = vlaneseq
        %v592 = vshrl.u32 %v591, 7
        %v593 = vsub.s32 4, %v592
        %v594 = vrot.slane %v416, %v593
        %v595 = vmul.f32 %v590, %v594
        %v596 = vadd.f32 %v589, %v595
        %s597 = scalar_lea.vmem [#allocation2], 376
        %v598 = vld [vmem:[%s597] sm:$0x7f]
        %v599 = vlaneseq
        %v600 = vshrl.u32 %v599, 7
        %v601 = vsub.s32 4, %v600
        %v602 = vrot.slane %v417, %v601
        %v603 = vmul.f32 %v598, %v602
        %v604 = vadd.f32 %v596, %v603
        %s605 = scalar_lea.vmem [#allocation2], 384
        %v606 = vld [vmem:[%s605] sm:$0x7f]
        %v607 = vlaneseq
        %v608 = vshrl.u32 %v607, 7
        %v609 = vsub.s32 4, %v608
        %v610 = vrot.slane %v418, %v609
        %v611 = vmul.f32 %v606, %v610
        %v612 = vadd.f32 %v604, %v611
        %613 = vst [vmem:[%s283] sm:$0x7f] %v612
        %v614 = vld [vmem:[%s426] sm:$0x7f]
        %v615 = vmul.f32 %v614, %v423
        %v616 = vadd.f32 %v615, 0.0
        %v617 = vld [vmem:[%s346] sm:$0x7f]
        %v618 = vmul.f32 %v617, %v431
        %v619 = vadd.f32 %v616, %v618
        %v620 = vld [vmem:[%s441] sm:$0x7f]
        %v621 = vmul.f32 %v620, %v438
        %v622 = vadd.f32 %v619, %v621
        %v623 = vld [vmem:[%s449] sm:$0x7f]
        %v624 = vmul.f32 %v623, %v446
        %v625 = vadd.f32 %v622, %v624
        %s626 = scalar_lea.vmem [#allocation2], 40
        %v627 = vld [vmem:[%s626] sm:$0x7f]
        %v628 = vmul.f32 %v627, %v454
        %v629 = vadd.f32 %v625, %v628
        %v630 = vld [vmem:[%s465] sm:$0x7f]
        %v631 = vmul.f32 %v630, %v462
        %v632 = vadd.f32 %v629, %v631
        %v633 = vld [vmem:[%s361] sm:$0x7f]
        %v634 = vmul.f32 %v633, %v470
        %v635 = vadd.f32 %v632, %v634
        %v636 = vld [vmem:[%s480] sm:$0x7f]
        %v637 = vmul.f32 %v636, %v477
        %v638 = vadd.f32 %v635, %v637
        %v639 = vld [vmem:[%s488] sm:$0x7f]
        %v640 = vmul.f32 %v639, %v485
        %v641 = vadd.f32 %v638, %v640
        %s642 = scalar_lea.vmem [#allocation2], 128
        %v643 = vld [vmem:[%s642] sm:$0x7f]
        %v644 = vmul.f32 %v643, %v493
        %v645 = vadd.f32 %v641, %v644
        %v646 = vld [vmem:[%s504] sm:$0x7f]
        %v647 = vmul.f32 %v646, %v501
        %v648 = vadd.f32 %v645, %v647
        %v649 = vld [vmem:[%s376] sm:$0x7f]
        %v650 = vmul.f32 %v649, %v509
        %v651 = vadd.f32 %v648, %v650
        %v652 = vld [vmem:[%s519] sm:$0x7f]
        %v653 = vmul.f32 %v652, %v516
        %v654 = vadd.f32 %v651, %v653
        %v655 = vld [vmem:[%s527] sm:$0x7f]
        %v656 = vmul.f32 %v655, %v524
        %v657 = vadd.f32 %v654, %v656
        %s658 = scalar_lea.vmem [#allocation2], 216
        %v659 = vld [vmem:[%s658] sm:$0x7f]
        %v660 = vmul.f32 %v659, %v532
        %v661 = vadd.f32 %v657, %v660
        %v662 = vld [vmem:[%s543] sm:$0x7f]
        %v663 = vmul.f32 %v662, %v540
        %v664 = vadd.f32 %v661, %v663
        %v665 = vld [vmem:[%s391] sm:$0x7f]
        %v666 = vmul.f32 %v665, %v548
        %v667 = vadd.f32 %v664, %v666
        %v668 = vld [vmem:[%s558] sm:$0x7f]
        %v669 = vmul.f32 %v668, %v555
        %v670 = vadd.f32 %v667, %v669
        %v671 = vld [vmem:[%s566] sm:$0x7f]
        %v672 = vmul.f32 %v671, %v563
        %v673 = vadd.f32 %v670, %v672
        %s674 = scalar_lea.vmem [#allocation2], 304
        %v675 = vld [vmem:[%s674] sm:$0x7f]
        %v676 = vmul.f32 %v675, %v571
        %v677 = vadd.f32 %v673, %v676
        %v678 = vld [vmem:[%s582] sm:$0x7f]
        %v679 = vmul.f32 %v678, %v579
        %v680 = vadd.f32 %v677, %v679
        %v681 = vld [vmem:[%s406] sm:$0x7f]
        %v682 = vmul.f32 %v681, %v587
        %v683 = vadd.f32 %v680, %v682
        %v684 = vld [vmem:[%s597] sm:$0x7f]
        %v685 = vmul.f32 %v684, %v594
        %v686 = vadd.f32 %v683, %v685
        %v687 = vld [vmem:[%s605] sm:$0x7f]
        %v688 = vmul.f32 %v687, %v602
        %v689 = vadd.f32 %v686, %v688
        %s690 = scalar_lea.vmem [#allocation2], 392
        %v691 = vld [vmem:[%s690] sm:$0x7f]
        %v692 = vmul.f32 %v691, %v610
        %v693 = vadd.f32 %v689, %v692
        %s694 = scalar_lea.vmem %s283, 8 [#allocation5]
        %695 = vst [vmem:[%s694] sm:$0x7f] %v693
        %v696 = vld [vmem:[%s346] sm:$0x7f]
        %v697 = vmul.f32 %v696, %v423
        %v698 = vadd.f32 %v697, 0.0
        %v699 = vld [vmem:[%s441] sm:$0x7f]
        %v700 = vmul.f32 %v699, %v431
        %v701 = vadd.f32 %v698, %v700
        %v702 = vld [vmem:[%s449] sm:$0x7f]
        %v703 = vmul.f32 %v702, %v438
        %v704 = vadd.f32 %v701, %v703
        %v705 = vld [vmem:[%s626] sm:$0x7f]
        %v706 = vmul.f32 %v705, %v446
        %v707 = vadd.f32 %v704, %v706
        %s708 = scalar_lea.vmem [#allocation2], 48
        %v709 = vld [vmem:[%s708] sm:$0x7f]
        %v710 = vmul.f32 %v709, %v454
        %v711 = vadd.f32 %v707, %v710
        %v712 = vld [vmem:[%s361] sm:$0x7f]
        %v713 = vmul.f32 %v712, %v462
        %v714 = vadd.f32 %v711, %v713
        %v715 = vld [vmem:[%s480] sm:$0x7f]
        %v716 = vmul.f32 %v715, %v470
        %v717 = vadd.f32 %v714, %v716
        %v718 = vld [vmem:[%s488] sm:$0x7f]
        %v719 = vmul.f32 %v718, %v477
        %v720 = vadd.f32 %v717, %v719
        %v721 = vld [vmem:[%s642] sm:$0x7f]
        %v722 = vmul.f32 %v721, %v485
        %v723 = vadd.f32 %v720, %v722
        %s724 = scalar_lea.vmem [#allocation2], 136
        %v725 = vld [vmem:[%s724] sm:$0x7f]
        %v726 = vmul.f32 %v725, %v493
        %v727 = vadd.f32 %v723, %v726
        %v728 = vld [vmem:[%s376] sm:$0x7f]
        %v729 = vmul.f32 %v728, %v501
        %v730 = vadd.f32 %v727, %v729
        %v731 = vld [vmem:[%s519] sm:$0x7f]
        %v732 = vmul.f32 %v731, %v509
        %v733 = vadd.f32 %v730, %v732
        %v734 = vld [vmem:[%s527] sm:$0x7f]
        %v735 = vmul.f32 %v734, %v516
        %v736 = vadd.f32 %v733, %v735
        %v737 = vld [vmem:[%s658] sm:$0x7f]
        %v738 = vmul.f32 %v737, %v524
        %v739 = vadd.f32 %v736, %v738
        %s740 = scalar_lea.vmem [#allocation2], 224
        %v741 = vld [vmem:[%s740] sm:$0x7f]
        %v742 = vmul.f32 %v741, %v532
        %v743 = vadd.f32 %v739, %v742
        %v744 = vld [vmem:[%s391] sm:$0x7f]
        %v745 = vmul.f32 %v744, %v540
        %v746 = vadd.f32 %v743, %v745
        %v747 = vld [vmem:[%s558] sm:$0x7f]
        %v748 = vmul.f32 %v747, %v548
        %v749 = vadd.f32 %v746, %v748
        %v750 = vld [vmem:[%s566] sm:$0x7f]
        %v751 = vmul.f32 %v750, %v555
        %v752 = vadd.f32 %v749, %v751
        %v753 = vld [vmem:[%s674] sm:$0x7f]
        %v754 = vmul.f32 %v753, %v563
        %v755 = vadd.f32 %v752, %v754
        %s756 = scalar_lea.vmem [#allocation2], 312
        %v757 = vld [vmem:[%s756] sm:$0x7f]
        %v758 = vmul.f32 %v757, %v571
        %v759 = vadd.f32 %v755, %v758
        %v760 = vld [vmem:[%s406] sm:$0x7f]
        %v761 = vmul.f32 %v760, %v579
        %v762 = vadd.f32 %v759, %v761
        %v763 = vld [vmem:[%s597] sm:$0x7f]
        %v764 = vmul.f32 %v763, %v587
        %v765 = vadd.f32 %v762, %v764
        %v766 = vld [vmem:[%s605] sm:$0x7f]
        %v767 = vmul.f32 %v766, %v594
        %v768 = vadd.f32 %v765, %v767
        %v769 = vld [vmem:[%s690] sm:$0x7f]
        %v770 = vmul.f32 %v769, %v602
        %v771 = vadd.f32 %v768, %v770
        %s772 = scalar_lea.vmem [#allocation2], 400
        %v773 = vld [vmem:[%s772] sm:$0x7f]
        %v774 = vmul.f32 %v773, %v610
        %v775 = vadd.f32 %v771, %v774
        %s776 = scalar_lea.vmem %s283, 16 [#allocation5]
        %777 = vst [vmem:[%s776] sm:$0x7f] %v775
        %v778 = vld [vmem:[%s441] sm:$0x7f]
        %v779 = vmul.f32 %v778, %v423
        %v780 = vadd.f32 %v779, 0.0
        %v781 = vld [vmem:[%s449] sm:$0x7f]
        %v782 = vmul.f32 %v781, %v431
        %v783 = vadd.f32 %v780, %v782
        %v784 = vld [vmem:[%s626] sm:$0x7f]
        %v785 = vmul.f32 %v784, %v438
        %v786 = vadd.f32 %v783, %v785
        %v787 = vld [vmem:[%s708] sm:$0x7f]
        %v788 = vmul.f32 %v787, %v446
        %v789 = vadd.f32 %v786, %v788
        %s790 = scalar_lea.vmem [#allocation2], 56
        %v791 = vld [vmem:[%s790] sm:$0x7f]
        %v792 = vmul.f32 %v791, %v454
        %v793 = vadd.f32 %v789, %v792
        %v794 = vld [vmem:[%s480] sm:$0x7f]
        %v795 = vmul.f32 %v794, %v462
        %v796 = vadd.f32 %v793, %v795
        %v797 = vld [vmem:[%s488] sm:$0x7f]
        %v798 = vmul.f32 %v797, %v470
        %v799 = vadd.f32 %v796, %v798
        %v800 = vld [vmem:[%s642] sm:$0x7f]
        %v801 = vmul.f32 %v800, %v477
        %v802 = vadd.f32 %v799, %v801
        %v803 = vld [vmem:[%s724] sm:$0x7f]
        %v804 = vmul.f32 %v803, %v485
        %v805 = vadd.f32 %v802, %v804
        %s806 = scalar_lea.vmem [#allocation2], 144
        %v807 = vld [vmem:[%s806] sm:$0x7f]
        %v808 = vmul.f32 %v807, %v493
        %v809 = vadd.f32 %v805, %v808
        %v810 = vld [vmem:[%s519] sm:$0x7f]
        %v811 = vmul.f32 %v810, %v501
        %v812 = vadd.f32 %v809, %v811
        %v813 = vld [vmem:[%s527] sm:$0x7f]
        %v814 = vmul.f32 %v813, %v509
        %v815 = vadd.f32 %v812, %v814
        %v816 = vld [vmem:[%s658] sm:$0x7f]
        %v817 = vmul.f32 %v816, %v516
        %v818 = vadd.f32 %v815, %v817
        %v819 = vld [vmem:[%s740] sm:$0x7f]
        %v820 = vmul.f32 %v819, %v524
        %v821 = vadd.f32 %v818, %v820
        %s822 = scalar_lea.vmem [#allocation2], 232
        %v823 = vld [vmem:[%s822] sm:$0x7f]
        %v824 = vmul.f32 %v823, %v532
        %v825 = vadd.f32 %v821, %v824
        %v826 = vld [vmem:[%s558] sm:$0x7f]
        %v827 = vmul.f32 %v826, %v540
        %v828 = vadd.f32 %v825, %v827
        %v829 = vld [vmem:[%s566] sm:$0x7f]
        %v830 = vmul.f32 %v829, %v548
        %v831 = vadd.f32 %v828, %v830
        %v832 = vld [vmem:[%s674] sm:$0x7f]
        %v833 = vmul.f32 %v832, %v555
        %v834 = vadd.f32 %v831, %v833
        %v835 = vld [vmem:[%s756] sm:$0x7f]
        %v836 = vmul.f32 %v835, %v563
        %v837 = vadd.f32 %v834, %v836
        %s838 = scalar_lea.vmem [#allocation2], 320
        %v839 = vld [vmem:[%s838] sm:$0x7f]
        %v840 = vmul.f32 %v839, %v571
        %v841 = vadd.f32 %v837, %v840
        %v842 = vld [vmem:[%s597] sm:$0x7f]
        %v843 = vmul.f32 %v842, %v579
        %v844 = vadd.f32 %v841, %v843
        %v845 = vld [vmem:[%s605] sm:$0x7f]
        %v846 = vmul.f32 %v845, %v587
        %v847 = vadd.f32 %v844, %v846
        %v848 = vld [vmem:[%s690] sm:$0x7f]
        %v849 = vmul.f32 %v848, %v594
        %v850 = vadd.f32 %v847, %v849
        %v851 = vld [vmem:[%s772] sm:$0x7f]
        %v852 = vmul.f32 %v851, %v602
        %v853 = vadd.f32 %v850, %v852
        %s854 = scalar_lea.vmem [#allocation2], 408
        %v855 = vld [vmem:[%s854] sm:$0x7f]
        %v856 = vmul.f32 %v855, %v610
        %v857 = vadd.f32 %v853, %v856
        %s858 = scalar_lea.vmem %s283, 24 [#allocation5]
        %859 = vst [vmem:[%s858] sm:$0x7f] %v857
        %v860 = vld [vmem:[%s449] sm:$0x7f]
        %v861 = vmul.f32 %v860, %v423
        %v862 = vadd.f32 %v861, 0.0
        %v863 = vld [vmem:[%s626] sm:$0x7f]
        %v864 = vmul.f32 %v863, %v431
        %v865 = vadd.f32 %v862, %v864
        %v866 = vld [vmem:[%s708] sm:$0x7f]
        %v867 = vmul.f32 %v866, %v438
        %v868 = vadd.f32 %v865, %v867
        %v869 = vld [vmem:[%s790] sm:$0x7f]
        %v870 = vmul.f32 %v869, %v446
        %v871 = vadd.f32 %v868, %v870
        %s872 = scalar_lea.vmem [#allocation2], 64
        %v873 = vld [vmem:[%s872] sm:$0x7f]
        %v874 = vmul.f32 %v873, %v454
        %v875 = vadd.f32 %v871, %v874
        %v876 = vld [vmem:[%s488] sm:$0x7f]
        %v877 = vmul.f32 %v876, %v462
        %v878 = vadd.f32 %v875, %v877
        %v879 = vld [vmem:[%s642] sm:$0x7f]
        %v880 = vmul.f32 %v879, %v470
        %v881 = vadd.f32 %v878, %v880
        %v882 = vld [vmem:[%s724] sm:$0x7f]
        %v883 = vmul.f32 %v882, %v477
        %v884 = vadd.f32 %v881, %v883
        %v885 = vld [vmem:[%s806] sm:$0x7f]
        %v886 = vmul.f32 %v885, %v485
        %v887 = vadd.f32 %v884, %v886
        %s888 = scalar_lea.vmem [#allocation2], 152
        %v889 = vld [vmem:[%s888] sm:$0x7f]
        %v890 = vmul.f32 %v889, %v493
        %v891 = vadd.f32 %v887, %v890
        %v892 = vld [vmem:[%s527] sm:$0x7f]
        %v893 = vmul.f32 %v892, %v501
        %v894 = vadd.f32 %v891, %v893
        %v895 = vld [vmem:[%s658] sm:$0x7f]
        %v896 = vmul.f32 %v895, %v509
        %v897 = vadd.f32 %v894, %v896
        %v898 = vld [vmem:[%s740] sm:$0x7f]
        %v899 = vmul.f32 %v898, %v516
        %v900 = vadd.f32 %v897, %v899
        %v901 = vld [vmem:[%s822] sm:$0x7f]
        %v902 = vmul.f32 %v901, %v524
        %v903 = vadd.f32 %v900, %v902
        %s904 = scalar_lea.vmem [#allocation2], 240
        %v905 = vld [vmem:[%s904] sm:$0x7f]
        %v906 = vmul.f32 %v905, %v532
        %v907 = vadd.f32 %v903, %v906
        %v908 = vld [vmem:[%s566] sm:$0x7f]
        %v909 = vmul.f32 %v908, %v540
        %v910 = vadd.f32 %v907, %v909
        %v911 = vld [vmem:[%s674] sm:$0x7f]
        %v912 = vmul.f32 %v911, %v548
        %v913 = vadd.f32 %v910, %v912
        %v914 = vld [vmem:[%s756] sm:$0x7f]
        %v915 = vmul.f32 %v914, %v555
        %v916 = vadd.f32 %v913, %v915
        %v917 = vld [vmem:[%s838] sm:$0x7f]
        %v918 = vmul.f32 %v917, %v563
        %v919 = vadd.f32 %v916, %v918
        %s920 = scalar_lea.vmem [#allocation2], 328
        %v921 = vld [vmem:[%s920] sm:$0x7f]
        %v922 = vmul.f32 %v921, %v571
        %v923 = vadd.f32 %v919, %v922
        %v924 = vld [vmem:[%s605] sm:$0x7f]
        %v925 = vmul.f32 %v924, %v579
        %v926 = vadd.f32 %v923, %v925
        %v927 = vld [vmem:[%s690] sm:$0x7f]
        %v928 = vmul.f32 %v927, %v587
        %v929 = vadd.f32 %v926, %v928
        %v930 = vld [vmem:[%s772] sm:$0x7f]
        %v931 = vmul.f32 %v930, %v594
        %v932 = vadd.f32 %v929, %v931
        %v933 = vld [vmem:[%s854] sm:$0x7f]
        %v934 = vmul.f32 %v933, %v602
        %v935 = vadd.f32 %v932, %v934
        %s936 = scalar_lea.vmem [#allocation2], 416
        %v937 = vld [vmem:[%s936] sm:$0x7f]
        %v938 = vmul.f32 %v937, %v610
        %v939 = vadd.f32 %v935, %v938
        %s940 = scalar_lea.vmem %s283, 32 [#allocation5]
        %941 = vst [vmem:[%s940] sm:$0x7f] %v939
        %v942 = vld [vmem:[%s626] sm:$0x7f]
        %v943 = vmul.f32 %v942, %v423
        %v944 = vadd.f32 %v943, 0.0
        %v945 = vld [vmem:[%s708] sm:$0x7f]
        %v946 = vmul.f32 %v945, %v431
        %v947 = vadd.f32 %v944, %v946
        %v948 = vld [vmem:[%s790] sm:$0x7f]
        %v949 = vmul.f32 %v948, %v438
        %v950 = vadd.f32 %v947, %v949
        %v951 = vld [vmem:[%s872] sm:$0x7f]
        %v952 = vmul.f32 %v951, %v446
        %v953 = vadd.f32 %v950, %v952
        %s954 = scalar_lea.vmem [#allocation2], 72
        %v955 = vld [vmem:[%s954] sm:$0x7f]
        %v956 = vmul.f32 %v955, %v454
        %v957 = vadd.f32 %v953, %v956
        %v958 = vld [vmem:[%s642] sm:$0x7f]
        %v959 = vmul.f32 %v958, %v462
        %v960 = vadd.f32 %v957, %v959
        %v961 = vld [vmem:[%s724] sm:$0x7f]
        %v962 = vmul.f32 %v961, %v470
        %v963 = vadd.f32 %v960, %v962
        %v964 = vld [vmem:[%s806] sm:$0x7f]
        %v965 = vmul.f32 %v964, %v477
        %v966 = vadd.f32 %v963, %v965
        %v967 = vld [vmem:[%s888] sm:$0x7f]
        %v968 = vmul.f32 %v967, %v485
        %v969 = vadd.f32 %v966, %v968
        %s970 = scalar_lea.vmem [#allocation2], 160
        %v971 = vld [vmem:[%s970] sm:$0x7f]
        %v972 = vmul.f32 %v971, %v493
        %v973 = vadd.f32 %v969, %v972
        %v974 = vld [vmem:[%s658] sm:$0x7f]
        %v975 = vmul.f32 %v974, %v501
        %v976 = vadd.f32 %v973, %v975
        %v977 = vld [vmem:[%s740] sm:$0x7f]
        %v978 = vmul.f32 %v977, %v509
        %v979 = vadd.f32 %v976, %v978
        %v980 = vld [vmem:[%s822] sm:$0x7f]
        %v981 = vmul.f32 %v980, %v516
        %v982 = vadd.f32 %v979, %v981
        %v983 = vld [vmem:[%s904] sm:$0x7f]
        %v984 = vmul.f32 %v983, %v524
        %v985 = vadd.f32 %v982, %v984
        %s986 = scalar_lea.vmem [#allocation2], 248
        %v987 = vld [vmem:[%s986] sm:$0x7f]
        %v988 = vmul.f32 %v987, %v532
        %v989 = vadd.f32 %v985, %v988
        %v990 = vld [vmem:[%s674] sm:$0x7f]
        %v991 = vmul.f32 %v990, %v540
        %v992 = vadd.f32 %v989, %v991
        %v993 = vld [vmem:[%s756] sm:$0x7f]
        %v994 = vmul.f32 %v993, %v548
        %v995 = vadd.f32 %v992, %v994
        %v996 = vld [vmem:[%s838] sm:$0x7f]
        %v997 = vmul.f32 %v996, %v555
        %v998 = vadd.f32 %v995, %v997
        %v999 = vld [vmem:[%s920] sm:$0x7f]
        %v1000 = vmul.f32 %v999, %v563
        %v1001 = vadd.f32 %v998, %v1000
        %s1002 = scalar_lea.vmem [#allocation2], 336
        %v1003 = vld [vmem:[%s1002] sm:$0x7f]
        %v1004 = vmul.f32 %v1003, %v571
        %v1005 = vadd.f32 %v1001, %v1004
        %v1006 = vld [vmem:[%s690] sm:$0x7f]
        %v1007 = vmul.f32 %v1006, %v579
        %v1008 = vadd.f32 %v1005, %v1007
        %v1009 = vld [vmem:[%s772] sm:$0x7f]
        %v1010 = vmul.f32 %v1009, %v587
        %v1011 = vadd.f32 %v1008, %v1010
        %v1012 = vld [vmem:[%s854] sm:$0x7f]
        %v1013 = vmul.f32 %v1012, %v594
        %v1014 = vadd.f32 %v1011, %v1013
        %v1015 = vld [vmem:[%s936] sm:$0x7f]
        %v1016 = vmul.f32 %v1015, %v602
        %v1017 = vadd.f32 %v1014, %v1016
        %s1018 = scalar_lea.vmem [#allocation2], 424
        %v1019 = vld [vmem:[%s1018] sm:$0x7f]
        %v1020 = vmul.f32 %v1019, %v610
        %v1021 = vadd.f32 %v1017, %v1020
        %s1022 = scalar_lea.vmem %s283, 40 [#allocation5]
        %1023 = vst [vmem:[%s1022] sm:$0x7f] %v1021
        %v1024 = vld [vmem:[%s708] sm:$0x7f]
        %v1025 = vmul.f32 %v1024, %v423
        %v1026 = vadd.f32 %v1025, 0.0
        %v1027 = vld [vmem:[%s790] sm:$0x7f]
        %v1028 = vmul.f32 %v1027, %v431
        %v1029 = vadd.f32 %v1026, %v1028
        %v1030 = vld [vmem:[%s872] sm:$0x7f]
        %v1031 = vmul.f32 %v1030, %v438
        %v1032 = vadd.f32 %v1029, %v1031
        %v1033 = vld [vmem:[%s954] sm:$0x7f]
        %v1034 = vmul.f32 %v1033, %v446
        %v1035 = vadd.f32 %v1032, %v1034
        %s1036 = scalar_lea.vmem [#allocation2], 80
        %v1037 = vld [vmem:[%s1036] sm:$0x7f]
        %v1038 = vmul.f32 %v1037, %v454
        %v1039 = vadd.f32 %v1035, %v1038
        %v1040 = vld [vmem:[%s724] sm:$0x7f]
        %v1041 = vmul.f32 %v1040, %v462
        %v1042 = vadd.f32 %v1039, %v1041
        %v1043 = vld [vmem:[%s806] sm:$0x7f]
        %v1044 = vmul.f32 %v1043, %v470
        %v1045 = vadd.f32 %v1042, %v1044
        %v1046 = vld [vmem:[%s888] sm:$0x7f]
        %v1047 = vmul.f32 %v1046, %v477
        %v1048 = vadd.f32 %v1045, %v1047
        %v1049 = vld [vmem:[%s970] sm:$0x7f]
        %v1050 = vmul.f32 %v1049, %v485
        %v1051 = vadd.f32 %v1048, %v1050
        %s1052 = scalar_lea.vmem [#allocation2], 168
        %v1053 = vld [vmem:[%s1052] sm:$0x7f]
        %v1054 = vmul.f32 %v1053, %v493
        %v1055 = vadd.f32 %v1051, %v1054
        %v1056 = vld [vmem:[%s740] sm:$0x7f]
        %v1057 = vmul.f32 %v1056, %v501
        %v1058 = vadd.f32 %v1055, %v1057
        %v1059 = vld [vmem:[%s822] sm:$0x7f]
        %v1060 = vmul.f32 %v1059, %v509
        %v1061 = vadd.f32 %v1058, %v1060
        %v1062 = vld [vmem:[%s904] sm:$0x7f]
        %v1063 = vmul.f32 %v1062, %v516
        %v1064 = vadd.f32 %v1061, %v1063
        %v1065 = vld [vmem:[%s986] sm:$0x7f]
        %v1066 = vmul.f32 %v1065, %v524
        %v1067 = vadd.f32 %v1064, %v1066
        %s1068 = scalar_lea.vmem [#allocation2], 256
        %v1069 = vld [vmem:[%s1068] sm:$0x7f]
        %v1070 = vmul.f32 %v1069, %v532
        %v1071 = vadd.f32 %v1067, %v1070
        %v1072 = vld [vmem:[%s756] sm:$0x7f]
        %v1073 = vmul.f32 %v1072, %v540
        %v1074 = vadd.f32 %v1071, %v1073
        %v1075 = vld [vmem:[%s838] sm:$0x7f]
        %v1076 = vmul.f32 %v1075, %v548
        %v1077 = vadd.f32 %v1074, %v1076
        %v1078 = vld [vmem:[%s920] sm:$0x7f]
        %v1079 = vmul.f32 %v1078, %v555
        %v1080 = vadd.f32 %v1077, %v1079
        %v1081 = vld [vmem:[%s1002] sm:$0x7f]
        %v1082 = vmul.f32 %v1081, %v563
        %v1083 = vadd.f32 %v1080, %v1082
        %s1084 = scalar_lea.vmem [#allocation2], 344
        %v1085 = vld [vmem:[%s1084] sm:$0x7f]
        %v1086 = vmul.f32 %v1085, %v571
        %v1087 = vadd.f32 %v1083, %v1086
        %v1088 = vld [vmem:[%s772] sm:$0x7f]
        %v1089 = vmul.f32 %v1088, %v579
        %v1090 = vadd.f32 %v1087, %v1089
        %v1091 = vld [vmem:[%s854] sm:$0x7f]
        %v1092 = vmul.f32 %v1091, %v587
        %v1093 = vadd.f32 %v1090, %v1092
        %v1094 = vld [vmem:[%s936] sm:$0x7f]
        %v1095 = vmul.f32 %v1094, %v594
        %v1096 = vadd.f32 %v1093, %v1095
        %v1097 = vld [vmem:[%s1018] sm:$0x7f]
        %v1098 = vmul.f32 %v1097, %v602
        %v1099 = vadd.f32 %v1096, %v1098
        %s1100 = scalar_lea.vmem [#allocation2], 432
        %v1101 = vld [vmem:[%s1100] sm:$0x7f]
        %v1102 = vmul.f32 %v1101, %v610
        %v1103 = vadd.f32 %v1099, %v1102
        %s1104 = scalar_lea.vmem %s283, 48 [#allocation5]
        %1105 = vst [vmem:[%s1104] sm:$0x7f] %v1103
        %s1106 = sand.u32 %s89, 1
        %s1107 = sand.u32 %s89, 1
        %s1108 = smul.addr %s1107, 56
        %s1109 = scalar_lea.vmem [#allocation5], %s1108
        // Predicated region
        $region105: #{tpu_custom_call.1} parent=95 // pred_check
          %p1110 = pneg %p99
        $region106: #{tpu_custom_call.1} parent=95 // pred_check_branch
          %1112 = sbr.rel (%p1110) target = $region108
        $region107: #{tpu_custom_call.1} parent=95 // pred_region
          %s1113 = smul.addr %s17, 14
          %s1114 = sadd.s32 %s18, %s1113
          %s1115 = smul.addr %s1114, 8
          %s1116 = scalar_lea.vmem %s2, %s1115
          // Predicated region
          $region109: #{tpu_custom_call.1} parent=107 // pred_check
            _
          $region110: #{tpu_custom_call.1} parent=107 // pred_check_branch
            %1118 = sbr.rel (0) target = $region112
          $region111: #{tpu_custom_call.1} parent=107 // pred_region
            // Predicated region
            $region113: #{tpu_custom_call.1} parent=111 // pred_check
              _
            $region114: #{tpu_custom_call.1} parent=111 // pred_check_branch
              %1120 = sbr.rel (0) target = $region116
            $region115: #{tpu_custom_call.1} parent=111 // pred_region
              // Predicated region
              $region128: #{tpu_custom_call.1} parent=115 // pred_check
                _
              $region129: #{tpu_custom_call.1} parent=115 // pred_check_branch
                %1147 = sbr.rel (0) target = $region131
              $region130: #{tpu_custom_call.1} parent=115 // pred_region
                loop: start=0, step=1, limit=1
                $region132: #{tpu_custom_call.1} parent=130 // loop_pre_header
                  _
                $region133: #{tpu_custom_call.1} parent=130 // loop_header
                  %s1149 = sphi 0, %s1153
                  %p1150 = scmp.ge.s32.totalorder %s1149, 1
                  %s1154 = sphi %s1109, %s1109
                  %s1155 = sphi %s1116, %s1116
                $region134: #{tpu_custom_call.1} parent=130 // loop_header_branch
                  %1152 = sbr.rel (%p1150) target = $region138
                $region135: #{tpu_custom_call.1} parent=130 // loop_body
                  %v1156 = vld [vmem:[%s1154] sm:$0xff]
                  %1157 = vst [vmem:[%s1155] sm:$0xff] %v1156
                  %v1158 = vld [vmem:[%s1154 + $0x8] sm:$0xff]
                  %1159 = vst [vmem:[%s1155 + $0x10] sm:$0xff] %v1158
                  %v1160 = vld [vmem:[%s1154 + $0x10] sm:$0xff]
                  %1161 = vst [vmem:[%s1155 + $0x20] sm:$0xff] %v1160
                  %v1162 = vld [vmem:[%s1154 + $0x18] sm:$0xff]
                  %1163 = vst [vmem:[%s1155 + $0x30] sm:$0xff] %v1162
                  %v1164 = vld [vmem:[%s1154 + $0x20] sm:$0xff]
                  %1165 = vst [vmem:[%s1155 + $0x40] sm:$0xff] %v1164
                  %v1166 = vld [vmem:[%s1154 + $0x28] sm:$0xff]
                  %1167 = vst [vmem:[%s1155 + $0x50] sm:$0xff] %v1166
                  %v1168 = vld [vmem:[%s1154 + $0x30] sm:$0xff]
                  %1169 = vst [vmem:[%s1155 + $0x60] sm:$0xff] %v1168
                $region136: #{tpu_custom_call.1} parent=130 // loop_footer
                  %s1153 = sadd.s32 1, %s1149
                $region137: #{tpu_custom_call.1} parent=130 // loop_footer_branch
                  %1148 = sbr.rel target = $region133
                $region138: #{tpu_custom_call.1} parent=130 // loop_exit
                  _
              $region131: #{tpu_custom_call.1} parent=115 // pred_fallthru
                _
              // Predicated region
              $region139: #{tpu_custom_call.1} parent=115 // pred_check
                _
              $region140: #{tpu_custom_call.1} parent=115 // pred_check_branch
                %1171 = sbr.rel target = $region142
              $region141: #{tpu_custom_call.1} parent=115 // pred_region
                _
              $region142: #{tpu_custom_call.1} parent=115 // pred_fallthru
                _
            $region116: #{tpu_custom_call.1} parent=111 // pred_fallthru
              _
            // Predicated region
            $region117: #{tpu_custom_call.1} parent=111 // pred_check
              _
            $region118: #{tpu_custom_call.1} parent=111 // pred_check_branch
              %1122 = sbr.rel target = $region120
            $region119: #{tpu_custom_call.1} parent=111 // pred_region
              loop: start=0, step=1, limit=1
              $region121: #{tpu_custom_call.1} parent=119 // loop_pre_header
                _
              $region122: #{tpu_custom_call.1} parent=119 // loop_header
                %s1125 = sphi 0, %s1129
                %p1126 = scmp.ge.s32.totalorder %s1125, 1
                %s1130 = sphi %s1109, %s1109
                %s1131 = sphi %s1116, %s1116
              $region123: #{tpu_custom_call.1} parent=119 // loop_header_branch
                %1128 = sbr.rel (%p1126) target = $region127
              $region124: #{tpu_custom_call.1} parent=119 // loop_body
                %v1132 = vld [vmem:[%s1130] sm:$0xff]
                %1133 = vst [vmem:[%s1131] sm:$0xff] %v1132
                %v1134 = vld [vmem:[%s1130 + $0x8] sm:$0xff]
                %1135 = vst [vmem:[%s1131 + $0x10] sm:$0xff] %v1134
                %v1136 = vld [vmem:[%s1130 + $0x10] sm:$0xff]
                %1137 = vst [vmem:[%s1131 + $0x20] sm:$0xff] %v1136
                %v1138 = vld [vmem:[%s1130 + $0x18] sm:$0xff]
                %1139 = vst [vmem:[%s1131 + $0x30] sm:$0xff] %v1138
                %v1140 = vld [vmem:[%s1130 + $0x20] sm:$0xff]
                %1141 = vst [vmem:[%s1131 + $0x40] sm:$0xff] %v1140
                %v1142 = vld [vmem:[%s1130 + $0x28] sm:$0xff]
                %1143 = vst [vmem:[%s1131 + $0x50] sm:$0xff] %v1142
                %v1144 = vld [vmem:[%s1130 + $0x30] sm:$0xff]
                %1145 = vst [vmem:[%s1131 + $0x60] sm:$0xff] %v1144
              $region125: #{tpu_custom_call.1} parent=119 // loop_footer
                %s1129 = sadd.s32 1, %s1125
              $region126: #{tpu_custom_call.1} parent=119 // loop_footer_branch
                %1124 = sbr.rel target = $region122
              $region127: #{tpu_custom_call.1} parent=119 // loop_exit
                _
            $region120: #{tpu_custom_call.1} parent=111 // pred_fallthru
              _
          $region112: #{tpu_custom_call.1} parent=107 // pred_fallthru
            _
          %1172 = vnop
        $region108: #{tpu_custom_call.1} parent=95 // pred_fallthru
          _
      $region96: #{tpu_custom_call.1} parent=5 // pred_fallthru
        _
      %p1173 = scmp.le.s32.totalorder 2, %s8
      // Predicated region
      $region143: #{tpu_custom_call.1} parent=5 // pred_check
        %p1174 = pneg %p1173
      $region144: #{tpu_custom_call.1} parent=5 // pred_check_branch
        %1176 = sbr.rel (%p1174) target = $region146
      $region145: #{tpu_custom_call.1} parent=5 // pred_region
        %s1177 = ssub.s32 %s8, 2
        // Predicated region
        $region147: #{tpu_custom_call.1} parent=145 // pred_check
          %p1178 = pneg %p105
        $region148: #{tpu_custom_call.1} parent=145 // pred_check_branch
          %1180 = sbr.rel (%p1178) target = $region150
        $region149: #{tpu_custom_call.1} parent=145 // pred_region
          %s1181 = sand.u32 %s90, 1
          %s1182 = sand.u32 %s90, 1
          %s1183 = smul.addr %s1182, 56
          %s1184 = scalar_lea.vmem [#allocation5], %s1183
        $region150: #{tpu_custom_call.1} parent=145 // pred_fallthru
          _
      $region146: #{tpu_custom_call.1} parent=5 // pred_fallthru
        _
    $region6: #{tpu_custom_call.1} parent=1 // loop_footer
      %s12 = sadd.s32 1, %s8
    $region7: #{tpu_custom_call.1} parent=1 // loop_footer_branch
      %7 = sbr.rel target = $region3
    $region8: #{tpu_custom_call.1} parent=1 // loop_exit
      _

</llo_original>
